<compile_context>
chip_gen: v7x
topology: tpu7x:2x2x1
jax: 0.10.0
libtpu: 0.0.40
codegen_flags: <defaults>
</compile_context>

<pallas_src>
import functools
import math

import jax
import jax.numpy as jnp
from jax import lax
from jax.experimental import pallas as pl
from jax.experimental.pallas import tpu as pltpu

CONV_TOL = 1e-4
_LANE = 128


def _kmatvec(K, x, n):
    """(K @ x)[i, b] = sum_c K[i, c] * x[c, b] for a tiny class axis.

    Unrolled over the n (= n_class) columns: each step is a (C,1)*(1,TB)
    broadcast-FMA on the VPU.  Exact f32, no MXU, no (C, C, TB) temporary.
    """
    acc = K[:, 0:1] * x[0:1, :]
    for c in range(1, n):
        acc = acc + K[:, c:c + 1] * x[c:c + 1, :]
    return acc


def sinkhorn_kernel(cost_ref, k_ref, logk_ref, pred_ref, tgt_ref, out_ref, *,
                    max_iter, stab, inv_alt_denom, batch_total, chunk):
    """One batch tile.  Layout: class on sublanes (axis 0), batch on lanes (axis 1)."""
    C, TB = pred_ref.shape
    cost = cost_ref[...]                         # (C, C) normalized class cost
    K = k_ref[...]                               # (C, C) stabilized Gibbs kernel
    log_K = logk_ref[...]                        # (C, C) its log (epilogue only)
    predT = pred_ref[...].astype(jnp.float32)    # (C, TB) logits, batch in lanes
    tgt = tgt_ref[...]                           # (1, TB) int32 class indices

    # Valid-lane mask: padded batch lanes are excluded from the convergence and
    # NaN checks (they still compute, but cannot influence the result).
    lane = lax.broadcasted_iota(jnp.int32, (1, TB), 1)
    valid = (pl.program_id(0) * TB + lane) < batch_total          # (1, TB) bool

    # ---- mu = renormalize(softmax(pred) + stab), class axis = sublanes ------
    mx = jnp.max(predT, axis=0, keepdims=True)
    ex = jnp.exp(predT - mx)
    probs = ex / jnp.sum(ex, axis=0, keepdims=True)
    mu = probs + stab
    mu = mu / jnp.sum(mu, axis=0, keepdims=True)

    # ---- nu = renormalize(one_hot(target) + stab) ---------------------------
    cls = lax.broadcasted_iota(jnp.int32, (C, TB), 0)
    nu = jnp.where(cls == tgt, 1.0, 0.0) + stab
    nu = nu / jnp.sum(nu, axis=0, keepdims=True)

    log_mu = jnp.log(mu + stab)
    log_nu = jnp.log(nu + stab)

    # ---- Sinkhorn iterations (matrix-scaling form of the log-domain update) -
    # u_new[i,b] = log_mu[i,b] - logsumexp_j(log_K[i,j] + v[j,b])
    #            = log_mu[i,b] - (m_v[b] + log((K @ exp(v - m_v))[i,b]))
    # and symmetrically for v_new from u_new (PyTorch applies log_K.t() there,
    # which after the axis bookkeeping is again a plain K @ (.) contraction,
    # valid for any -- not just symmetric -- cost matrix).
    def one_iter(u, v):
        m_v = jnp.max(v, axis=0, keepdims=True)
        ev = jnp.exp(v - m_v)
        u_new = log_mu - (m_v + jnp.log(_kmatvec(K, ev, C)))
        m_u = jnp.max(u_new, axis=0, keepdims=True)
        eu = jnp.exp(u_new - m_u)
        v_new = log_nu - (m_u + jnp.log(_kmatvec(K, eu, C)))
        return u_new, v_new

    def chunk_body(_, carry):
        it, u, v, u_keep, v_keep, done = carry
        under_cap = it < max_iter                     # counter-only scalar
        u_new, v_new = one_iter(u, v)
        # Convergence bookkeeping hangs OFF the main dependency chain: the
        # next iteration consumes only (u_new, v_new).
        du = jnp.max(jnp.where(valid, jnp.abs(u - u_new), 0.0))
        dv = jnp.max(jnp.where(valid, jnp.abs(v - v_new), 0.0))
        conv = jnp.logical_and(jnp.logical_and(du < CONV_TOL, dv < CONV_TOL),
                               under_cap)
        capture = jnp.logical_and(done == 0, conv)
        # PyTorch breaks BEFORE assigning -> capture the pre-update u, v.
        u_keep = jnp.where(capture, u, u_keep)
        v_keep = jnp.where(capture, v, v_keep)
        done = jnp.maximum(done, conv.astype(jnp.int32))
        # Main track: unconditional update while under the iteration cap.
        u = jnp.where(under_cap, u_new, u)
        v = jnp.where(under_cap, v_new, v)
        it = it + under_cap.astype(jnp.int32)
        return it, u, v, u_keep, v_keep, done

    def cond_fn(carry):
        it, _, _, _, _, done = carry
        return jnp.logical_and(it < max_iter, done == 0)

    def body_fn(carry):
        return lax.fori_loop(0, chunk, chunk_body, carry, unroll=True)

    z = jnp.zeros((C, TB), jnp.float32)
    _, u_last, v_last, u_keep, v_keep, done = lax.while_loop(
        cond_fn, body_fn, (jnp.int32(0), z, z, z, z, jnp.int32(0)))
    u = jnp.where(done > 0, u_keep, u_last)
    v = jnp.where(done > 0, v_keep, v_last)

    # ---- transport plan + OT cost (runs once, after the loop) ---------------
    # Single (C, C, TB) build of P, then row/col scale factors:
    #   P_final = P0 * r[i] * c[j],  r = mu / sum_j P0,  c = nu / sum_i (P0*r)
    P0 = jnp.exp(u[:, None, :] + log_K[:, :, None] + v[None, :, :]) + stab
    r = mu / jnp.sum(P0, axis=1)                            # (C_i, TB)
    P1 = P0 * r[:, None, :]
    c = nu / jnp.sum(P1, axis=0)                            # (C_j, TB)
    wcost = jnp.sum(P1 * cost[:, :, None], axis=0)          # (C_j, TB)
    cost_b = jnp.sum(c * wcost, axis=0, keepdims=True)      # (1, TB)

    # ---- NaN fallback: cost_matrix[argmax(mu), argmax(nu)] ------------------
    # Analytic for the normalized squared-euclidean cost: (p - q)^2 / (C-1)^2.
    # TODO(synk): PyTorch applies the fallback to the WHOLE batch and prints a
    # warning; here the scope is the current batch tile and there is no print.
    mu_max = jnp.max(mu, axis=0, keepdims=True)
    nu_max = jnp.max(nu, axis=0, keepdims=True)
    p_idx = jnp.min(jnp.where(mu == mu_max, cls, C), axis=0, keepdims=True)
    q_idx = jnp.min(jnp.where(nu == nu_max, cls, C), axis=0, keepdims=True)
    diff = (p_idx - q_idx).astype(jnp.float32)
    alt = diff * diff * inv_alt_denom                       # (1, TB)

    nan_flag = jnp.where(jnp.logical_and(jnp.isnan(cost_b), valid), 1.0, 0.0)
    any_nan = jnp.max(nan_flag) > 0.0
    out_ref[...] = jnp.where(any_nan, alt, cost_b)          # lane-dense store


def sinkhorn_distance(pred, target, *, eps=0.1, max_iter=100,
                      reduction="mean", stability_factor=1e-6, check_every=5):
    """JAX/Pallas equivalent of SinkhornDistance.forward (cost_matrix=None)."""
    B, C = pred.shape
    stab = float(stability_factor)

    # Batch tiling: batch lives on the 128-wide lane axis, one tile per grid
    # step.  With the 2-D matrix-scaling loop, VMEM scales as O(C*TB + C^2)
    # and stays tiny on every generation (incl. v7x's 64 MiB VMEM).
    # TODO(synk): for B <= 128 there is a single tile, so v7x's second
    # TensorCore idles; batching several losses into one pallas_call would
    # recover the 2x there.
    if B <= _LANE:
        TB = B
        B_pad = B
    else:
        TB = _LANE
        B_pad = ((B + _LANE - 1) // _LANE) * _LANE

    pred_f = pred.astype(jnp.float32)
    tgt_i = target.astype(jnp.int32)
    if B_pad != B:
        # Padded rows (zero logits, class 0) are finite by construction and are
        # masked out of the convergence / NaN checks inside the kernel.
        pred_f = jnp.pad(pred_f, ((0, B_pad - B), (0, 0)))
        tgt_i = jnp.pad(tgt_i, (0, B_pad - B))
    # TODO(synk): this host-side transpose is one extra HBM round trip over
    # pred; for very large B it could be fused into the producer or replaced by
    # loading (TB, C) blocks and transposing the tiny tile in-kernel.
    predT = pred_f.T                        # (C, B_pad): batch in lanes
    tgtT = tgt_i.reshape(1, B_pad)          # (1, B_pad): lane-dense int32 block

    # Class cost matrix, Gibbs kernel and its log depend only on (C, eps,
    # stab): compute once on the host, stream as constant (C, C) blocks.
    idx = jnp.arange(C, dtype=jnp.float32)
    cost = (idx[None, :] - idx[:, None]) ** 2
    cmax = float((C - 1) ** 2)
    if cmax > 0.0:
        cost = cost / cmax
    # log(max(exp(-cost/eps), stab)) == max(-cost/eps, log(stab))   (exact)
    log_K = jnp.maximum(-cost / eps, math.log(stab)).astype(jnp.float32)
    K = jnp.exp(log_K)
    cost = cost.astype(jnp.float32)

    chunk = max(1, min(int(check_every), int(max_iter))) if max_iter > 0 else 1

    kernel = functools.partial(
        sinkhorn_kernel, max_iter=int(max_iter), stab=stab,
        inv_alt_denom=(1.0 / cmax) if cmax > 0.0 else 1.0,
        batch_total=int(B), chunk=chunk)

    ot = pl.pallas_call(
        kernel,
        out_shape=jax.ShapeDtypeStruct((1, B_pad), jnp.float32),
        grid=(B_pad // TB,),
        in_specs=[pl.BlockSpec((C, C), lambda i: (0, 0)),    # cost (constant)
                  pl.BlockSpec((C, C), lambda i: (0, 0)),    # K (constant)
                  pl.BlockSpec((C, C), lambda i: (0, 0)),    # log_K (constant)
                  pl.BlockSpec((C, TB), lambda i: (0, i)),   # logits^T tile
                  pl.BlockSpec((1, TB), lambda i: (0, i))],  # targets tile
        out_specs=pl.BlockSpec((1, TB), lambda i: (0, i)),
        compiler_params=pltpu.CompilerParams(
            dimension_semantics=("parallel",),
            vmem_limit_bytes=32 * 1024 * 1024),
    )(cost, K, log_K, predT, tgtT)

    ot = ot[0, :B]
    if reduction == "mean":
        return jnp.mean(ot)
    elif reduction == "sum":
        return jnp.sum(ot)
    return ot


def sinkhorn_reference(pred, target, eps=0.1, max_iter=100, stab=1e-6):
    """Pure-JAX reference mirroring the PyTorch module (reduction='mean')."""
    B, C = pred.shape
    probs = jax.nn.softmax(pred, axis=1) + stab
    mu = probs / probs.sum(axis=1, keepdims=True)
    nu = jax.nn.one_hot(target, C, dtype=jnp.float32) + stab
    nu = nu / nu.sum(axis=1, keepdims=True)
    idx = jnp.arange(C, dtype=jnp.float32)
    cost = (idx[None, :] - idx[:, None]) ** 2
    cost = cost / jnp.max(cost)
    log_K = jnp.log(jnp.maximum(jnp.exp(-cost / eps), stab))
    log_mu, log_nu = jnp.log(mu + stab), jnp.log(nu + stab)

    def body(_, c):
        u, v, done = c
        u_new = log_mu - jax.scipy.special.logsumexp(log_K[None] + v[:, None, :], axis=2)
        v_new = log_nu - jax.scipy.special.logsumexp(log_K.T[None] + u_new[:, :, None], axis=1)
        conv = (jnp.max(jnp.abs(u - u_new)) < CONV_TOL) & (jnp.max(jnp.abs(v - v_new)) < CONV_TOL)
        nd = done | conv
        return jnp.where(nd, u, u_new), jnp.where(nd, v, v_new), nd

    u, v, _ = lax.fori_loop(0, max_iter, body,
                            (jnp.zeros((B, C), jnp.float32),
                             jnp.zeros((B, C), jnp.float32), jnp.array(False)))
    P = jnp.exp(u[:, :, None] + log_K[None] + v[:, None, :]) + stab
    P = P / P.sum(axis=2, keepdims=True) * mu[:, :, None]
    P = P / P.sum(axis=1, keepdims=True) * nu[:, None, :]
    return jnp.mean(jnp.sum(P * cost[None], axis=(1, 2)))


if __name__ == "__main__":
    # ---- single-tile case (batch=8, n_class=10): exact PyTorch semantics ----
    key = jax.random.PRNGKey(0)
    kp, kt = jax.random.split(key)
    B, C = 8, 10
    pred = 2.0 * jax.random.normal(kp, (B, C), dtype=jnp.float32)
    target = jax.random.randint(kt, (B,), 0, C, dtype=jnp.int32)

    out = jax.block_until_ready(jax.jit(sinkhorn_distance)(pred, target))
    ref = sinkhorn_reference(pred, target)
    assert bool(jnp.isfinite(out)), f"non-finite kernel output: {out}"
    assert bool(jnp.allclose(out, ref, rtol=1e-3, atol=1e-5)), (out, ref)

    # ---- multi-tile case (batch=200 -> two 128-lane tiles, padded) ----------
    # TODO(synk): the convergence check is per 128-lane tile (PyTorch checks
    # the whole batch), so compare with a slightly looser tolerance.
    kp2, kt2 = jax.random.split(jax.random.PRNGKey(1))
    B2 = 200
    pred2 = 2.0 * jax.random.normal(kp2, (B2, C), dtype=jnp.float32)
    target2 = jax.random.randint(kt2, (B2,), 0, C, dtype=jnp.int32)

    out2 = jax.block_until_ready(jax.jit(sinkhorn_distance)(pred2, target2))
    ref2 = sinkhorn_reference(pred2, target2)
    assert bool(jnp.isfinite(out2)), f"non-finite kernel output: {out2}"
    assert bool(jnp.allclose(out2, ref2, rtol=1e-2, atol=1e-3)), (out2, ref2)

    print("KERNEL_OK")
</pallas_src>

<mosaic_0001>
module attributes {stable_mosaic.version = 11 : i64} {
  func.func @sinkhorn_kernel(%arg0: i32, %arg1: memref<10x10xf32, #tpu.memory_space<vmem>>, %arg2: memref<10x10xf32, #tpu.memory_space<vmem>>, %arg3: memref<10x10xf32, #tpu.memory_space<vmem>>, %arg4: memref<10x8xf32, #tpu.memory_space<vmem>>, %arg5: memref<1x8xi32, #tpu.memory_space<vmem>>, %arg6: memref<1x8xf32, #tpu.memory_space<vmem>>) attributes {dimension_semantics = [#tpu.dimension_semantics<parallel>], iteration_bounds = array<i64: 1>, scalar_prefetch = 0 : i64, scratch_operands = 0 : i64, tpu.core_type = #tpu.core_type<tc>, window_params = [{pipeline_mode = #tpu.pipeline_mode<synchronous>, transform_indices = @transform_0, window_bounds = array<i64: 10, 10>}, {pipeline_mode = #tpu.pipeline_mode<synchronous>, transform_indices = @transform_1, window_bounds = array<i64: 10, 10>}, {pipeline_mode = #tpu.pipeline_mode<synchronous>, transform_indices = @transform_2, window_bounds = array<i64: 10, 10>}, {transform_indices = @transform_3, window_bounds = array<i64: 10, 8>}, {transform_indices = @transform_4, window_bounds = array<i64: 1, 8>}, {transform_indices = @transform_5, window_bounds = array<i64: 1, 8>}]} {
    %c0 = arith.constant 0 : index
    %c0_0 = arith.constant 0 : index
    %0 = vector.load %arg1[%c0, %c0_0] : memref<10x10xf32, #tpu.memory_space<vmem>>, vector<10x10xf32>
    %c0_1 = arith.constant 0 : index
    %c0_2 = arith.constant 0 : index
    %1 = vector.load %arg2[%c0_1, %c0_2] : memref<10x10xf32, #tpu.memory_space<vmem>>, vector<10x10xf32>
    %c0_3 = arith.constant 0 : index
    %c0_4 = arith.constant 0 : index
    %2 = vector.load %arg3[%c0_3, %c0_4] : memref<10x10xf32, #tpu.memory_space<vmem>>, vector<10x10xf32>
    %c0_5 = arith.constant 0 : index
    %c0_6 = arith.constant 0 : index
    %3 = vector.load %arg4[%c0_5, %c0_6] : memref<10x8xf32, #tpu.memory_space<vmem>>, vector<10x8xf32>
    %c0_7 = arith.constant 0 : index
    %c0_8 = arith.constant 0 : index
    %4 = vector.load %arg5[%c0_7, %c0_8] : memref<1x8xi32, #tpu.memory_space<vmem>>, vector<1x8xi32>
    %5 = tpu.iota {dimensions = array<i32: 1>} : vector<1x8xi32>
    %c8_i32 = arith.constant 8 : i32
    %6 = arith.muli %arg0, %c8_i32 : i32
    %7 = vector.broadcast %6 : i32 to vector<1x8xi32>
    %8 = arith.addi %7, %5 : vector<1x8xi32>
    %c8_i32_9 = arith.constant 8 : i32
    %9 = vector.broadcast %c8_i32_9 : i32 to vector<1x8xi32>
    %10 = arith.cmpi slt, %8, %9 : vector<1x8xi32>
    %cst = arith.constant dense<0xFF800000> : vector<8xf32>
    %11 = vector.multi_reduction <maximumf>, %3, %cst [0] : vector<10x8xf32> to vector<8xf32>
    %12 = vector.shape_cast %11 : vector<8xf32> to vector<1x8xf32>
    %13 = vector.broadcast %12 : vector<1x8xf32> to vector<10x8xf32>
    %14 = arith.subf %3, %13 : vector<10x8xf32>
    %15 = math.exp %14 : vector<10x8xf32>
    %cst_10 = arith.constant dense<0.000000e+00> : vector<8xf32>
    %16 = vector.multi_reduction <add>, %15, %cst_10 [0] : vector<10x8xf32> to vector<8xf32>
    %17 = vector.shape_cast %16 : vector<8xf32> to vector<1x8xf32>
    %18 = vector.broadcast %17 : vector<1x8xf32> to vector<10x8xf32>
    %19 = arith.divf %15, %18 : vector<10x8xf32>
    %cst_11 = arith.constant 9.99999997E-7 : f32
    %20 = vector.broadcast %cst_11 : f32 to vector<10x8xf32>
    %21 = arith.addf %19, %20 : vector<10x8xf32>
    %cst_12 = arith.constant dense<0.000000e+00> : vector<8xf32>
    %22 = vector.multi_reduction <add>, %21, %cst_12 [0] : vector<10x8xf32> to vector<8xf32>
    %23 = vector.shape_cast %22 : vector<8xf32> to vector<1x8xf32>
    %24 = vector.broadcast %23 : vector<1x8xf32> to vector<10x8xf32>
    %25 = arith.divf %21, %24 : vector<10x8xf32>
    %26 = tpu.iota {dimensions = array<i32: 0>} : vector<10x8xi32>
    %27 = vector.broadcast %4 : vector<1x8xi32> to vector<10x8xi32>
    %28 = arith.cmpi eq, %26, %27 : vector<10x8xi32>
    %cst_13 = arith.constant 1.000000e+00 : f32
    %cst_14 = arith.constant 0.000000e+00 : f32
    %29 = vector.broadcast %cst_13 : f32 to vector<10x8xf32>
    %30 = vector.broadcast %cst_14 : f32 to vector<10x8xf32>
    %31 = arith.select %28, %29, %30 : vector<10x8xi1>, vector<10x8xf32>
    %cst_15 = arith.constant 9.99999997E-7 : f32
    %32 = vector.broadcast %cst_15 : f32 to vector<10x8xf32>
    %33 = arith.addf %31, %32 : vector<10x8xf32>
    %cst_16 = arith.constant dense<0.000000e+00> : vector<8xf32>
    %34 = vector.multi_reduction <add>, %33, %cst_16 [0] : vector<10x8xf32> to vector<8xf32>
    %35 = vector.shape_cast %34 : vector<8xf32> to vector<1x8xf32>
    %36 = vector.broadcast %35 : vector<1x8xf32> to vector<10x8xf32>
    %37 = arith.divf %33, %36 : vector<10x8xf32>
    %cst_17 = arith.constant 9.99999997E-7 : f32
    %38 = vector.broadcast %cst_17 : f32 to vector<10x8xf32>
    %39 = arith.addf %25, %38 : vector<10x8xf32>
    %40 = math.log %39 : vector<10x8xf32>
    %cst_18 = arith.constant 9.99999997E-7 : f32
    %41 = vector.broadcast %cst_18 : f32 to vector<10x8xf32>
    %42 = arith.addf %37, %41 : vector<10x8xf32>
    %43 = math.log %42 : vector<10x8xf32>
    %cst_19 = arith.constant 0.000000e+00 : f32
    %44 = vector.broadcast %cst_19 : f32 to vector<10x8xf32>
    %c0_i32 = arith.constant 0 : i32
    %c0_i32_20 = arith.constant 0 : i32
    %45:6 = scf.while (%arg7 = %c0_i32, %arg8 = %44, %arg9 = %44, %arg10 = %44, %arg11 = %44, %arg12 = %c0_i32_20) : (i32, vector<10x8xf32>, vector<10x8xf32>, vector<10x8xf32>, vector<10x8xf32>, i32) -> (i32, vector<10x8xf32>, vector<10x8xf32>, vector<10x8xf32>, vector<10x8xf32>, i32) {
      %c100_i32 = arith.constant 100 : i32
      %108 = arith.cmpi slt, %arg7, %c100_i32 : i32
      %c0_i32_40 = arith.constant 0 : i32
      %109 = arith.cmpi eq, %arg12, %c0_i32_40 : i32
      %110 = arith.andi %108, %109 : i1
      scf.condition(%110) %arg7, %arg8, %arg9, %arg10, %arg11, %arg12 : i32, vector<10x8xf32>, vector<10x8xf32>, vector<10x8xf32>, vector<10x8xf32>, i32
    } do {
    ^bb0(%arg7: i32, %arg8: vector<10x8xf32>, %arg9: vector<10x8xf32>, %arg10: vector<10x8xf32>, %arg11: vector<10x8xf32>, %arg12: i32):
      %c0_i32_40 = arith.constant 0 : i32
      %c100_i32 = arith.constant 100 : i32
      %108 = arith.cmpi slt, %arg7, %c100_i32 : i32
      %cst_41 = arith.constant dense<0xFF800000> : vector<8xf32>
      %109 = vector.multi_reduction <maximumf>, %arg9, %cst_41 [0] : vector<10x8xf32> to vector<8xf32>
      %110 = vector.shape_cast %109 : vector<8xf32> to vector<1x8xf32>
      %111 = vector.broadcast %110 : vector<1x8xf32> to vector<10x8xf32>
      %112 = arith.subf %arg9, %111 : vector<10x8xf32>
      %113 = math.exp %112 : vector<10x8xf32>
      %114 = vector.extract_strided_slice %1 {offsets = [0, 0], sizes = [10, 1], strides = [1, 1]} : vector<10x10xf32> to vector<10x1xf32>
      %115 = vector.extract_strided_slice %113 {offsets = [0, 0], sizes = [1, 8], strides = [1, 1]} : vector<10x8xf32> to vector<1x8xf32>
      %116 = vector.broadcast %114 : vector<10x1xf32> to vector<10x8xf32>
      %117 = vector.broadcast %115 : vector<1x8xf32> to vector<10x8xf32>
      %118 = arith.mulf %116, %117 : vector<10x8xf32>
      %119 = vector.extract_strided_slice %1 {offsets = [0, 1], sizes = [10, 1], strides = [1, 1]} : vector<10x10xf32> to vector<10x1xf32>
      %120 = vector.extract_strided_slice %113 {offsets = [1, 0], sizes = [1, 8], strides = [1, 1]} : vector<10x8xf32> to vector<1x8xf32>
      %121 = vector.broadcast %119 : vector<10x1xf32> to vector<10x8xf32>
      %122 = vector.broadcast %120 : vector<1x8xf32> to vector<10x8xf32>
      %123 = arith.mulf %121, %122 : vector<10x8xf32>
      %124 = arith.addf %118, %123 : vector<10x8xf32>
      %125 = vector.extract_strided_slice %1 {offsets = [0, 2], sizes = [10, 1], strides = [1, 1]} : vector<10x10xf32> to vector<10x1xf32>
      %126 = vector.extract_strided_slice %113 {offsets = [2, 0], sizes = [1, 8], strides = [1, 1]} : vector<10x8xf32> to vector<1x8xf32>
      %127 = vector.broadcast %125 : vector<10x1xf32> to vector<10x8xf32>
      %128 = vector.broadcast %126 : vector<1x8xf32> to vector<10x8xf32>
      %129 = arith.mulf %127, %128 : vector<10x8xf32>
      %130 = arith.addf %124, %129 : vector<10x8xf32>
      %131 = vector.extract_strided_slice %1 {offsets = [0, 3], sizes = [10, 1], strides = [1, 1]} : vector<10x10xf32> to vector<10x1xf32>
      %132 = vector.extract_strided_slice %113 {offsets = [3, 0], sizes = [1, 8], strides = [1, 1]} : vector<10x8xf32> to vector<1x8xf32>
      %133 = vector.broadcast %131 : vector<10x1xf32> to vector<10x8xf32>
      %134 = vector.broadcast %132 : vector<1x8xf32> to vector<10x8xf32>
      %135 = arith.mulf %133, %134 : vector<10x8xf32>
      %136 = arith.addf %130, %135 : vector<10x8xf32>
      %137 = vector.extract_strided_slice %1 {offsets = [0, 4], sizes = [10, 1], strides = [1, 1]} : vector<10x10xf32> to vector<10x1xf32>
      %138 = vector.extract_strided_slice %113 {offsets = [4, 0], sizes = [1, 8], strides = [1, 1]} : vector<10x8xf32> to vector<1x8xf32>
      %139 = vector.broadcast %137 : vector<10x1xf32> to vector<10x8xf32>
      %140 = vector.broadcast %138 : vector<1x8xf32> to vector<10x8xf32>
      %141 = arith.mulf %139, %140 : vector<10x8xf32>
      %142 = arith.addf %136, %141 : vector<10x8xf32>
      %143 = vector.extract_strided_slice %1 {offsets = [0, 5], sizes = [10, 1], strides = [1, 1]} : vector<10x10xf32> to vector<10x1xf32>
      %144 = vector.extract_strided_slice %113 {offsets = [5, 0], sizes = [1, 8], strides = [1, 1]} : vector<10x8xf32> to vector<1x8xf32>
      %145 = vector.broadcast %143 : vector<10x1xf32> to vector<10x8xf32>
      %146 = vector.broadcast %144 : vector<1x8xf32> to vector<10x8xf32>
      %147 = arith.mulf %145, %146 : vector<10x8xf32>
      %148 = arith.addf %142, %147 : vector<10x8xf32>
      %149 = vector.extract_strided_slice %1 {offsets = [0, 6], sizes = [10, 1], strides = [1, 1]} : vector<10x10xf32> to vector<10x1xf32>
      %150 = vector.extract_strided_slice %113 {offsets = [6, 0], sizes = [1, 8], strides = [1, 1]} : vector<10x8xf32> to vector<1x8xf32>
      %151 = vector.broadcast %149 : vector<10x1xf32> to vector<10x8xf32>
      %152 = vector.broadcast %150 : vector<1x8xf32> to vector<10x8xf32>
      %153 = arith.mulf %151, %152 : vector<10x8xf32>
      %154 = arith.addf %148, %153 : vector<10x8xf32>
      %155 = vector.extract_strided_slice %1 {offsets = [0, 7], sizes = [10, 1], strides = [1, 1]} : vector<10x10xf32> to vector<10x1xf32>
      %156 = vector.extract_strided_slice %113 {offsets = [7, 0], sizes = [1, 8], strides = [1, 1]} : vector<10x8xf32> to vector<1x8xf32>
      %157 = vector.broadcast %155 : vector<10x1xf32> to vector<10x8xf32>
      %158 = vector.broadcast %156 : vector<1x8xf32> to vector<10x8xf32>
      %159 = arith.mulf %157, %158 : vector<10x8xf32>
      %160 = arith.addf %154, %159 : vector<10x8xf32>
      %161 = vector.extract_strided_slice %1 {offsets = [0, 8], sizes = [10, 1], strides = [1, 1]} : vector<10x10xf32> to vector<10x1xf32>
      %162 = vector.extract_strided_slice %113 {offsets = [8, 0], sizes = [1, 8], strides = [1, 1]} : vector<10x8xf32> to vector<1x8xf32>
      %163 = vector.broadcast %161 : vector<10x1xf32> to vector<10x8xf32>
      %164 = vector.broadcast %162 : vector<1x8xf32> to vector<10x8xf32>
      %165 = arith.mulf %163, %164 : vector<10x8xf32>
      %166 = arith.addf %160, %165 : vector<10x8xf32>
      %167 = vector.extract_strided_slice %1 {offsets = [0, 9], sizes = [10, 1], strides = [1, 1]} : vector<10x10xf32> to vector<10x1xf32>
      %168 = vector.extract_strided_slice %113 {offsets = [9, 0], sizes = [1, 8], strides = [1, 1]} : vector<10x8xf32> to vector<1x8xf32>
      %169 = vector.broadcast %167 : vector<10x1xf32> to vector<10x8xf32>
      %170 = vector.broadcast %168 : vector<1x8xf32> to vector<10x8xf32>
      %171 = arith.mulf %169, %170 : vector<10x8xf32>
      %172 = arith.addf %166, %171 : vector<10x8xf32>
      %173 = math.log %172 : vector<10x8xf32>
      %174 = vector.broadcast %110 : vector<1x8xf32> to vector<10x8xf32>
      %175 = arith.addf %174, %173 : vector<10x8xf32>
      %176 = arith.subf %40, %175 : vector<10x8xf32>
      %cst_42 = arith.constant dense<0xFF800000> : vector<8xf32>
      %177 = vector.multi_reduction <maximumf>, %176, %cst_42 [0] : vector<10x8xf32> to vector<8xf32>
      %178 = vector.shape_cast %177 : vector<8xf32> to vector<1x8xf32>
      %179 = vector.broadcast %178 : vector<1x8xf32> to vector<10x8xf32>
      %180 = arith.subf %176, %179 : vector<10x8xf32>
      %181 = math.exp %180 : vector<10x8xf32>
      %182 = vector.extract_strided_slice %1 {offsets = [0, 0], sizes = [10, 1], strides = [1, 1]} : vector<10x10xf32> to vector<10x1xf32>
      %183 = vector.extract_strided_slice %181 {offsets = [0, 0], sizes = [1, 8], strides = [1, 1]} : vector<10x8xf32> to vector<1x8xf32>
      %184 = vector.broadcast %182 : vector<10x1xf32> to vector<10x8xf32>
      %185 = vector.broadcast %183 : vector<1x8xf32> to vector<10x8xf32>
      %186 = arith.mulf %184, %185 : vector<10x8xf32>
      %187 = vector.extract_strided_slice %1 {offsets = [0, 1], sizes = [10, 1], strides = [1, 1]} : vector<10x10xf32> to vector<10x1xf32>
      %188 = vector.extract_strided_slice %181 {offsets = [1, 0], sizes = [1, 8], strides = [1, 1]} : vector<10x8xf32> to vector<1x8xf32>
      %189 = vector.broadcast %187 : vector<10x1xf32> to vector<10x8xf32>
      %190 = vector.broadcast %188 : vector<1x8xf32> to vector<10x8xf32>
      %191 = arith.mulf %189, %190 : vector<10x8xf32>
      %192 = arith.addf %186, %191 : vector<10x8xf32>
      %193 = vector.extract_strided_slice %1 {offsets = [0, 2], sizes = [10, 1], strides = [1, 1]} : vector<10x10xf32> to vector<10x1xf32>
      %194 = vector.extract_strided_slice %181 {offsets = [2, 0], sizes = [1, 8], strides = [1, 1]} : vector<10x8xf32> to vector<1x8xf32>
      %195 = vector.broadcast %193 : vector<10x1xf32> to vector<10x8xf32>
      %196 = vector.broadcast %194 : vector<1x8xf32> to vector<10x8xf32>
      %197 = arith.mulf %195, %196 : vector<10x8xf32>
      %198 = arith.addf %192, %197 : vector<10x8xf32>
      %199 = vector.extract_strided_slice %1 {offsets = [0, 3], sizes = [10, 1], strides = [1, 1]} : vector<10x10xf32> to vector<10x1xf32>
      %200 = vector.extract_strided_slice %181 {offsets = [3, 0], sizes = [1, 8], strides = [1, 1]} : vector<10x8xf32> to vector<1x8xf32>
      %201 = vector.broadcast %199 : vector<10x1xf32> to vector<10x8xf32>
      %202 = vector.broadcast %200 : vector<1x8xf32> to vector<10x8xf32>
      %203 = arith.mulf %201, %202 : vector<10x8xf32>
      %204 = arith.addf %198, %203 : vector<10x8xf32>
      %205 = vector.extract_strided_slice %1 {offsets = [0, 4], sizes = [10, 1], strides = [1, 1]} : vector<10x10xf32> to vector<10x1xf32>
      %206 = vector.extract_strided_slice %181 {offsets = [4, 0], sizes = [1, 8], strides = [1, 1]} : vector<10x8xf32> to vector<1x8xf32>
      %207 = vector.broadcast %205 : vector<10x1xf32> to vector<10x8xf32>
      %208 = vector.broadcast %206 : vector<1x8xf32> to vector<10x8xf32>
      %209 = arith.mulf %207, %208 : vector<10x8xf32>
      %210 = arith.addf %204, %209 : vector<10x8xf32>
      %211 = vector.extract_strided_slice %1 {offsets = [0, 5], sizes = [10, 1], strides = [1, 1]} : vector<10x10xf32> to vector<10x1xf32>
      %212 = vector.extract_strided_slice %181 {offsets = [5, 0], sizes = [1, 8], strides = [1, 1]} : vector<10x8xf32> to vector<1x8xf32>
      %213 = vector.broadcast %211 : vector<10x1xf32> to vector<10x8xf32>
      %214 = vector.broadcast %212 : vector<1x8xf32> to vector<10x8xf32>
      %215 = arith.mulf %213, %214 : vector<10x8xf32>
      %216 = arith.addf %210, %215 : vector<10x8xf32>
      %217 = vector.extract_strided_slice %1 {offsets = [0, 6], sizes = [10, 1], strides = [1, 1]} : vector<10x10xf32> to vector<10x1xf32>
      %218 = vector.extract_strided_slice %181 {offsets = [6, 0], sizes = [1, 8], strides = [1, 1]} : vector<10x8xf32> to vector<1x8xf32>
      %219 = vector.broadcast %217 : vector<10x1xf32> to vector<10x8xf32>
      %220 = vector.broadcast %218 : vector<1x8xf32> to vector<10x8xf32>
      %221 = arith.mulf %219, %220 : vector<10x8xf32>
      %222 = arith.addf %216, %221 : vector<10x8xf32>
      %223 = vector.extract_strided_slice %1 {offsets = [0, 7], sizes = [10, 1], strides = [1, 1]} : vector<10x10xf32> to vector<10x1xf32>
      %224 = vector.extract_strided_slice %181 {offsets = [7, 0], sizes = [1, 8], strides = [1, 1]} : vector<10x8xf32> to vector<1x8xf32>
      %225 = vector.broadcast %223 : vector<10x1xf32> to vector<10x8xf32>
      %226 = vector.broadcast %224 : vector<1x8xf32> to vector<10x8xf32>
      %227 = arith.mulf %225, %226 : vector<10x8xf32>
      %228 = arith.addf %222, %227 : vector<10x8xf32>
      %229 = vector.extract_strided_slice %1 {offsets = [0, 8], sizes = [10, 1], strides = [1, 1]} : vector<10x10xf32> to vector<10x1xf32>
      %230 = vector.extract_strided_slice %181 {offsets = [8, 0], sizes = [1, 8], strides = [1, 1]} : vector<10x8xf32> to vector<1x8xf32>
      %231 = vector.broadcast %229 : vector<10x1xf32> to vector<10x8xf32>
      %232 = vector.broadcast %230 : vector<1x8xf32> to vector<10x8xf32>
      %233 = arith.mulf %231, %232 : vector<10x8xf32>
      %234 = arith.addf %228, %233 : vector<10x8xf32>
      %235 = vector.extract_strided_slice %1 {offsets = [0, 9], sizes = [10, 1], strides = [1, 1]} : vector<10x10xf32> to vector<10x1xf32>
      %236 = vector.extract_strided_slice %181 {offsets = [9, 0], sizes = [1, 8], strides = [1, 1]} : vector<10x8xf32> to vector<1x8xf32>
      %237 = vector.broadcast %235 : vector<10x1xf32> to vector<10x8xf32>
      %238 = vector.broadcast %236 : vector<1x8xf32> to vector<10x8xf32>
      %239 = arith.mulf %237, %238 : vector<10x8xf32>
      %240 = arith.addf %234, %239 : vector<10x8xf32>
      %241 = math.log %240 : vector<10x8xf32>
      %242 = vector.broadcast %178 : vector<1x8xf32> to vector<10x8xf32>
      %243 = arith.addf %242, %241 : vector<10x8xf32>
      %244 = arith.subf %43, %243 : vector<10x8xf32>
      %245 = arith.subf %arg8, %176 : vector<10x8xf32>
      %246 = math.absf %245 : vector<10x8xf32>
      %cst_43 = arith.constant 0.000000e+00 : f32
      %247 = vector.shape_cast %10 : vector<1x8xi1> to vector<1x8xi1>
      %248 = vector.broadcast %247 : vector<1x8xi1> to vector<10x8xi1>
      %249 = vector.broadcast %cst_43 : f32 to vector<10x8xf32>
      %250 = arith.select %248, %246, %249 : vector<10x8xi1>, vector<10x8xf32>
      %251 = vector.shape_cast %250 : vector<10x8xf32> to vector<1x10x8xf32>
      %cst_44 = arith.constant dense<0xFF800000> : vector<1xf32>
      %252 = vector.multi_reduction <maximumf>, %251, %cst_44 [1, 2] : vector<1x10x8xf32> to vector<1xf32>
      %253 = vector.shape_cast %252 : vector<1xf32> to vector<1x1x1xf32>
      %254 = vector.extract %253[0, 0, 0] : f32 from vector<1x1x1xf32>
      %255 = arith.subf %arg9, %244 : vector<10x8xf32>
      %256 = math.absf %255 : vector<10x8xf32>
      %cst_45 = arith.constant 0.000000e+00 : f32
      %257 = vector.shape_cast %10 : vector<1x8xi1> to vector<1x8xi1>
      %258 = vector.broadcast %257 : vector<1x8xi1> to vector<10x8xi1>
      %259 = vector.broadcast %cst_45 : f32 to vector<10x8xf32>
      %260 = arith.select %258, %256, %259 : vector<10x8xi1>, vector<10x8xf32>
      %261 = vector.shape_cast %260 : vector<10x8xf32> to vector<1x10x8xf32>
      %cst_46 = arith.constant dense<0xFF800000> : vector<1xf32>
      %262 = vector.multi_reduction <maximumf>, %261, %cst_46 [1, 2] : vector<1x10x8xf32> to vector<1xf32>
      %263 = vector.shape_cast %262 : vector<1xf32> to vector<1x1x1xf32>
      %264 = vector.extract %263[0, 0, 0] : f32 from vector<1x1x1xf32>
      %cst_47 = arith.constant 9.99999974E-5 : f32
      %265 = arith.cmpf olt, %254, %cst_47 : f32
      %cst_48 = arith.constant 9.99999974E-5 : f32
      %266 = arith.cmpf olt, %264, %cst_48 : f32
      %267 = arith.andi %265, %266 : i1
      %268 = arith.andi %267, %108 : i1
      %c0_i32_49 = arith.constant 0 : i32
      %269 = arith.cmpi eq, %arg12, %c0_i32_49 : i32
      %270 = arith.andi %269, %268 : i1
      %271 = arith.select %270, %arg8, %arg10 : vector<10x8xf32>
      %272 = arith.select %270, %arg9, %arg11 : vector<10x8xf32>
      %273 = arith.extui %268 : i1 to i32
      %274 = arith.maxsi %arg12, %273 : i32
      %275 = arith.select %108, %176, %arg8 : vector<10x8xf32>
      %276 = arith.select %108, %244, %arg9 : vector<10x8xf32>
      %277 = arith.extui %108 : i1 to i32
      %278 = arith.addi %arg7, %277 : i32
      %c1_i32 = arith.constant 1 : i32
      %c100_i32_50 = arith.constant 100 : i32
      %279 = arith.cmpi slt, %278, %c100_i32_50 : i32
      %cst_51 = arith.constant dense<0xFF800000> : vector<8xf32>
      %280 = vector.multi_reduction <maximumf>, %276, %cst_51 [0] : vector<10x8xf32> to vector<8xf32>
      %281 = vector.shape_cast %280 : vector<8xf32> to vector<1x8xf32>
      %282 = vector.broadcast %281 : vector<1x8xf32> to vector<10x8xf32>
      %283 = arith.subf %276, %282 : vector<10x8xf32>
      %284 = math.exp %283 : vector<10x8xf32>
      %285 = vector.extract_strided_slice %1 {offsets = [0, 0], sizes = [10, 1], strides = [1, 1]} : vector<10x10xf32> to vector<10x1xf32>
      %286 = vector.extract_strided_slice %284 {offsets = [0, 0], sizes = [1, 8], strides = [1, 1]} : vector<10x8xf32> to vector<1x8xf32>
      %287 = vector.broadcast %285 : vector<10x1xf32> to vector<10x8xf32>
      %288 = vector.broadcast %286 : vector<1x8xf32> to vector<10x8xf32>
      %289 = arith.mulf %287, %288 : vector<10x8xf32>
      %290 = vector.extract_strided_slice %1 {offsets = [0, 1], sizes = [10, 1], strides = [1, 1]} : vector<10x10xf32> to vector<10x1xf32>
      %291 = vector.extract_strided_slice %284 {offsets = [1, 0], sizes = [1, 8], strides = [1, 1]} : vector<10x8xf32> to vector<1x8xf32>
      %292 = vector.broadcast %290 : vector<10x1xf32> to vector<10x8xf32>
      %293 = vector.broadcast %291 : vector<1x8xf32> to vector<10x8xf32>
      %294 = arith.mulf %292, %293 : vector<10x8xf32>
      %295 = arith.addf %289, %294 : vector<10x8xf32>
      %296 = vector.extract_strided_slice %1 {offsets = [0, 2], sizes = [10, 1], strides = [1, 1]} : vector<10x10xf32> to vector<10x1xf32>
      %297 = vector.extract_strided_slice %284 {offsets = [2, 0], sizes = [1, 8], strides = [1, 1]} : vector<10x8xf32> to vector<1x8xf32>
      %298 = vector.broadcast %296 : vector<10x1xf32> to vector<10x8xf32>
      %299 = vector.broadcast %297 : vector<1x8xf32> to vector<10x8xf32>
      %300 = arith.mulf %298, %299 : vector<10x8xf32>
      %301 = arith.addf %295, %300 : vector<10x8xf32>
      %302 = vector.extract_strided_slice %1 {offsets = [0, 3], sizes = [10, 1], strides = [1, 1]} : vector<10x10xf32> to vector<10x1xf32>
      %303 = vector.extract_strided_slice %284 {offsets = [3, 0], sizes = [1, 8], strides = [1, 1]} : vector<10x8xf32> to vector<1x8xf32>
      %304 = vector.broadcast %302 : vector<10x1xf32> to vector<10x8xf32>
      %305 = vector.broadcast %303 : vector<1x8xf32> to vector<10x8xf32>
      %306 = arith.mulf %304, %305 : vector<10x8xf32>
      %307 = arith.addf %301, %306 : vector<10x8xf32>
      %308 = vector.extract_strided_slice %1 {offsets = [0, 4], sizes = [10, 1], strides = [1, 1]} : vector<10x10xf32> to vector<10x1xf32>
      %309 = vector.extract_strided_slice %284 {offsets = [4, 0], sizes = [1, 8], strides = [1, 1]} : vector<10x8xf32> to vector<1x8xf32>
      %310 = vector.broadcast %308 : vector<10x1xf32> to vector<10x8xf32>
      %311 = vector.broadcast %309 : vector<1x8xf32> to vector<10x8xf32>
      %312 = arith.mulf %310, %311 : vector<10x8xf32>
      %313 = arith.addf %307, %312 : vector<10x8xf32>
      %314 = vector.extract_strided_slice %1 {offsets = [0, 5], sizes = [10, 1], strides = [1, 1]} : vector<10x10xf32> to vector<10x1xf32>
      %315 = vector.extract_strided_slice %284 {offsets = [5, 0], sizes = [1, 8], strides = [1, 1]} : vector<10x8xf32> to vector<1x8xf32>
      %316 = vector.broadcast %314 : vector<10x1xf32> to vector<10x8xf32>
      %317 = vector.broadcast %315 : vector<1x8xf32> to vector<10x8xf32>
      %318 = arith.mulf %316, %317 : vector<10x8xf32>
      %319 = arith.addf %313, %318 : vector<10x8xf32>
      %320 = vector.extract_strided_slice %1 {offsets = [0, 6], sizes = [10, 1], strides = [1, 1]} : vector<10x10xf32> to vector<10x1xf32>
      %321 = vector.extract_strided_slice %284 {offsets = [6, 0], sizes = [1, 8], strides = [1, 1]} : vector<10x8xf32> to vector<1x8xf32>
      %322 = vector.broadcast %320 : vector<10x1xf32> to vector<10x8xf32>
      %323 = vector.broadcast %321 : vector<1x8xf32> to vector<10x8xf32>
      %324 = arith.mulf %322, %323 : vector<10x8xf32>
      %325 = arith.addf %319, %324 : vector<10x8xf32>
      %326 = vector.extract_strided_slice %1 {offsets = [0, 7], sizes = [10, 1], strides = [1, 1]} : vector<10x10xf32> to vector<10x1xf32>
      %327 = vector.extract_strided_slice %284 {offsets = [7, 0], sizes = [1, 8], strides = [1, 1]} : vector<10x8xf32> to vector<1x8xf32>
      %328 = vector.broadcast %326 : vector<10x1xf32> to vector<10x8xf32>
      %329 = vector.broadcast %327 : vector<1x8xf32> to vector<10x8xf32>
      %330 = arith.mulf %328, %329 : vector<10x8xf32>
      %331 = arith.addf %325, %330 : vector<10x8xf32>
      %332 = vector.extract_strided_slice %1 {offsets = [0, 8], sizes = [10, 1], strides = [1, 1]} : vector<10x10xf32> to vector<10x1xf32>
      %333 = vector.extract_strided_slice %284 {offsets = [8, 0], sizes = [1, 8], strides = [1, 1]} : vector<10x8xf32> to vector<1x8xf32>
      %334 = vector.broadcast %332 : vector<10x1xf32> to vector<10x8xf32>
      %335 = vector.broadcast %333 : vector<1x8xf32> to vector<10x8xf32>
      %336 = arith.mulf %334, %335 : vector<10x8xf32>
      %337 = arith.addf %331, %336 : vector<10x8xf32>
      %338 = vector.extract_strided_slice %1 {offsets = [0, 9], sizes = [10, 1], strides = [1, 1]} : vector<10x10xf32> to vector<10x1xf32>
      %339 = vector.extract_strided_slice %284 {offsets = [9, 0], sizes = [1, 8], strides = [1, 1]} : vector<10x8xf32> to vector<1x8xf32>
      %340 = vector.broadcast %338 : vector<10x1xf32> to vector<10x8xf32>
      %341 = vector.broadcast %339 : vector<1x8xf32> to vector<10x8xf32>
      %342 = arith.mulf %340, %341 : vector<10x8xf32>
      %343 = arith.addf %337, %342 : vector<10x8xf32>
      %344 = math.log %343 : vector<10x8xf32>
      %345 = vector.broadcast %281 : vector<1x8xf32> to vector<10x8xf32>
      %346 = arith.addf %345, %344 : vector<10x8xf32>
      %347 = arith.subf %40, %346 : vector<10x8xf32>
      %cst_52 = arith.constant dense<0xFF800000> : vector<8xf32>
      %348 = vector.multi_reduction <maximumf>, %347, %cst_52 [0] : vector<10x8xf32> to vector<8xf32>
      %349 = vector.shape_cast %348 : vector<8xf32> to vector<1x8xf32>
      %350 = vector.broadcast %349 : vector<1x8xf32> to vector<10x8xf32>
      %351 = arith.subf %347, %350 : vector<10x8xf32>
      %352 = math.exp %351 : vector<10x8xf32>
      %353 = vector.extract_strided_slice %1 {offsets = [0, 0], sizes = [10, 1], strides = [1, 1]} : vector<10x10xf32> to vector<10x1xf32>
      %354 = vector.extract_strided_slice %352 {offsets = [0, 0], sizes = [1, 8], strides = [1, 1]} : vector<10x8xf32> to vector<1x8xf32>
      %355 = vector.broadcast %353 : vector<10x1xf32> to vector<10x8xf32>
      %356 = vector.broadcast %354 : vector<1x8xf32> to vector<10x8xf32>
      %357 = arith.mulf %355, %356 : vector<10x8xf32>
      %358 = vector.extract_strided_slice %1 {offsets = [0, 1], sizes = [10, 1], strides = [1, 1]} : vector<10x10xf32> to vector<10x1xf32>
      %359 = vector.extract_strided_slice %352 {offsets = [1, 0], sizes = [1, 8], strides = [1, 1]} : vector<10x8xf32> to vector<1x8xf32>
      %360 = vector.broadcast %358 : vector<10x1xf32> to vector<10x8xf32>
      %361 = vector.broadcast %359 : vector<1x8xf32> to vector<10x8xf32>
      %362 = arith.mulf %360, %361 : vector<10x8xf32>
      %363 = arith.addf %357, %362 : vector<10x8xf32>
      %364 = vector.extract_strided_slice %1 {offsets = [0, 2], sizes = [10, 1], strides = [1, 1]} : vector<10x10xf32> to vector<10x1xf32>
      %365 = vector.extract_strided_slice %352 {offsets = [2, 0], sizes = [1, 8], strides = [1, 1]} : vector<10x8xf32> to vector<1x8xf32>
      %366 = vector.broadcast %364 : vector<10x1xf32> to vector<10x8xf32>
      %367 = vector.broadcast %365 : vector<1x8xf32> to vector<10x8xf32>
      %368 = arith.mulf %366, %367 : vector<10x8xf32>
      %369 = arith.addf %363, %368 : vector<10x8xf32>
      %370 = vector.extract_strided_slice %1 {offsets = [0, 3], sizes = [10, 1], strides = [1, 1]} : vector<10x10xf32> to vector<10x1xf32>
      %371 = vector.extract_strided_slice %352 {offsets = [3, 0], sizes = [1, 8], strides = [1, 1]} : vector<10x8xf32> to vector<1x8xf32>
      %372 = vector.broadcast %370 : vector<10x1xf32> to vector<10x8xf32>
      %373 = vector.broadcast %371 : vector<1x8xf32> to vector<10x8xf32>
      %374 = arith.mulf %372, %373 : vector<10x8xf32>
      %375 = arith.addf %369, %374 : vector<10x8xf32>
      %376 = vector.extract_strided_slice %1 {offsets = [0, 4], sizes = [10, 1], strides = [1, 1]} : vector<10x10xf32> to vector<10x1xf32>
      %377 = vector.extract_strided_slice %352 {offsets = [4, 0], sizes = [1, 8], strides = [1, 1]} : vector<10x8xf32> to vector<1x8xf32>
      %378 = vector.broadcast %376 : vector<10x1xf32> to vector<10x8xf32>
      %379 = vector.broadcast %377 : vector<1x8xf32> to vector<10x8xf32>
      %380 = arith.mulf %378, %379 : vector<10x8xf32>
      %381 = arith.addf %375, %380 : vector<10x8xf32>
      %382 = vector.extract_strided_slice %1 {offsets = [0, 5], sizes = [10, 1], strides = [1, 1]} : vector<10x10xf32> to vector<10x1xf32>
      %383 = vector.extract_strided_slice %352 {offsets = [5, 0], sizes = [1, 8], strides = [1, 1]} : vector<10x8xf32> to vector<1x8xf32>
      %384 = vector.broadcast %382 : vector<10x1xf32> to vector<10x8xf32>
      %385 = vector.broadcast %383 : vector<1x8xf32> to vector<10x8xf32>
      %386 = arith.mulf %384, %385 : vector<10x8xf32>
      %387 = arith.addf %381, %386 : vector<10x8xf32>
      %388 = vector.extract_strided_slice %1 {offsets = [0, 6], sizes = [10, 1], strides = [1, 1]} : vector<10x10xf32> to vector<10x1xf32>
      %389 = vector.extract_strided_slice %352 {offsets = [6, 0], sizes = [1, 8], strides = [1, 1]} : vector<10x8xf32> to vector<1x8xf32>
      %390 = vector.broadcast %388 : vector<10x1xf32> to vector<10x8xf32>
      %391 = vector.broadcast %389 : vector<1x8xf32> to vector<10x8xf32>
      %392 = arith.mulf %390, %391 : vector<10x8xf32>
      %393 = arith.addf %387, %392 : vector<10x8xf32>
      %394 = vector.extract_strided_slice %1 {offsets = [0, 7], sizes = [10, 1], strides = [1, 1]} : vector<10x10xf32> to vector<10x1xf32>
      %395 = vector.extract_strided_slice %352 {offsets = [7, 0], sizes = [1, 8], strides = [1, 1]} : vector<10x8xf32> to vector<1x8xf32>
      %396 = vector.broadcast %394 : vector<10x1xf32> to vector<10x8xf32>
      %397 = vector.broadcast %395 : vector<1x8xf32> to vector<10x8xf32>
      %398 = arith.mulf %396, %397 : vector<10x8xf32>
      %399 = arith.addf %393, %398 : vector<10x8xf32>
      %400 = vector.extract_strided_slice %1 {offsets = [0, 8], sizes = [10, 1], strides = [1, 1]} : vector<10x10xf32> to vector<10x1xf32>
      %401 = vector.extract_strided_slice %352 {offsets = [8, 0], sizes = [1, 8], strides = [1, 1]} : vector<10x8xf32> to vector<1x8xf32>
      %402 = vector.broadcast %400 : vector<10x1xf32> to vector<10x8xf32>
      %403 = vector.broadcast %401 : vector<1x8xf32> to vector<10x8xf32>
      %404 = arith.mulf %402, %403 : vector<10x8xf32>
      %405 = arith.addf %399, %404 : vector<10x8xf32>
      %406 = vector.extract_strided_slice %1 {offsets = [0, 9], sizes = [10, 1], strides = [1, 1]} : vector<10x10xf32> to vector<10x1xf32>
      %407 = vector.extract_strided_slice %352 {offsets = [9, 0], sizes = [1, 8], strides = [1, 1]} : vector<10x8xf32> to vector<1x8xf32>
      %408 = vector.broadcast %406 : vector<10x1xf32> to vector<10x8xf32>
      %409 = vector.broadcast %407 : vector<1x8xf32> to vector<10x8xf32>
      %410 = arith.mulf %408, %409 : vector<10x8xf32>
      %411 = arith.addf %405, %410 : vector<10x8xf32>
      %412 = math.log %411 : vector<10x8xf32>
      %413 = vector.broadcast %349 : vector<1x8xf32> to vector<10x8xf32>
      %414 = arith.addf %413, %412 : vector<10x8xf32>
      %415 = arith.subf %43, %414 : vector<10x8xf32>
      %416 = arith.subf %275, %347 : vector<10x8xf32>
      %417 = math.absf %416 : vector<10x8xf32>
      %cst_53 = arith.constant 0.000000e+00 : f32
      %418 = vector.shape_cast %10 : vector<1x8xi1> to vector<1x8xi1>
      %419 = vector.broadcast %418 : vector<1x8xi1> to vector<10x8xi1>
      %420 = vector.broadcast %cst_53 : f32 to vector<10x8xf32>
      %421 = arith.select %419, %417, %420 : vector<10x8xi1>, vector<10x8xf32>
      %422 = vector.shape_cast %421 : vector<10x8xf32> to vector<1x10x8xf32>
      %cst_54 = arith.constant dense<0xFF800000> : vector<1xf32>
      %423 = vector.multi_reduction <maximumf>, %422, %cst_54 [1, 2] : vector<1x10x8xf32> to vector<1xf32>
      %424 = vector.shape_cast %423 : vector<1xf32> to vector<1x1x1xf32>
      %425 = vector.extract %424[0, 0, 0] : f32 from vector<1x1x1xf32>
      %426 = arith.subf %276, %415 : vector<10x8xf32>
      %427 = math.absf %426 : vector<10x8xf32>
      %cst_55 = arith.constant 0.000000e+00 : f32
      %428 = vector.shape_cast %10 : vector<1x8xi1> to vector<1x8xi1>
      %429 = vector.broadcast %428 : vector<1x8xi1> to vector<10x8xi1>
      %430 = vector.broadcast %cst_55 : f32 to vector<10x8xf32>
      %431 = arith.select %429, %427, %430 : vector<10x8xi1>, vector<10x8xf32>
      %432 = vector.shape_cast %431 : vector<10x8xf32> to vector<1x10x8xf32>
      %cst_56 = arith.constant dense<0xFF800000> : vector<1xf32>
      %433 = vector.multi_reduction <maximumf>, %432, %cst_56 [1, 2] : vector<1x10x8xf32> to vector<1xf32>
      %434 = vector.shape_cast %433 : vector<1xf32> to vector<1x1x1xf32>
      %435 = vector.extract %434[0, 0, 0] : f32 from vector<1x1x1xf32>
      %cst_57 = arith.constant 9.99999974E-5 : f32
      %436 = arith.cmpf olt, %425, %cst_57 : f32
      %cst_58 = arith.constant 9.99999974E-5 : f32
      %437 = arith.cmpf olt, %435, %cst_58 : f32
      %438 = arith.andi %436, %437 : i1
      %439 = arith.andi %438, %279 : i1
      %c0_i32_59 = arith.constant 0 : i32
      %440 = arith.cmpi eq, %274, %c0_i32_59 : i32
      %441 = arith.andi %440, %439 : i1
      %442 = arith.select %441, %275, %271 : vector<10x8xf32>
      %443 = arith.select %441, %276, %272 : vector<10x8xf32>
      %444 = arith.extui %439 : i1 to i32
      %445 = arith.maxsi %274, %444 : i32
      %446 = arith.select %279, %347, %275 : vector<10x8xf32>
      %447 = arith.select %279, %415, %276 : vector<10x8xf32>
      %448 = arith.extui %279 : i1 to i32
      %449 = arith.addi %278, %448 : i32
      %c2_i32 = arith.constant 2 : i32
      %c100_i32_60 = arith.constant 100 : i32
      %450 = arith.cmpi slt, %449, %c100_i32_60 : i32
      %cst_61 = arith.constant dense<0xFF800000> : vector<8xf32>
      %451 = vector.multi_reduction <maximumf>, %447, %cst_61 [0] : vector<10x8xf32> to vector<8xf32>
      %452 = vector.shape_cast %451 : vector<8xf32> to vector<1x8xf32>
      %453 = vector.broadcast %452 : vector<1x8xf32> to vector<10x8xf32>
      %454 = arith.subf %447, %453 : vector<10x8xf32>
      %455 = math.exp %454 : vector<10x8xf32>
      %456 = vector.extract_strided_slice %1 {offsets = [0, 0], sizes = [10, 1], strides = [1, 1]} : vector<10x10xf32> to vector<10x1xf32>
      %457 = vector.extract_strided_slice %455 {offsets = [0, 0], sizes = [1, 8], strides = [1, 1]} : vector<10x8xf32> to vector<1x8xf32>
      %458 = vector.broadcast %456 : vector<10x1xf32> to vector<10x8xf32>
      %459 = vector.broadcast %457 : vector<1x8xf32> to vector<10x8xf32>
      %460 = arith.mulf %458, %459 : vector<10x8xf32>
      %461 = vector.extract_strided_slice %1 {offsets = [0, 1], sizes = [10, 1], strides = [1, 1]} : vector<10x10xf32> to vector<10x1xf32>
      %462 = vector.extract_strided_slice %455 {offsets = [1, 0], sizes = [1, 8], strides = [1, 1]} : vector<10x8xf32> to vector<1x8xf32>
      %463 = vector.broadcast %461 : vector<10x1xf32> to vector<10x8xf32>
      %464 = vector.broadcast %462 : vector<1x8xf32> to vector<10x8xf32>
      %465 = arith.mulf %463, %464 : vector<10x8xf32>
      %466 = arith.addf %460, %465 : vector<10x8xf32>
      %467 = vector.extract_strided_slice %1 {offsets = [0, 2], sizes = [10, 1], strides = [1, 1]} : vector<10x10xf32> to vector<10x1xf32>
      %468 = vector.extract_strided_slice %455 {offsets = [2, 0], sizes = [1, 8], strides = [1, 1]} : vector<10x8xf32> to vector<1x8xf32>
      %469 = vector.broadcast %467 : vector<10x1xf32> to vector<10x8xf32>
      %470 = vector.broadcast %468 : vector<1x8xf32> to vector<10x8xf32>
      %471 = arith.mulf %469, %470 : vector<10x8xf32>
      %472 = arith.addf %466, %471 : vector<10x8xf32>
      %473 = vector.extract_strided_slice %1 {offsets = [0, 3], sizes = [10, 1], strides = [1, 1]} : vector<10x10xf32> to vector<10x1xf32>
      %474 = vector.extract_strided_slice %455 {offsets = [3, 0], sizes = [1, 8], strides = [1, 1]} : vector<10x8xf32> to vector<1x8xf32>
      %475 = vector.broadcast %473 : vector<10x1xf32> to vector<10x8xf32>
      %476 = vector.broadcast %474 : vector<1x8xf32> to vector<10x8xf32>
      %477 = arith.mulf %475, %476 : vector<10x8xf32>
      %478 = arith.addf %472, %477 : vector<10x8xf32>
      %479 = vector.extract_strided_slice %1 {offsets = [0, 4], sizes = [10, 1], strides = [1, 1]} : vector<10x10xf32> to vector<10x1xf32>
      %480 = vector.extract_strided_slice %455 {offsets = [4, 0], sizes = [1, 8], strides = [1, 1]} : vector<10x8xf32> to vector<1x8xf32>
      %481 = vector.broadcast %479 : vector<10x1xf32> to vector<10x8xf32>
      %482 = vector.broadcast %480 : vector<1x8xf32> to vector<10x8xf32>
      %483 = arith.mulf %481, %482 : vector<10x8xf32>
      %484 = arith.addf %478, %483 : vector<10x8xf32>
      %485 = vector.extract_strided_slice %1 {offsets = [0, 5], sizes = [10, 1], strides = [1, 1]} : vector<10x10xf32> to vector<10x1xf32>
      %486 = vector.extract_strided_slice %455 {offsets = [5, 0], sizes = [1, 8], strides = [1, 1]} : vector<10x8xf32> to vector<1x8xf32>
      %487 = vector.broadcast %485 : vector<10x1xf32> to vector<10x8xf32>
      %488 = vector.broadcast %486 : vector<1x8xf32> to vector<10x8xf32>
      %489 = arith.mulf %487, %488 : vector<10x8xf32>
      %490 = arith.addf %484, %489 : vector<10x8xf32>
      %491 = vector.extract_strided_slice %1 {offsets = [0, 6], sizes = [10, 1], strides = [1, 1]} : vector<10x10xf32> to vector<10x1xf32>
      %492 = vector.extract_strided_slice %455 {offsets = [6, 0], sizes = [1, 8], strides = [1, 1]} : vector<10x8xf32> to vector<1x8xf32>
      %493 = vector.broadcast %491 : vector<10x1xf32> to vector<10x8xf32>
      %494 = vector.broadcast %492 : vector<1x8xf32> to vector<10x8xf32>
      %495 = arith.mulf %493, %494 : vector<10x8xf32>
      %496 = arith.addf %490, %495 : vector<10x8xf32>
      %497 = vector.extract_strided_slice %1 {offsets = [0, 7], sizes = [10, 1], strides = [1, 1]} : vector<10x10xf32> to vector<10x1xf32>
      %498 = vector.extract_strided_slice %455 {offsets = [7, 0], sizes = [1, 8], strides = [1, 1]} : vector<10x8xf32> to vector<1x8xf32>
      %499 = vector.broadcast %497 : vector<10x1xf32> to vector<10x8xf32>
      %500 = vector.broadcast %498 : vector<1x8xf32> to vector<10x8xf32>
      %501 = arith.mulf %499, %500 : vector<10x8xf32>
      %502 = arith.addf %496, %501 : vector<10x8xf32>
      %503 = vector.extract_strided_slice %1 {offsets = [0, 8], sizes = [10, 1], strides = [1, 1]} : vector<10x10xf32> to vector<10x1xf32>
      %504 = vector.extract_strided_slice %455 {offsets = [8, 0], sizes = [1, 8], strides = [1, 1]} : vector<10x8xf32> to vector<1x8xf32>
      %505 = vector.broadcast %503 : vector<10x1xf32> to vector<10x8xf32>
      %506 = vector.broadcast %504 : vector<1x8xf32> to vector<10x8xf32>
      %507 = arith.mulf %505, %506 : vector<10x8xf32>
      %508 = arith.addf %502, %507 : vector<10x8xf32>
      %509 = vector.extract_strided_slice %1 {offsets = [0, 9], sizes = [10, 1], strides = [1, 1]} : vector<10x10xf32> to vector<10x1xf32>
      %510 = vector.extract_strided_slice %455 {offsets = [9, 0], sizes = [1, 8], strides = [1, 1]} : vector<10x8xf32> to vector<1x8xf32>
      %511 = vector.broadcast %509 : vector<10x1xf32> to vector<10x8xf32>
      %512 = vector.broadcast %510 : vector<1x8xf32> to vector<10x8xf32>
      %513 = arith.mulf %511, %512 : vector<10x8xf32>
      %514 = arith.addf %508, %513 : vector<10x8xf32>
      %515 = math.log %514 : vector<10x8xf32>
      %516 = vector.broadcast %452 : vector<1x8xf32> to vector<10x8xf32>
      %517 = arith.addf %516, %515 : vector<10x8xf32>
      %518 = arith.subf %40, %517 : vector<10x8xf32>
      %cst_62 = arith.constant dense<0xFF800000> : vector<8xf32>
      %519 = vector.multi_reduction <maximumf>, %518, %cst_62 [0] : vector<10x8xf32> to vector<8xf32>
      %520 = vector.shape_cast %519 : vector<8xf32> to vector<1x8xf32>
      %521 = vector.broadcast %520 : vector<1x8xf32> to vector<10x8xf32>
      %522 = arith.subf %518, %521 : vector<10x8xf32>
      %523 = math.exp %522 : vector<10x8xf32>
      %524 = vector.extract_strided_slice %1 {offsets = [0, 0], sizes = [10, 1], strides = [1, 1]} : vector<10x10xf32> to vector<10x1xf32>
      %525 = vector.extract_strided_slice %523 {offsets = [0, 0], sizes = [1, 8], strides = [1, 1]} : vector<10x8xf32> to vector<1x8xf32>
      %526 = vector.broadcast %524 : vector<10x1xf32> to vector<10x8xf32>
      %527 = vector.broadcast %525 : vector<1x8xf32> to vector<10x8xf32>
      %528 = arith.mulf %526, %527 : vector<10x8xf32>
      %529 = vector.extract_strided_slice %1 {offsets = [0, 1], sizes = [10, 1], strides = [1, 1]} : vector<10x10xf32> to vector<10x1xf32>
      %530 = vector.extract_strided_slice %523 {offsets = [1, 0], sizes = [1, 8], strides = [1, 1]} : vector<10x8xf32> to vector<1x8xf32>
      %531 = vector.broadcast %529 : vector<10x1xf32> to vector<10x8xf32>
      %532 = vector.broadcast %530 : vector<1x8xf32> to vector<10x8xf32>
      %533 = arith.mulf %531, %532 : vector<10x8xf32>
      %534 = arith.addf %528, %533 : vector<10x8xf32>
      %535 = vector.extract_strided_slice %1 {offsets = [0, 2], sizes = [10, 1], strides = [1, 1]} : vector<10x10xf32> to vector<10x1xf32>
      %536 = vector.extract_strided_slice %523 {offsets = [2, 0], sizes = [1, 8], strides = [1, 1]} : vector<10x8xf32> to vector<1x8xf32>
      %537 = vector.broadcast %535 : vector<10x1xf32> to vector<10x8xf32>
      %538 = vector.broadcast %536 : vector<1x8xf32> to vector<10x8xf32>
      %539 = arith.mulf %537, %538 : vector<10x8xf32>
      %540 = arith.addf %534, %539 : vector<10x8xf32>
      %541 = vector.extract_strided_slice %1 {offsets = [0, 3], sizes = [10, 1], strides = [1, 1]} : vector<10x10xf32> to vector<10x1xf32>
      %542 = vector.extract_strided_slice %523 {offsets = [3, 0], sizes = [1, 8], strides = [1, 1]} : vector<10x8xf32> to vector<1x8xf32>
      %543 = vector.broadcast %541 : vector<10x1xf32> to vector<10x8xf32>
      %544 = vector.broadcast %542 : vector<1x8xf32> to vector<10x8xf32>
      %545 = arith.mulf %543, %544 : vector<10x8xf32>
      %546 = arith.addf %540, %545 : vector<10x8xf32>
      %547 = vector.extract_strided_slice %1 {offsets = [0, 4], sizes = [10, 1], strides = [1, 1]} : vector<10x10xf32> to vector<10x1xf32>
      %548 = vector.extract_strided_slice %523 {offsets = [4, 0], sizes = [1, 8], strides = [1, 1]} : vector<10x8xf32> to vector<1x8xf32>
      %549 = vector.broadcast %547 : vector<10x1xf32> to vector<10x8xf32>
      %550 = vector.broadcast %548 : vector<1x8xf32> to vector<10x8xf32>
      %551 = arith.mulf %549, %550 : vector<10x8xf32>
      %552 = arith.addf %546, %551 : vector<10x8xf32>
      %553 = vector.extract_strided_slice %1 {offsets = [0, 5], sizes = [10, 1], strides = [1, 1]} : vector<10x10xf32> to vector<10x1xf32>
      %554 = vector.extract_strided_slice %523 {offsets = [5, 0], sizes = [1, 8], strides = [1, 1]} : vector<10x8xf32> to vector<1x8xf32>
      %555 = vector.broadcast %553 : vector<10x1xf32> to vector<10x8xf32>
      %556 = vector.broadcast %554 : vector<1x8xf32> to vector<10x8xf32>
      %557 = arith.mulf %555, %556 : vector<10x8xf32>
      %558 = arith.addf %552, %557 : vector<10x8xf32>
      %559 = vector.extract_strided_slice %1 {offsets = [0, 6], sizes = [10, 1], strides = [1, 1]} : vector<10x10xf32> to vector<10x1xf32>
      %560 = vector.extract_strided_slice %523 {offsets = [6, 0], sizes = [1, 8], strides = [1, 1]} : vector<10x8xf32> to vector<1x8xf32>
      %561 = vector.broadcast %559 : vector<10x1xf32> to vector<10x8xf32>
      %562 = vector.broadcast %560 : vector<1x8xf32> to vector<10x8xf32>
      %563 = arith.mulf %561, %562 : vector<10x8xf32>
      %564 = arith.addf %558, %563 : vector<10x8xf32>
      %565 = vector.extract_strided_slice %1 {offsets = [0, 7], sizes = [10, 1], strides = [1, 1]} : vector<10x10xf32> to vector<10x1xf32>
      %566 = vector.extract_strided_slice %523 {offsets = [7, 0], sizes = [1, 8], strides = [1, 1]} : vector<10x8xf32> to vector<1x8xf32>
      %567 = vector.broadcast %565 : vector<10x1xf32> to vector<10x8xf32>
      %568 = vector.broadcast %566 : vector<1x8xf32> to vector<10x8xf32>
      %569 = arith.mulf %567, %568 : vector<10x8xf32>
      %570 = arith.addf %564, %569 : vector<10x8xf32>
      %571 = vector.extract_strided_slice %1 {offsets = [0, 8], sizes = [10, 1], strides = [1, 1]} : vector<10x10xf32> to vector<10x1xf32>
      %572 = vector.extract_strided_slice %523 {offsets = [8, 0], sizes = [1, 8], strides = [1, 1]} : vector<10x8xf32> to vector<1x8xf32>
      %573 = vector.broadcast %571 : vector<10x1xf32> to vector<10x8xf32>
      %574 = vector.broadcast %572 : vector<1x8xf32> to vector<10x8xf32>
      %575 = arith.mulf %573, %574 : vector<10x8xf32>
      %576 = arith.addf %570, %575 : vector<10x8xf32>
      %577 = vector.extract_strided_slice %1 {offsets = [0, 9], sizes = [10, 1], strides = [1, 1]} : vector<10x10xf32> to vector<10x1xf32>
      %578 = vector.extract_strided_slice %523 {offsets = [9, 0], sizes = [1, 8], strides = [1, 1]} : vector<10x8xf32> to vector<1x8xf32>
      %579 = vector.broadcast %577 : vector<10x1xf32> to vector<10x8xf32>
      %580 = vector.broadcast %578 : vector<1x8xf32> to vector<10x8xf32>
      %581 = arith.mulf %579, %580 : vector<10x8xf32>
      %582 = arith.addf %576, %581 : vector<10x8xf32>
      %583 = math.log %582 : vector<10x8xf32>
      %584 = vector.broadcast %520 : vector<1x8xf32> to vector<10x8xf32>
      %585 = arith.addf %584, %583 : vector<10x8xf32>
      %586 = arith.subf %43, %585 : vector<10x8xf32>
      %587 = arith.subf %446, %518 : vector<10x8xf32>
      %588 = math.absf %587 : vector<10x8xf32>
      %cst_63 = arith.constant 0.000000e+00 : f32
      %589 = vector.shape_cast %10 : vector<1x8xi1> to vector<1x8xi1>
      %590 = vector.broadcast %589 : vector<1x8xi1> to vector<10x8xi1>
      %591 = vector.broadcast %cst_63 : f32 to vector<10x8xf32>
      %592 = arith.select %590, %588, %591 : vector<10x8xi1>, vector<10x8xf32>
      %593 = vector.shape_cast %592 : vector<10x8xf32> to vector<1x10x8xf32>
      %cst_64 = arith.constant dense<0xFF800000> : vector<1xf32>
      %594 = vector.multi_reduction <maximumf>, %593, %cst_64 [1, 2] : vector<1x10x8xf32> to vector<1xf32>
      %595 = vector.shape_cast %594 : vector<1xf32> to vector<1x1x1xf32>
      %596 = vector.extract %595[0, 0, 0] : f32 from vector<1x1x1xf32>
      %597 = arith.subf %447, %586 : vector<10x8xf32>
      %598 = math.absf %597 : vector<10x8xf32>
      %cst_65 = arith.constant 0.000000e+00 : f32
      %599 = vector.shape_cast %10 : vector<1x8xi1> to vector<1x8xi1>
      %600 = vector.broadcast %599 : vector<1x8xi1> to vector<10x8xi1>
      %601 = vector.broadcast %cst_65 : f32 to vector<10x8xf32>
      %602 = arith.select %600, %598, %601 : vector<10x8xi1>, vector<10x8xf32>
      %603 = vector.shape_cast %602 : vector<10x8xf32> to vector<1x10x8xf32>
      %cst_66 = arith.constant dense<0xFF800000> : vector<1xf32>
      %604 = vector.multi_reduction <maximumf>, %603, %cst_66 [1, 2] : vector<1x10x8xf32> to vector<1xf32>
      %605 = vector.shape_cast %604 : vector<1xf32> to vector<1x1x1xf32>
      %606 = vector.extract %605[0, 0, 0] : f32 from vector<1x1x1xf32>
      %cst_67 = arith.constant 9.99999974E-5 : f32
      %607 = arith.cmpf olt, %596, %cst_67 : f32
      %cst_68 = arith.constant 9.99999974E-5 : f32
      %608 = arith.cmpf olt, %606, %cst_68 : f32
      %609 = arith.andi %607, %608 : i1
      %610 = arith.andi %609, %450 : i1
      %c0_i32_69 = arith.constant 0 : i32
      %611 = arith.cmpi eq, %445, %c0_i32_69 : i32
      %612 = arith.andi %611, %610 : i1
      %613 = arith.select %612, %446, %442 : vector<10x8xf32>
      %614 = arith.select %612, %447, %443 : vector<10x8xf32>
      %615 = arith.extui %610 : i1 to i32
      %616 = arith.maxsi %445, %615 : i32
      %617 = arith.select %450, %518, %446 : vector<10x8xf32>
      %618 = arith.select %450, %586, %447 : vector<10x8xf32>
      %619 = arith.extui %450 : i1 to i32
      %620 = arith.addi %449, %619 : i32
      %c3_i32 = arith.constant 3 : i32
      %c100_i32_70 = arith.constant 100 : i32
      %621 = arith.cmpi slt, %620, %c100_i32_70 : i32
      %cst_71 = arith.constant dense<0xFF800000> : vector<8xf32>
      %622 = vector.multi_reduction <maximumf>, %618, %cst_71 [0] : vector<10x8xf32> to vector<8xf32>
      %623 = vector.shape_cast %622 : vector<8xf32> to vector<1x8xf32>
      %624 = vector.broadcast %623 : vector<1x8xf32> to vector<10x8xf32>
      %625 = arith.subf %618, %624 : vector<10x8xf32>
      %626 = math.exp %625 : vector<10x8xf32>
      %627 = vector.extract_strided_slice %1 {offsets = [0, 0], sizes = [10, 1], strides = [1, 1]} : vector<10x10xf32> to vector<10x1xf32>
      %628 = vector.extract_strided_slice %626 {offsets = [0, 0], sizes = [1, 8], strides = [1, 1]} : vector<10x8xf32> to vector<1x8xf32>
      %629 = vector.broadcast %627 : vector<10x1xf32> to vector<10x8xf32>
      %630 = vector.broadcast %628 : vector<1x8xf32> to vector<10x8xf32>
      %631 = arith.mulf %629, %630 : vector<10x8xf32>
      %632 = vector.extract_strided_slice %1 {offsets = [0, 1], sizes = [10, 1], strides = [1, 1]} : vector<10x10xf32> to vector<10x1xf32>
      %633 = vector.extract_strided_slice %626 {offsets = [1, 0], sizes = [1, 8], strides = [1, 1]} : vector<10x8xf32> to vector<1x8xf32>
      %634 = vector.broadcast %632 : vector<10x1xf32> to vector<10x8xf32>
      %635 = vector.broadcast %633 : vector<1x8xf32> to vector<10x8xf32>
      %636 = arith.mulf %634, %635 : vector<10x8xf32>
      %637 = arith.addf %631, %636 : vector<10x8xf32>
      %638 = vector.extract_strided_slice %1 {offsets = [0, 2], sizes = [10, 1], strides = [1, 1]} : vector<10x10xf32> to vector<10x1xf32>
      %639 = vector.extract_strided_slice %626 {offsets = [2, 0], sizes = [1, 8], strides = [1, 1]} : vector<10x8xf32> to vector<1x8xf32>
      %640 = vector.broadcast %638 : vector<10x1xf32> to vector<10x8xf32>
      %641 = vector.broadcast %639 : vector<1x8xf32> to vector<10x8xf32>
      %642 = arith.mulf %640, %641 : vector<10x8xf32>
      %643 = arith.addf %637, %642 : vector<10x8xf32>
      %644 = vector.extract_strided_slice %1 {offsets = [0, 3], sizes = [10, 1], strides = [1, 1]} : vector<10x10xf32> to vector<10x1xf32>
      %645 = vector.extract_strided_slice %626 {offsets = [3, 0], sizes = [1, 8], strides = [1, 1]} : vector<10x8xf32> to vector<1x8xf32>
      %646 = vector.broadcast %644 : vector<10x1xf32> to vector<10x8xf32>
      %647 = vector.broadcast %645 : vector<1x8xf32> to vector<10x8xf32>
      %648 = arith.mulf %646, %647 : vector<10x8xf32>
      %649 = arith.addf %643, %648 : vector<10x8xf32>
      %650 = vector.extract_strided_slice %1 {offsets = [0, 4], sizes = [10, 1], strides = [1, 1]} : vector<10x10xf32> to vector<10x1xf32>
      %651 = vector.extract_strided_slice %626 {offsets = [4, 0], sizes = [1, 8], strides = [1, 1]} : vector<10x8xf32> to vector<1x8xf32>
      %652 = vector.broadcast %650 : vector<10x1xf32> to vector<10x8xf32>
      %653 = vector.broadcast %651 : vector<1x8xf32> to vector<10x8xf32>
      %654 = arith.mulf %652, %653 : vector<10x8xf32>
      %655 = arith.addf %649, %654 : vector<10x8xf32>
      %656 = vector.extract_strided_slice %1 {offsets = [0, 5], sizes = [10, 1], strides = [1, 1]} : vector<10x10xf32> to vector<10x1xf32>
      %657 = vector.extract_strided_slice %626 {offsets = [5, 0], sizes = [1, 8], strides = [1, 1]} : vector<10x8xf32> to vector<1x8xf32>
      %658 = vector.broadcast %656 : vector<10x1xf32> to vector<10x8xf32>
      %659 = vector.broadcast %657 : vector<1x8xf32> to vector<10x8xf32>
      %660 = arith.mulf %658, %659 : vector<10x8xf32>
      %661 = arith.addf %655, %660 : vector<10x8xf32>
      %662 = vector.extract_strided_slice %1 {offsets = [0, 6], sizes = [10, 1], strides = [1, 1]} : vector<10x10xf32> to vector<10x1xf32>
      %663 = vector.extract_strided_slice %626 {offsets = [6, 0], sizes = [1, 8], strides = [1, 1]} : vector<10x8xf32> to vector<1x8xf32>
      %664 = vector.broadcast %662 : vector<10x1xf32> to vector<10x8xf32>
      %665 = vector.broadcast %663 : vector<1x8xf32> to vector<10x8xf32>
      %666 = arith.mulf %664, %665 : vector<10x8xf32>
      %667 = arith.addf %661, %666 : vector<10x8xf32>
      %668 = vector.extract_strided_slice %1 {offsets = [0, 7], sizes = [10, 1], strides = [1, 1]} : vector<10x10xf32> to vector<10x1xf32>
      %669 = vector.extract_strided_slice %626 {offsets = [7, 0], sizes = [1, 8], strides = [1, 1]} : vector<10x8xf32> to vector<1x8xf32>
      %670 = vector.broadcast %668 : vector<10x1xf32> to vector<10x8xf32>
      %671 = vector.broadcast %669 : vector<1x8xf32> to vector<10x8xf32>
      %672 = arith.mulf %670, %671 : vector<10x8xf32>
      %673 = arith.addf %667, %672 : vector<10x8xf32>
      %674 = vector.extract_strided_slice %1 {offsets = [0, 8], sizes = [10, 1], strides = [1, 1]} : vector<10x10xf32> to vector<10x1xf32>
      %675 = vector.extract_strided_slice %626 {offsets = [8, 0], sizes = [1, 8], strides = [1, 1]} : vector<10x8xf32> to vector<1x8xf32>
      %676 = vector.broadcast %674 : vector<10x1xf32> to vector<10x8xf32>
      %677 = vector.broadcast %675 : vector<1x8xf32> to vector<10x8xf32>
      %678 = arith.mulf %676, %677 : vector<10x8xf32>
      %679 = arith.addf %673, %678 : vector<10x8xf32>
      %680 = vector.extract_strided_slice %1 {offsets = [0, 9], sizes = [10, 1], strides = [1, 1]} : vector<10x10xf32> to vector<10x1xf32>
      %681 = vector.extract_strided_slice %626 {offsets = [9, 0], sizes = [1, 8], strides = [1, 1]} : vector<10x8xf32> to vector<1x8xf32>
      %682 = vector.broadcast %680 : vector<10x1xf32> to vector<10x8xf32>
      %683 = vector.broadcast %681 : vector<1x8xf32> to vector<10x8xf32>
      %684 = arith.mulf %682, %683 : vector<10x8xf32>
      %685 = arith.addf %679, %684 : vector<10x8xf32>
      %686 = math.log %685 : vector<10x8xf32>
      %687 = vector.broadcast %623 : vector<1x8xf32> to vector<10x8xf32>
      %688 = arith.addf %687, %686 : vector<10x8xf32>
      %689 = arith.subf %40, %688 : vector<10x8xf32>
      %cst_72 = arith.constant dense<0xFF800000> : vector<8xf32>
      %690 = vector.multi_reduction <maximumf>, %689, %cst_72 [0] : vector<10x8xf32> to vector<8xf32>
      %691 = vector.shape_cast %690 : vector<8xf32> to vector<1x8xf32>
      %692 = vector.broadcast %691 : vector<1x8xf32> to vector<10x8xf32>
      %693 = arith.subf %689, %692 : vector<10x8xf32>
      %694 = math.exp %693 : vector<10x8xf32>
      %695 = vector.extract_strided_slice %1 {offsets = [0, 0], sizes = [10, 1], strides = [1, 1]} : vector<10x10xf32> to vector<10x1xf32>
      %696 = vector.extract_strided_slice %694 {offsets = [0, 0], sizes = [1, 8], strides = [1, 1]} : vector<10x8xf32> to vector<1x8xf32>
      %697 = vector.broadcast %695 : vector<10x1xf32> to vector<10x8xf32>
      %698 = vector.broadcast %696 : vector<1x8xf32> to vector<10x8xf32>
      %699 = arith.mulf %697, %698 : vector<10x8xf32>
      %700 = vector.extract_strided_slice %1 {offsets = [0, 1], sizes = [10, 1], strides = [1, 1]} : vector<10x10xf32> to vector<10x1xf32>
      %701 = vector.extract_strided_slice %694 {offsets = [1, 0], sizes = [1, 8], strides = [1, 1]} : vector<10x8xf32> to vector<1x8xf32>
      %702 = vector.broadcast %700 : vector<10x1xf32> to vector<10x8xf32>
      %703 = vector.broadcast %701 : vector<1x8xf32> to vector<10x8xf32>
      %704 = arith.mulf %702, %703 : vector<10x8xf32>
      %705 = arith.addf %699, %704 : vector<10x8xf32>
      %706 = vector.extract_strided_slice %1 {offsets = [0, 2], sizes = [10, 1], strides = [1, 1]} : vector<10x10xf32> to vector<10x1xf32>
      %707 = vector.extract_strided_slice %694 {offsets = [2, 0], sizes = [1, 8], strides = [1, 1]} : vector<10x8xf32> to vector<1x8xf32>
      %708 = vector.broadcast %706 : vector<10x1xf32> to vector<10x8xf32>
      %709 = vector.broadcast %707 : vector<1x8xf32> to vector<10x8xf32>
      %710 = arith.mulf %708, %709 : vector<10x8xf32>
      %711 = arith.addf %705, %710 : vector<10x8xf32>
      %712 = vector.extract_strided_slice %1 {offsets = [0, 3], sizes = [10, 1], strides = [1, 1]} : vector<10x10xf32> to vector<10x1xf32>
      %713 = vector.extract_strided_slice %694 {offsets = [3, 0], sizes = [1, 8], strides = [1, 1]} : vector<10x8xf32> to vector<1x8xf32>
      %714 = vector.broadcast %712 : vector<10x1xf32> to vector<10x8xf32>
      %715 = vector.broadcast %713 : vector<1x8xf32> to vector<10x8xf32>
      %716 = arith.mulf %714, %715 : vector<10x8xf32>
      %717 = arith.addf %711, %716 : vector<10x8xf32>
      %718 = vector.extract_strided_slice %1 {offsets = [0, 4], sizes = [10, 1], strides = [1, 1]} : vector<10x10xf32> to vector<10x1xf32>
      %719 = vector.extract_strided_slice %694 {offsets = [4, 0], sizes = [1, 8], strides = [1, 1]} : vector<10x8xf32> to vector<1x8xf32>
      %720 = vector.broadcast %718 : vector<10x1xf32> to vector<10x8xf32>
      %721 = vector.broadcast %719 : vector<1x8xf32> to vector<10x8xf32>
      %722 = arith.mulf %720, %721 : vector<10x8xf32>
      %723 = arith.addf %717, %722 : vector<10x8xf32>
      %724 = vector.extract_strided_slice %1 {offsets = [0, 5], sizes = [10, 1], strides = [1, 1]} : vector<10x10xf32> to vector<10x1xf32>
      %725 = vector.extract_strided_slice %694 {offsets = [5, 0], sizes = [1, 8], strides = [1, 1]} : vector<10x8xf32> to vector<1x8xf32>
      %726 = vector.broadcast %724 : vector<10x1xf32> to vector<10x8xf32>
      %727 = vector.broadcast %725 : vector<1x8xf32> to vector<10x8xf32>
      %728 = arith.mulf %726, %727 : vector<10x8xf32>
      %729 = arith.addf %723, %728 : vector<10x8xf32>
      %730 = vector.extract_strided_slice %1 {offsets = [0, 6], sizes = [10, 1], strides = [1, 1]} : vector<10x10xf32> to vector<10x1xf32>
      %731 = vector.extract_strided_slice %694 {offsets = [6, 0], sizes = [1, 8], strides = [1, 1]} : vector<10x8xf32> to vector<1x8xf32>
      %732 = vector.broadcast %730 : vector<10x1xf32> to vector<10x8xf32>
      %733 = vector.broadcast %731 : vector<1x8xf32> to vector<10x8xf32>
      %734 = arith.mulf %732, %733 : vector<10x8xf32>
      %735 = arith.addf %729, %734 : vector<10x8xf32>
      %736 = vector.extract_strided_slice %1 {offsets = [0, 7], sizes = [10, 1], strides = [1, 1]} : vector<10x10xf32> to vector<10x1xf32>
      %737 = vector.extract_strided_slice %694 {offsets = [7, 0], sizes = [1, 8], strides = [1, 1]} : vector<10x8xf32> to vector<1x8xf32>
      %738 = vector.broadcast %736 : vector<10x1xf32> to vector<10x8xf32>
      %739 = vector.broadcast %737 : vector<1x8xf32> to vector<10x8xf32>
      %740 = arith.mulf %738, %739 : vector<10x8xf32>
      %741 = arith.addf %735, %740 : vector<10x8xf32>
      %742 = vector.extract_strided_slice %1 {offsets = [0, 8], sizes = [10, 1], strides = [1, 1]} : vector<10x10xf32> to vector<10x1xf32>
      %743 = vector.extract_strided_slice %694 {offsets = [8, 0], sizes = [1, 8], strides = [1, 1]} : vector<10x8xf32> to vector<1x8xf32>
      %744 = vector.broadcast %742 : vector<10x1xf32> to vector<10x8xf32>
      %745 = vector.broadcast %743 : vector<1x8xf32> to vector<10x8xf32>
      %746 = arith.mulf %744, %745 : vector<10x8xf32>
      %747 = arith.addf %741, %746 : vector<10x8xf32>
      %748 = vector.extract_strided_slice %1 {offsets = [0, 9], sizes = [10, 1], strides = [1, 1]} : vector<10x10xf32> to vector<10x1xf32>
      %749 = vector.extract_strided_slice %694 {offsets = [9, 0], sizes = [1, 8], strides = [1, 1]} : vector<10x8xf32> to vector<1x8xf32>
      %750 = vector.broadcast %748 : vector<10x1xf32> to vector<10x8xf32>
      %751 = vector.broadcast %749 : vector<1x8xf32> to vector<10x8xf32>
      %752 = arith.mulf %750, %751 : vector<10x8xf32>
      %753 = arith.addf %747, %752 : vector<10x8xf32>
      %754 = math.log %753 : vector<10x8xf32>
      %755 = vector.broadcast %691 : vector<1x8xf32> to vector<10x8xf32>
      %756 = arith.addf %755, %754 : vector<10x8xf32>
      %757 = arith.subf %43, %756 : vector<10x8xf32>
      %758 = arith.subf %617, %689 : vector<10x8xf32>
      %759 = math.absf %758 : vector<10x8xf32>
      %cst_73 = arith.constant 0.000000e+00 : f32
      %760 = vector.shape_cast %10 : vector<1x8xi1> to vector<1x8xi1>
      %761 = vector.broadcast %760 : vector<1x8xi1> to vector<10x8xi1>
      %762 = vector.broadcast %cst_73 : f32 to vector<10x8xf32>
      %763 = arith.select %761, %759, %762 : vector<10x8xi1>, vector<10x8xf32>
      %764 = vector.shape_cast %763 : vector<10x8xf32> to vector<1x10x8xf32>
      %cst_74 = arith.constant dense<0xFF800000> : vector<1xf32>
      %765 = vector.multi_reduction <maximumf>, %764, %cst_74 [1, 2] : vector<1x10x8xf32> to vector<1xf32>
      %766 = vector.shape_cast %765 : vector<1xf32> to vector<1x1x1xf32>
      %767 = vector.extract %766[0, 0, 0] : f32 from vector<1x1x1xf32>
      %768 = arith.subf %618, %757 : vector<10x8xf32>
      %769 = math.absf %768 : vector<10x8xf32>
      %cst_75 = arith.constant 0.000000e+00 : f32
      %770 = vector.shape_cast %10 : vector<1x8xi1> to vector<1x8xi1>
      %771 = vector.broadcast %770 : vector<1x8xi1> to vector<10x8xi1>
      %772 = vector.broadcast %cst_75 : f32 to vector<10x8xf32>
      %773 = arith.select %771, %769, %772 : vector<10x8xi1>, vector<10x8xf32>
      %774 = vector.shape_cast %773 : vector<10x8xf32> to vector<1x10x8xf32>
      %cst_76 = arith.constant dense<0xFF800000> : vector<1xf32>
      %775 = vector.multi_reduction <maximumf>, %774, %cst_76 [1, 2] : vector<1x10x8xf32> to vector<1xf32>
      %776 = vector.shape_cast %775 : vector<1xf32> to vector<1x1x1xf32>
      %777 = vector.extract %776[0, 0, 0] : f32 from vector<1x1x1xf32>
      %cst_77 = arith.constant 9.99999974E-5 : f32
      %778 = arith.cmpf olt, %767, %cst_77 : f32
      %cst_78 = arith.constant 9.99999974E-5 : f32
      %779 = arith.cmpf olt, %777, %cst_78 : f32
      %780 = arith.andi %778, %779 : i1
      %781 = arith.andi %780, %621 : i1
      %c0_i32_79 = arith.constant 0 : i32
      %782 = arith.cmpi eq, %616, %c0_i32_79 : i32
      %783 = arith.andi %782, %781 : i1
      %784 = arith.select %783, %617, %613 : vector<10x8xf32>
      %785 = arith.select %783, %618, %614 : vector<10x8xf32>
      %786 = arith.extui %781 : i1 to i32
      %787 = arith.maxsi %616, %786 : i32
      %788 = arith.select %621, %689, %617 : vector<10x8xf32>
      %789 = arith.select %621, %757, %618 : vector<10x8xf32>
      %790 = arith.extui %621 : i1 to i32
      %791 = arith.addi %620, %790 : i32
      %c4_i32 = arith.constant 4 : i32
      %c100_i32_80 = arith.constant 100 : i32
      %792 = arith.cmpi slt, %791, %c100_i32_80 : i32
      %cst_81 = arith.constant dense<0xFF800000> : vector<8xf32>
      %793 = vector.multi_reduction <maximumf>, %789, %cst_81 [0] : vector<10x8xf32> to vector<8xf32>
      %794 = vector.shape_cast %793 : vector<8xf32> to vector<1x8xf32>
      %795 = vector.broadcast %794 : vector<1x8xf32> to vector<10x8xf32>
      %796 = arith.subf %789, %795 : vector<10x8xf32>
      %797 = math.exp %796 : vector<10x8xf32>
      %798 = vector.extract_strided_slice %1 {offsets = [0, 0], sizes = [10, 1], strides = [1, 1]} : vector<10x10xf32> to vector<10x1xf32>
      %799 = vector.extract_strided_slice %797 {offsets = [0, 0], sizes = [1, 8], strides = [1, 1]} : vector<10x8xf32> to vector<1x8xf32>
      %800 = vector.broadcast %798 : vector<10x1xf32> to vector<10x8xf32>
      %801 = vector.broadcast %799 : vector<1x8xf32> to vector<10x8xf32>
      %802 = arith.mulf %800, %801 : vector<10x8xf32>
      %803 = vector.extract_strided_slice %1 {offsets = [0, 1], sizes = [10, 1], strides = [1, 1]} : vector<10x10xf32> to vector<10x1xf32>
      %804 = vector.extract_strided_slice %797 {offsets = [1, 0], sizes = [1, 8], strides = [1, 1]} : vector<10x8xf32> to vector<1x8xf32>
      %805 = vector.broadcast %803 : vector<10x1xf32> to vector<10x8xf32>
      %806 = vector.broadcast %804 : vector<1x8xf32> to vector<10x8xf32>
      %807 = arith.mulf %805, %806 : vector<10x8xf32>
      %808 = arith.addf %802, %807 : vector<10x8xf32>
      %809 = vector.extract_strided_slice %1 {offsets = [0, 2], sizes = [10, 1], strides = [1, 1]} : vector<10x10xf32> to vector<10x1xf32>
      %810 = vector.extract_strided_slice %797 {offsets = [2, 0], sizes = [1, 8], strides = [1, 1]} : vector<10x8xf32> to vector<1x8xf32>
      %811 = vector.broadcast %809 : vector<10x1xf32> to vector<10x8xf32>
      %812 = vector.broadcast %810 : vector<1x8xf32> to vector<10x8xf32>
      %813 = arith.mulf %811, %812 : vector<10x8xf32>
      %814 = arith.addf %808, %813 : vector<10x8xf32>
      %815 = vector.extract_strided_slice %1 {offsets = [0, 3], sizes = [10, 1], strides = [1, 1]} : vector<10x10xf32> to vector<10x1xf32>
      %816 = vector.extract_strided_slice %797 {offsets = [3, 0], sizes = [1, 8], strides = [1, 1]} : vector<10x8xf32> to vector<1x8xf32>
      %817 = vector.broadcast %815 : vector<10x1xf32> to vector<10x8xf32>
      %818 = vector.broadcast %816 : vector<1x8xf32> to vector<10x8xf32>
      %819 = arith.mulf %817, %818 : vector<10x8xf32>
      %820 = arith.addf %814, %819 : vector<10x8xf32>
      %821 = vector.extract_strided_slice %1 {offsets = [0, 4], sizes = [10, 1], strides = [1, 1]} : vector<10x10xf32> to vector<10x1xf32>
      %822 = vector.extract_strided_slice %797 {offsets = [4, 0], sizes = [1, 8], strides = [1, 1]} : vector<10x8xf32> to vector<1x8xf32>
      %823 = vector.broadcast %821 : vector<10x1xf32> to vector<10x8xf32>
      %824 = vector.broadcast %822 : vector<1x8xf32> to vector<10x8xf32>
      %825 = arith.mulf %823, %824 : vector<10x8xf32>
      %826 = arith.addf %820, %825 : vector<10x8xf32>
      %827 = vector.extract_strided_slice %1 {offsets = [0, 5], sizes = [10, 1], strides = [1, 1]} : vector<10x10xf32> to vector<10x1xf32>
      %828 = vector.extract_strided_slice %797 {offsets = [5, 0], sizes = [1, 8], strides = [1, 1]} : vector<10x8xf32> to vector<1x8xf32>
      %829 = vector.broadcast %827 : vector<10x1xf32> to vector<10x8xf32>
      %830 = vector.broadcast %828 : vector<1x8xf32> to vector<10x8xf32>
      %831 = arith.mulf %829, %830 : vector<10x8xf32>
      %832 = arith.addf %826, %831 : vector<10x8xf32>
      %833 = vector.extract_strided_slice %1 {offsets = [0, 6], sizes = [10, 1], strides = [1, 1]} : vector<10x10xf32> to vector<10x1xf32>
      %834 = vector.extract_strided_slice %797 {offsets = [6, 0], sizes = [1, 8], strides = [1, 1]} : vector<10x8xf32> to vector<1x8xf32>
      %835 = vector.broadcast %833 : vector<10x1xf32> to vector<10x8xf32>
      %836 = vector.broadcast %834 : vector<1x8xf32> to vector<10x8xf32>
      %837 = arith.mulf %835, %836 : vector<10x8xf32>
      %838 = arith.addf %832, %837 : vector<10x8xf32>
      %839 = vector.extract_strided_slice %1 {offsets = [0, 7], sizes = [10, 1], strides = [1, 1]} : vector<10x10xf32> to vector<10x1xf32>
      %840 = vector.extract_strided_slice %797 {offsets = [7, 0], sizes = [1, 8], strides = [1, 1]} : vector<10x8xf32> to vector<1x8xf32>
      %841 = vector.broadcast %839 : vector<10x1xf32> to vector<10x8xf32>
      %842 = vector.broadcast %840 : vector<1x8xf32> to vector<10x8xf32>
      %843 = arith.mulf %841, %842 : vector<10x8xf32>
      %844 = arith.addf %838, %843 : vector<10x8xf32>
      %845 = vector.extract_strided_slice %1 {offsets = [0, 8], sizes = [10, 1], strides = [1, 1]} : vector<10x10xf32> to vector<10x1xf32>
      %846 = vector.extract_strided_slice %797 {offsets = [8, 0], sizes = [1, 8], strides = [1, 1]} : vector<10x8xf32> to vector<1x8xf32>
      %847 = vector.broadcast %845 : vector<10x1xf32> to vector<10x8xf32>
      %848 = vector.broadcast %846 : vector<1x8xf32> to vector<10x8xf32>
      %849 = arith.mulf %847, %848 : vector<10x8xf32>
      %850 = arith.addf %844, %849 : vector<10x8xf32>
      %851 = vector.extract_strided_slice %1 {offsets = [0, 9], sizes = [10, 1], strides = [1, 1]} : vector<10x10xf32> to vector<10x1xf32>
      %852 = vector.extract_strided_slice %797 {offsets = [9, 0], sizes = [1, 8], strides = [1, 1]} : vector<10x8xf32> to vector<1x8xf32>
      %853 = vector.broadcast %851 : vector<10x1xf32> to vector<10x8xf32>
      %854 = vector.broadcast %852 : vector<1x8xf32> to vector<10x8xf32>
      %855 = arith.mulf %853, %854 : vector<10x8xf32>
      %856 = arith.addf %850, %855 : vector<10x8xf32>
      %857 = math.log %856 : vector<10x8xf32>
      %858 = vector.broadcast %794 : vector<1x8xf32> to vector<10x8xf32>
      %859 = arith.addf %858, %857 : vector<10x8xf32>
      %860 = arith.subf %40, %859 : vector<10x8xf32>
      %cst_82 = arith.constant dense<0xFF800000> : vector<8xf32>
      %861 = vector.multi_reduction <maximumf>, %860, %cst_82 [0] : vector<10x8xf32> to vector<8xf32>
      %862 = vector.shape_cast %861 : vector<8xf32> to vector<1x8xf32>
      %863 = vector.broadcast %862 : vector<1x8xf32> to vector<10x8xf32>
      %864 = arith.subf %860, %863 : vector<10x8xf32>
      %865 = math.exp %864 : vector<10x8xf32>
      %866 = vector.extract_strided_slice %1 {offsets = [0, 0], sizes = [10, 1], strides = [1, 1]} : vector<10x10xf32> to vector<10x1xf32>
      %867 = vector.extract_strided_slice %865 {offsets = [0, 0], sizes = [1, 8], strides = [1, 1]} : vector<10x8xf32> to vector<1x8xf32>
      %868 = vector.broadcast %866 : vector<10x1xf32> to vector<10x8xf32>
      %869 = vector.broadcast %867 : vector<1x8xf32> to vector<10x8xf32>
      %870 = arith.mulf %868, %869 : vector<10x8xf32>
      %871 = vector.extract_strided_slice %1 {offsets = [0, 1], sizes = [10, 1], strides = [1, 1]} : vector<10x10xf32> to vector<10x1xf32>
      %872 = vector.extract_strided_slice %865 {offsets = [1, 0], sizes = [1, 8], strides = [1, 1]} : vector<10x8xf32> to vector<1x8xf32>
      %873 = vector.broadcast %871 : vector<10x1xf32> to vector<10x8xf32>
      %874 = vector.broadcast %872 : vector<1x8xf32> to vector<10x8xf32>
      %875 = arith.mulf %873, %874 : vector<10x8xf32>
      %876 = arith.addf %870, %875 : vector<10x8xf32>
      %877 = vector.extract_strided_slice %1 {offsets = [0, 2], sizes = [10, 1], strides = [1, 1]} : vector<10x10xf32> to vector<10x1xf32>
      %878 = vector.extract_strided_slice %865 {offsets = [2, 0], sizes = [1, 8], strides = [1, 1]} : vector<10x8xf32> to vector<1x8xf32>
      %879 = vector.broadcast %877 : vector<10x1xf32> to vector<10x8xf32>
      %880 = vector.broadcast %878 : vector<1x8xf32> to vector<10x8xf32>
      %881 = arith.mulf %879, %880 : vector<10x8xf32>
      %882 = arith.addf %876, %881 : vector<10x8xf32>
      %883 = vector.extract_strided_slice %1 {offsets = [0, 3], sizes = [10, 1], strides = [1, 1]} : vector<10x10xf32> to vector<10x1xf32>
      %884 = vector.extract_strided_slice %865 {offsets = [3, 0], sizes = [1, 8], strides = [1, 1]} : vector<10x8xf32> to vector<1x8xf32>
      %885 = vector.broadcast %883 : vector<10x1xf32> to vector<10x8xf32>
      %886 = vector.broadcast %884 : vector<1x8xf32> to vector<10x8xf32>
      %887 = arith.mulf %885, %886 : vector<10x8xf32>
      %888 = arith.addf %882, %887 : vector<10x8xf32>
      %889 = vector.extract_strided_slice %1 {offsets = [0, 4], sizes = [10, 1], strides = [1, 1]} : vector<10x10xf32> to vector<10x1xf32>
      %890 = vector.extract_strided_slice %865 {offsets = [4, 0], sizes = [1, 8], strides = [1, 1]} : vector<10x8xf32> to vector<1x8xf32>
      %891 = vector.broadcast %889 : vector<10x1xf32> to vector<10x8xf32>
      %892 = vector.broadcast %890 : vector<1x8xf32> to vector<10x8xf32>
      %893 = arith.mulf %891, %892 : vector<10x8xf32>
      %894 = arith.addf %888, %893 : vector<10x8xf32>
      %895 = vector.extract_strided_slice %1 {offsets = [0, 5], sizes = [10, 1], strides = [1, 1]} : vector<10x10xf32> to vector<10x1xf32>
      %896 = vector.extract_strided_slice %865 {offsets = [5, 0], sizes = [1, 8], strides = [1, 1]} : vector<10x8xf32> to vector<1x8xf32>
      %897 = vector.broadcast %895 : vector<10x1xf32> to vector<10x8xf32>
      %898 = vector.broadcast %896 : vector<1x8xf32> to vector<10x8xf32>
      %899 = arith.mulf %897, %898 : vector<10x8xf32>
      %900 = arith.addf %894, %899 : vector<10x8xf32>
      %901 = vector.extract_strided_slice %1 {offsets = [0, 6], sizes = [10, 1], strides = [1, 1]} : vector<10x10xf32> to vector<10x1xf32>
      %902 = vector.extract_strided_slice %865 {offsets = [6, 0], sizes = [1, 8], strides = [1, 1]} : vector<10x8xf32> to vector<1x8xf32>
      %903 = vector.broadcast %901 : vector<10x1xf32> to vector<10x8xf32>
      %904 = vector.broadcast %902 : vector<1x8xf32> to vector<10x8xf32>
      %905 = arith.mulf %903, %904 : vector<10x8xf32>
      %906 = arith.addf %900, %905 : vector<10x8xf32>
      %907 = vector.extract_strided_slice %1 {offsets = [0, 7], sizes = [10, 1], strides = [1, 1]} : vector<10x10xf32> to vector<10x1xf32>
      %908 = vector.extract_strided_slice %865 {offsets = [7, 0], sizes = [1, 8], strides = [1, 1]} : vector<10x8xf32> to vector<1x8xf32>
      %909 = vector.broadcast %907 : vector<10x1xf32> to vector<10x8xf32>
      %910 = vector.broadcast %908 : vector<1x8xf32> to vector<10x8xf32>
      %911 = arith.mulf %909, %910 : vector<10x8xf32>
      %912 = arith.addf %906, %911 : vector<10x8xf32>
      %913 = vector.extract_strided_slice %1 {offsets = [0, 8], sizes = [10, 1], strides = [1, 1]} : vector<10x10xf32> to vector<10x1xf32>
      %914 = vector.extract_strided_slice %865 {offsets = [8, 0], sizes = [1, 8], strides = [1, 1]} : vector<10x8xf32> to vector<1x8xf32>
      %915 = vector.broadcast %913 : vector<10x1xf32> to vector<10x8xf32>
      %916 = vector.broadcast %914 : vector<1x8xf32> to vector<10x8xf32>
      %917 = arith.mulf %915, %916 : vector<10x8xf32>
      %918 = arith.addf %912, %917 : vector<10x8xf32>
      %919 = vector.extract_strided_slice %1 {offsets = [0, 9], sizes = [10, 1], strides = [1, 1]} : vector<10x10xf32> to vector<10x1xf32>
      %920 = vector.extract_strided_slice %865 {offsets = [9, 0], sizes = [1, 8], strides = [1, 1]} : vector<10x8xf32> to vector<1x8xf32>
      %921 = vector.broadcast %919 : vector<10x1xf32> to vector<10x8xf32>
      %922 = vector.broadcast %920 : vector<1x8xf32> to vector<10x8xf32>
      %923 = arith.mulf %921, %922 : vector<10x8xf32>
      %924 = arith.addf %918, %923 : vector<10x8xf32>
      %925 = math.log %924 : vector<10x8xf32>
      %926 = vector.broadcast %862 : vector<1x8xf32> to vector<10x8xf32>
      %927 = arith.addf %926, %925 : vector<10x8xf32>
      %928 = arith.subf %43, %927 : vector<10x8xf32>
      %929 = arith.subf %788, %860 : vector<10x8xf32>
      %930 = math.absf %929 : vector<10x8xf32>
      %cst_83 = arith.constant 0.000000e+00 : f32
      %931 = vector.shape_cast %10 : vector<1x8xi1> to vector<1x8xi1>
      %932 = vector.broadcast %931 : vector<1x8xi1> to vector<10x8xi1>
      %933 = vector.broadcast %cst_83 : f32 to vector<10x8xf32>
      %934 = arith.select %932, %930, %933 : vector<10x8xi1>, vector<10x8xf32>
      %935 = vector.shape_cast %934 : vector<10x8xf32> to vector<1x10x8xf32>
      %cst_84 = arith.constant dense<0xFF800000> : vector<1xf32>
      %936 = vector.multi_reduction <maximumf>, %935, %cst_84 [1, 2] : vector<1x10x8xf32> to vector<1xf32>
      %937 = vector.shape_cast %936 : vector<1xf32> to vector<1x1x1xf32>
      %938 = vector.extract %937[0, 0, 0] : f32 from vector<1x1x1xf32>
      %939 = arith.subf %789, %928 : vector<10x8xf32>
      %940 = math.absf %939 : vector<10x8xf32>
      %cst_85 = arith.constant 0.000000e+00 : f32
      %941 = vector.shape_cast %10 : vector<1x8xi1> to vector<1x8xi1>
      %942 = vector.broadcast %941 : vector<1x8xi1> to vector<10x8xi1>
      %943 = vector.broadcast %cst_85 : f32 to vector<10x8xf32>
      %944 = arith.select %942, %940, %943 : vector<10x8xi1>, vector<10x8xf32>
      %945 = vector.shape_cast %944 : vector<10x8xf32> to vector<1x10x8xf32>
      %cst_86 = arith.constant dense<0xFF800000> : vector<1xf32>
      %946 = vector.multi_reduction <maximumf>, %945, %cst_86 [1, 2] : vector<1x10x8xf32> to vector<1xf32>
      %947 = vector.shape_cast %946 : vector<1xf32> to vector<1x1x1xf32>
      %948 = vector.extract %947[0, 0, 0] : f32 from vector<1x1x1xf32>
      %cst_87 = arith.constant 9.99999974E-5 : f32
      %949 = arith.cmpf olt, %938, %cst_87 : f32
      %cst_88 = arith.constant 9.99999974E-5 : f32
      %950 = arith.cmpf olt, %948, %cst_88 : f32
      %951 = arith.andi %949, %950 : i1
      %952 = arith.andi %951, %792 : i1
      %c0_i32_89 = arith.constant 0 : i32
      %953 = arith.cmpi eq, %787, %c0_i32_89 : i32
      %954 = arith.andi %953, %952 : i1
      %955 = arith.select %954, %788, %784 : vector<10x8xf32>
      %956 = arith.select %954, %789, %785 : vector<10x8xf32>
      %957 = arith.extui %952 : i1 to i32
      %958 = arith.maxsi %787, %957 : i32
      %959 = arith.select %792, %860, %788 : vector<10x8xf32>
      %960 = arith.select %792, %928, %789 : vector<10x8xf32>
      %961 = arith.extui %792 : i1 to i32
      %962 = arith.addi %791, %961 : i32
      %c5_i32 = arith.constant 5 : i32
      scf.yield %962, %959, %960, %955, %956, %958 : i32, vector<10x8xf32>, vector<10x8xf32>, vector<10x8xf32>, vector<10x8xf32>, i32
    }
    %c0_i32_21 = arith.constant 0 : i32
    %46 = arith.cmpi sgt, %45#5, %c0_i32_21 : i32
    %47 = arith.select %46, %45#3, %45#1 : vector<10x8xf32>
    %c0_i32_22 = arith.constant 0 : i32
    %48 = arith.cmpi sgt, %45#5, %c0_i32_22 : i32
    %49 = arith.select %48, %45#4, %45#2 : vector<10x8xf32>
    %50 = vector.shape_cast %47 : vector<10x8xf32> to vector<10x1x8xf32>
    %51 = vector.shape_cast %2 : vector<10x10xf32> to vector<10x10x1xf32>
    %52 = vector.broadcast %50 : vector<10x1x8xf32> to vector<10x10x8xf32>
    %53 = vector.broadcast %51 : vector<10x10x1xf32> to vector<10x10x8xf32>
    %54 = arith.addf %52, %53 : vector<10x10x8xf32>
    %55 = vector.shape_cast %49 : vector<10x8xf32> to vector<1x10x8xf32>
    %56 = vector.broadcast %55 : vector<1x10x8xf32> to vector<10x10x8xf32>
    %57 = arith.addf %54, %56 : vector<10x10x8xf32>
    %58 = math.exp %57 : vector<10x10x8xf32>
    %cst_23 = arith.constant 9.99999997E-7 : f32
    %59 = vector.broadcast %cst_23 : f32 to vector<10x10x8xf32>
    %60 = arith.addf %58, %59 : vector<10x10x8xf32>
    %cst_24 = arith.constant dense<0.000000e+00> : vector<10x8xf32>
    %61 = vector.multi_reduction <add>, %60, %cst_24 [1] : vector<10x10x8xf32> to vector<10x8xf32>
    %62 = arith.divf %25, %61 : vector<10x8xf32>
    %63 = vector.shape_cast %62 : vector<10x8xf32> to vector<10x1x8xf32>
    %64 = vector.broadcast %63 : vector<10x1x8xf32> to vector<10x10x8xf32>
    %65 = arith.mulf %60, %64 : vector<10x10x8xf32>
    %cst_25 = arith.constant dense<0.000000e+00> : vector<10x8xf32>
    %66 = vector.multi_reduction <add>, %65, %cst_25 [0] : vector<10x10x8xf32> to vector<10x8xf32>
    %67 = arith.divf %37, %66 : vector<10x8xf32>
    %68 = vector.shape_cast %0 : vector<10x10xf32> to vector<10x10x1xf32>
    %69 = vector.broadcast %68 : vector<10x10x1xf32> to vector<10x10x8xf32>
    %70 = arith.mulf %65, %69 : vector<10x10x8xf32>
    %cst_26 = arith.constant dense<0.000000e+00> : vector<10x8xf32>
    %71 = vector.multi_reduction <add>, %70, %cst_26 [0] : vector<10x10x8xf32> to vector<10x8xf32>
    %72 = arith.mulf %67, %71 : vector<10x8xf32>
    %cst_27 = arith.constant dense<0.000000e+00> : vector<8xf32>
    %73 = vector.multi_reduction <add>, %72, %cst_27 [0] : vector<10x8xf32> to vector<8xf32>
    %74 = vector.shape_cast %73 : vector<8xf32> to vector<1x8xf32>
    %cst_28 = arith.constant dense<0xFF800000> : vector<8xf32>
    %75 = vector.multi_reduction <maximumf>, %25, %cst_28 [0] : vector<10x8xf32> to vector<8xf32>
    %76 = vector.shape_cast %75 : vector<8xf32> to vector<1x8xf32>
    %cst_29 = arith.constant dense<0xFF800000> : vector<8xf32>
    %77 = vector.multi_reduction <maximumf>, %37, %cst_29 [0] : vector<10x8xf32> to vector<8xf32>
    %78 = vector.shape_cast %77 : vector<8xf32> to vector<1x8xf32>
    %79 = vector.broadcast %76 : vector<1x8xf32> to vector<10x8xf32>
    %80 = arith.cmpf oeq, %25, %79 : vector<10x8xf32>
    %c10_i32 = arith.constant 10 : i32
    %81 = vector.broadcast %c10_i32 : i32 to vector<10x8xi32>
    %82 = arith.select %80, %26, %81 : vector<10x8xi1>, vector<10x8xi32>
    %cst_30 = arith.constant dense<2147483647> : vector<8xi32>
    %83 = vector.multi_reduction <minsi>, %82, %cst_30 [0] : vector<10x8xi32> to vector<8xi32>
    %84 = vector.shape_cast %83 : vector<8xi32> to vector<1x8xi32>
    %85 = vector.broadcast %78 : vector<1x8xf32> to vector<10x8xf32>
    %86 = arith.cmpf oeq, %37, %85 : vector<10x8xf32>
    %c10_i32_31 = arith.constant 10 : i32
    %87 = vector.broadcast %c10_i32_31 : i32 to vector<10x8xi32>
    %88 = arith.select %86, %26, %87 : vector<10x8xi1>, vector<10x8xi32>
    %cst_32 = arith.constant dense<2147483647> : vector<8xi32>
    %89 = vector.multi_reduction <minsi>, %88, %cst_32 [0] : vector<10x8xi32> to vector<8xi32>
    %90 = vector.shape_cast %89 : vector<8xi32> to vector<1x8xi32>
    %91 = arith.subi %84, %90 : vector<1x8xi32>
    %92 = arith.sitofp %91 : vector<1x8xi32> to vector<1x8xf32>
    %93 = arith.mulf %92, %92 : vector<1x8xf32>
    %cst_33 = arith.constant 0.0123456791 : f32
    %94 = vector.broadcast %cst_33 : f32 to vector<1x8xf32>
    %95 = arith.mulf %93, %94 : vector<1x8xf32>
    %96 = arith.cmpf one, %74, %74 : vector<1x8xf32>
    %97 = arith.andi %96, %10 : vector<1x8xi1>
    %cst_34 = arith.constant 1.000000e+00 : f32
    %cst_35 = arith.constant 0.000000e+00 : f32
    %98 = vector.broadcast %cst_34 : f32 to vector<1x8xf32>
    %99 = vector.broadcast %cst_35 : f32 to vector<1x8xf32>
    %100 = arith.select %97, %98, %99 : vector<1x8xi1>, vector<1x8xf32>
    %101 = vector.shape_cast %100 : vector<1x8xf32> to vector<1x1x8xf32>
    %cst_36 = arith.constant dense<0xFF800000> : vector<1xf32>
    %102 = vector.multi_reduction <maximumf>, %101, %cst_36 [1, 2] : vector<1x1x8xf32> to vector<1xf32>
    %103 = vector.shape_cast %102 : vector<1xf32> to vector<1x1x1xf32>
    %104 = vector.extract %103[0, 0, 0] : f32 from vector<1x1x1xf32>
    %cst_37 = arith.constant 0.000000e+00 : f32
    %105 = arith.cmpf ogt, %104, %cst_37 : f32
    %106 = arith.select %105, %95, %74 : vector<1x8xf32>
    %c0_38 = arith.constant 0 : index
    %c0_39 = arith.constant 0 : index
    %107 = vector.load %arg6[%c0_38, %c0_39] : memref<1x8xf32, #tpu.memory_space<vmem>>, vector<1x8xf32>
    tpu.vector_store %arg6[%c0_38, %c0_39], %106 {strides = array<i32>} : memref<1x8xf32, #tpu.memory_space<vmem>>, vector<1x8xf32>,
    return
  }
  func.func @transform_0(%arg0: i32) -> (i32, i32) {
    %c0_i32 = arith.constant 0 : i32
    %c0_i32_0 = arith.constant 0 : i32
    %c0_i32_1 = arith.constant 0 : i32
    return %c0_i32, %c0_i32_0 : i32, i32
  }
  func.func @transform_1(%arg0: i32) -> (i32, i32) {
    %c0_i32 = arith.constant 0 : i32
    %c0_i32_0 = arith.constant 0 : i32
    %c0_i32_1 = arith.constant 0 : i32
    return %c0_i32, %c0_i32_0 : i32, i32
  }
  func.func @transform_2(%arg0: i32) -> (i32, i32) {
    %c0_i32 = arith.constant 0 : i32
    %c0_i32_0 = arith.constant 0 : i32
    %c0_i32_1 = arith.constant 0 : i32
    return %c0_i32, %c0_i32_0 : i32, i32
  }
  func.func @transform_3(%arg0: i32) -> (i32, i32) {
    %c0_i32 = arith.constant 0 : i32
    %c0_i32_0 = arith.constant 0 : i32
    return %c0_i32, %arg0 : i32, i32
  }
  func.func @transform_4(%arg0: i32) -> (i32, i32) {
    %c0_i32 = arith.constant 0 : i32
    %c0_i32_0 = arith.constant 0 : i32
    return %c0_i32, %arg0 : i32, i32
  }
  func.func @transform_5(%arg0: i32) -> (i32, i32) {
    %c0_i32 = arith.constant 0 : i32
    %c0_i32_0 = arith.constant 0 : i32
    return %c0_i32, %arg0 : i32, i32
  }
}

</mosaic_0001>

<llo_original>
// kernel: sinkhorn_distance.1
$region0: #{sinkhorn_distance.1}
  #allocation0 [shape = 'u32[]', space=smem, size = 0x4, offset = 0x4, fixed_abs, tag = 'smem constant byte address 0x4 - core index']
  #allocation1 [shape = 'u32[144,128]{1,0:T(1,128)}', space=vmem, size = 0x12000, scoped, tag = 'internal scratch']
  %s0 = inlined_call_operand.vmem [shape: f32[10,10], index: 0, kind: input, shape index: {}]
  %s1 = inlined_call_operand.vmem [shape: f32[10,10], index: 1, kind: input, shape index: {}]
  %s2 = inlined_call_operand.vmem [shape: f32[10,10], index: 2, kind: input, shape index: {}]
  %s3 = inlined_call_operand.vmem [shape: f32[10,8], index: 3, kind: input, shape index: {}]
  %s4 = inlined_call_operand.vmem [shape: s32[1,8], index: 4, kind: input, shape index: {}]
  %s5 = inlined_call_operand.vmem [shape: f32[1,8], index: 5, kind: output, shape index: {}]
  %s6 = sld [smem:[#allocation0]]
  $region37: #{sinkhorn_distance.1} parent=0
    _
  %s8 = ssub.s32 1, %s6
  %s9 = scalar_select 0, %s8, %s6
  // Predicated region
  $region2: #{sinkhorn_distance.1} parent=0 // pred_check
    _
  $region3: #{sinkhorn_distance.1} parent=0 // pred_check_branch
    %11 = sbr.rel (0) target = $region5
  $region4: #{sinkhorn_distance.1} parent=0 // pred_region
    _
  $region5: #{sinkhorn_distance.1} parent=0 // pred_fallthru
    _
  // Predicated region
  $region6: #{sinkhorn_distance.1} parent=0 // pred_check
    _
  $region7: #{sinkhorn_distance.1} parent=0 // pred_check_branch
    %13 = sbr.rel (0) target = $region9
  $region8: #{sinkhorn_distance.1} parent=0 // pred_region
    _
  $region9: #{sinkhorn_distance.1} parent=0 // pred_fallthru
    _
  // Predicated region
  $region10: #{sinkhorn_distance.1} parent=0 // pred_check
    _
  $region11: #{sinkhorn_distance.1} parent=0 // pred_check_branch
    %15 = sbr.rel (0) target = $region13
  $region12: #{sinkhorn_distance.1} parent=0 // pred_region
    _
  $region13: #{sinkhorn_distance.1} parent=0 // pred_fallthru
    _
  // Predicated region
  $region14: #{sinkhorn_distance.1} parent=0 // pred_check
    _
  $region15: #{sinkhorn_distance.1} parent=0 // pred_check_branch
    %17 = sbr.rel (0) target = $region17
  $region16: #{sinkhorn_distance.1} parent=0 // pred_region
    _
  $region17: #{sinkhorn_distance.1} parent=0 // pred_fallthru
    _
  // Predicated region
  $region18: #{sinkhorn_distance.1} parent=0 // pred_check
    _
  $region19: #{sinkhorn_distance.1} parent=0 // pred_check_branch
    %19 = sbr.rel (0) target = $region21
  $region20: #{sinkhorn_distance.1} parent=0 // pred_region
    _
  $region21: #{sinkhorn_distance.1} parent=0 // pred_fallthru
    _
  %v20 = vld [vmem:[%s0] sm:$0xff]
  %v21 = vld [vmem:[%s0 + $0x8] sm:$0x3]
  %v22 = vld [vmem:[%s1] sm:$0xff]
  %v23 = vld [vmem:[%s1 + $0x8] sm:$0x3]
  %v24 = vld [vmem:[%s2] sm:$0xff]
  %v25 = vld [vmem:[%s2 + $0x8] sm:$0x3]
  %v26 = vld [vmem:[%s3] sm:$0xff]
  %v27 = vld [vmem:[%s3 + $0x8] sm:$0x3]
  %v28 = vld [vmem:[%s4] sm:$0x1]
  %v29 = vlaneseq
  %v30 = vand.u32 %v29, 127
  %s31 = smul.u32 0, 8
  %v32 = vstv %s31
  %v33 = vadd.s32 %v32, %v30
  %vm34 = vcmp.lt.s32.totalorder %v33, 8
  %vm35 = vcmask 64512
  %v36 = vsel %vm35, %v26, -inf
  %vm37 = vcmask 58368
  %v38 = vsel %vm37, %v27, -inf
  %v39 = vmax.f32 %v36, %v38
  %v40 = vrot.slane %v39, 4
  %v41 = vmax.f32 %v39, %v40
  %v42 = vrot.slane %v41, 2
  %v43 = vmax.f32 %v41, %v42
  %v44 = vrot.slane %v43, 1
  %v45 = vmax.f32 %v43, %v44
  %v46 = vsub.f32 %v26, %v45
  %v47 = vsub.f32 %v27, %v45
  %v48 = vmul.f32 %v46, 1.442695
  %v49 = vpow.pop %v48
  %v50 = vmul.f32 %v47, 1.442695
  %v51 = vpow.pop %v50
  %v52 = vsel %vm35, %v49, 0.0
  %v53 = vsel %vm37, %v51, 0.0
  %v54 = vadd.f32 %v52, %v53
  %v55 = vrot.slane %v54, 4
  %v56 = vadd.f32 %v54, %v55
  %v57 = vrot.slane %v56, 2
  %v58 = vadd.f32 %v56, %v57
  %v59 = vrot.slane %v58, 1
  %v60 = vadd.f32 %v58, %v59
  %v61 = vrcp.pop %v60
  %v62 = vmul.f32 %v49, %v61
  %v63 = vmul.f32 %v51, %v61
  %v64 = vadd.f32 %v62, 1e-06
  %v65 = vadd.f32 %v63, 1e-06
  %v66 = vsel %vm35, %v64, 0.0
  %v67 = vsel %vm37, %v65, 0.0
  %v68 = vadd.f32 %v66, %v67
  %v69 = vrot.slane %v68, 4
  %v70 = vadd.f32 %v68, %v69
  %v71 = vrot.slane %v70, 2
  %v72 = vadd.f32 %v70, %v71
  %v73 = vrot.slane %v72, 1
  %v74 = vadd.f32 %v72, %v73
  %v75 = vrcp.pop %v74
  %v76 = vmul.f32 %v64, %v75
  %v77 = vmul.f32 %v65, %v75
  %v78 = vlaneseq
  %v79 = vshrl.u32 %v78, 7
  %v80 = vadd.s32 %v79, 8
  %v81 = vlaneseq
  %v82 = vshrl.u32 %v81, 7
  %v83 = vsub.s32 0, %v82
  %v84 = vrot.slane %v28, %v83
  %vm85 = vcmp.eq.s32.totalorder %v79, %v84
  %vm86 = vcmp.eq.s32.totalorder %v80, %v84
  %v87 = vsel %vm85, 1.0, 0.0
  %v88 = vsel %vm86, 1.0, 0.0
  %v89 = vadd.f32 %v87, 1e-06
  %v90 = vadd.f32 %v88, 1e-06
  %v91 = vsel %vm35, %v89, 0.0
  %v92 = vsel %vm37, %v90, 0.0
  %v93 = vadd.f32 %v91, %v92
  %v94 = vrot.slane %v93, 4
  %v95 = vadd.f32 %v93, %v94
  %v96 = vrot.slane %v95, 2
  %v97 = vadd.f32 %v95, %v96
  %v98 = vrot.slane %v97, 1
  %v99 = vadd.f32 %v97, %v98
  %v100 = vrcp.pop %v99
  %v101 = vmul.f32 %v89, %v100
  %v102 = vmul.f32 %v90, %v100
  %v103 = vadd.f32 %v76, 1e-06
  %v104 = vadd.f32 %v77, 1e-06
  %v105 = vlog2.pop %v103
  %v106 = vmul.f32 %v105, 0.6931472
  %v107 = vlog2.pop %v104
  %v108 = vmul.f32 %v107, 0.6931472
  %v109 = vadd.f32 %v101, 1e-06
  %v110 = vadd.f32 %v102, 1e-06
  %v111 = vlog2.pop %v109
  %v112 = vmul.f32 %v111, 0.6931472
  %v113 = vlog2.pop %v110
  %v114 = vmul.f32 %v113, 0.6931472
  // While loop
  $region22: #{sinkhorn_distance.1} parent=0 // loop_pre_header
    _
  $region23: #{sinkhorn_distance.1} parent=0 // loop_header
    %s116 = sphi 0, %s1545
    %v117 = vphi 0.0, %v1541
    %v118 = vphi 0.0, %v1542
    %v119 = vphi 0.0, %v1543
    %v120 = vphi 0.0, %v1544
    %v121 = vphi 0.0, %v1531
    %v122 = vphi 0.0, %v1532
    %v123 = vphi 0.0, %v1533
    %v124 = vphi 0.0, %v1534
    %s125 = sphi 0, %s1537
    %p126 = scmp.lt.s32.totalorder %s116, 100
    %p127 = scmp.eq.s32.totalorder %s125, 0
    %p128 = pnand %p126, %p127
    %p129 = pneg %p128
  $region24: #{sinkhorn_distance.1} parent=0 // loop_header_branch
    %131 = sbr.rel (%p128) target = $region28
  $region25: #{sinkhorn_distance.1} parent=0 // loop_body
    %p132 = scmp.lt.s32.totalorder %s116, 100
    %v133 = vsel %vm35, %v119, -inf
    %v134 = vsel %vm37, %v120, -inf
    %v135 = vmax.f32 %v133, %v134
    %v136 = vrot.slane %v135, 4
    %v137 = vmax.f32 %v135, %v136
    %v138 = vrot.slane %v137, 2
    %v139 = vmax.f32 %v137, %v138
    %v140 = vrot.slane %v139, 1
    %v141 = vmax.f32 %v139, %v140
    %v142 = vsub.f32 %v119, %v141
    %v143 = vsub.f32 %v120, %v141
    %v144 = vmul.f32 %v142, 1.442695
    %v145 = vpow.pop %v144
    %v146 = vmul.f32 %v143, 1.442695
    %v147 = vpow.pop %v146
    %149 = vset.pattern.permute.xlu0 0
    %150 = vperm.xlu0 %149, %v22
    %v151 = vpop.permute.xlu0 %150
    %154 = vset.pattern.permute.xlu0 0
    %155 = vperm.xlu0 %154, %v23
    %v156 = vpop.permute.xlu0 %155
    %v158 = vlaneseq
    %v159 = vshrl.u32 %v158, 7
    %v160 = vsub.s32 0, %v159
    %v161 = vrot.slane %v145, %v160
    %v162 = vmul.f32 %v151, %v161
    %v163 = vmul.f32 %v156, %v161
    %164 = vset.pattern.permute.xlu0 1
    %165 = vperm.xlu0 %164, %v22
    %v166 = vpop.permute.xlu0 %165
    %168 = vset.pattern.permute.xlu0 1
    %169 = vperm.xlu0 %168, %v23
    %v170 = vpop.permute.xlu0 %169
    %v172 = vlaneseq
    %v173 = vshrl.u32 %v172, 7
    %v174 = vsub.s32 1, %v173
    %v175 = vrot.slane %v145, %v174
    %v176 = vmul.f32 %v166, %v175
    %v177 = vmul.f32 %v170, %v175
    %v178 = vadd.f32 %v162, %v176
    %v179 = vadd.f32 %v163, %v177
    %180 = vset.pattern.permute.xlu0 2
    %181 = vperm.xlu0 %180, %v22
    %v182 = vpop.permute.xlu0 %181
    %184 = vset.pattern.permute.xlu0 2
    %185 = vperm.xlu0 %184, %v23
    %v186 = vpop.permute.xlu0 %185
    %v188 = vlaneseq
    %v189 = vshrl.u32 %v188, 7
    %v190 = vsub.s32 2, %v189
    %v191 = vrot.slane %v145, %v190
    %v192 = vmul.f32 %v182, %v191
    %v193 = vmul.f32 %v186, %v191
    %v194 = vadd.f32 %v178, %v192
    %v195 = vadd.f32 %v179, %v193
    %196 = vset.pattern.permute.xlu0 3
    %197 = vperm.xlu0 %196, %v22
    %v198 = vpop.permute.xlu0 %197
    %200 = vset.pattern.permute.xlu0 3
    %201 = vperm.xlu0 %200, %v23
    %v202 = vpop.permute.xlu0 %201
    %v204 = vlaneseq
    %v205 = vshrl.u32 %v204, 7
    %v206 = vsub.s32 3, %v205
    %v207 = vrot.slane %v145, %v206
    %v208 = vmul.f32 %v198, %v207
    %v209 = vmul.f32 %v202, %v207
    %v210 = vadd.f32 %v194, %v208
    %v211 = vadd.f32 %v195, %v209
    %212 = vset.pattern.permute.xlu0 4
    %213 = vperm.xlu0 %212, %v22
    %v214 = vpop.permute.xlu0 %213
    %216 = vset.pattern.permute.xlu0 4
    %217 = vperm.xlu0 %216, %v23
    %v218 = vpop.permute.xlu0 %217
    %v220 = vlaneseq
    %v221 = vshrl.u32 %v220, 7
    %v222 = vsub.s32 4, %v221
    %v223 = vrot.slane %v145, %v222
    %v224 = vmul.f32 %v214, %v223
    %v225 = vmul.f32 %v218, %v223
    %v226 = vadd.f32 %v210, %v224
    %v227 = vadd.f32 %v211, %v225
    %228 = vset.pattern.permute.xlu0 5
    %229 = vperm.xlu0 %228, %v22
    %v230 = vpop.permute.xlu0 %229
    %232 = vset.pattern.permute.xlu0 5
    %233 = vperm.xlu0 %232, %v23
    %v234 = vpop.permute.xlu0 %233
    %v236 = vlaneseq
    %v237 = vshrl.u32 %v236, 7
    %v238 = vsub.s32 5, %v237
    %v239 = vrot.slane %v145, %v238
    %v240 = vmul.f32 %v230, %v239
    %v241 = vmul.f32 %v234, %v239
    %v242 = vadd.f32 %v226, %v240
    %v243 = vadd.f32 %v227, %v241
    %244 = vset.pattern.permute.xlu0 6
    %245 = vperm.xlu0 %244, %v22
    %v246 = vpop.permute.xlu0 %245
    %248 = vset.pattern.permute.xlu0 6
    %249 = vperm.xlu0 %248, %v23
    %v250 = vpop.permute.xlu0 %249
    %v252 = vlaneseq
    %v253 = vshrl.u32 %v252, 7
    %v254 = vsub.s32 6, %v253
    %v255 = vrot.slane %v145, %v254
    %v256 = vmul.f32 %v246, %v255
    %v257 = vmul.f32 %v250, %v255
    %v258 = vadd.f32 %v242, %v256
    %v259 = vadd.f32 %v243, %v257
    %260 = vset.pattern.permute.xlu0 7
    %261 = vperm.xlu0 %260, %v22
    %v262 = vpop.permute.xlu0 %261
    %264 = vset.pattern.permute.xlu0 7
    %265 = vperm.xlu0 %264, %v23
    %v266 = vpop.permute.xlu0 %265
    %v268 = vlaneseq
    %v269 = vshrl.u32 %v268, 7
    %v270 = vsub.s32 7, %v269
    %v271 = vrot.slane %v145, %v270
    %v272 = vmul.f32 %v262, %v271
    %v273 = vmul.f32 %v266, %v271
    %v274 = vadd.f32 %v258, %v272
    %v275 = vadd.f32 %v259, %v273
    %276 = vset.pattern.permute.xlu0 8
    %277 = vperm.xlu0 %276, %v22
    %v278 = vpop.permute.xlu0 %277
    %280 = vset.pattern.permute.xlu0 8
    %281 = vperm.xlu0 %280, %v23
    %v282 = vpop.permute.xlu0 %281
    %v284 = vlaneseq
    %v285 = vshrl.u32 %v284, 7
    %v286 = vsub.s32 0, %v285
    %v287 = vrot.slane %v147, %v286
    %v288 = vmul.f32 %v278, %v287
    %v289 = vmul.f32 %v282, %v287
    %v290 = vadd.f32 %v274, %v288
    %v291 = vadd.f32 %v275, %v289
    %292 = vset.pattern.permute.xlu0 9
    %293 = vperm.xlu0 %292, %v22
    %v294 = vpop.permute.xlu0 %293
    %296 = vset.pattern.permute.xlu0 9
    %297 = vperm.xlu0 %296, %v23
    %v298 = vpop.permute.xlu0 %297
    %v300 = vlaneseq
    %v301 = vshrl.u32 %v300, 7
    %v302 = vsub.s32 1, %v301
    %v303 = vrot.slane %v147, %v302
    %v304 = vmul.f32 %v294, %v303
    %v305 = vmul.f32 %v298, %v303
    %v306 = vadd.f32 %v290, %v304
    %v307 = vadd.f32 %v291, %v305
    %v308 = vlog2.pop %v306
    %v309 = vmul.f32 %v308, 0.6931472
    %v310 = vlog2.pop %v307
    %v311 = vmul.f32 %v310, 0.6931472
    %v312 = vadd.f32 %v141, %v309
    %v313 = vadd.f32 %v141, %v311
    %v314 = vsub.f32 %v106, %v312
    %v315 = vsub.f32 %v108, %v313
    %v316 = vsel %vm35, %v314, -inf
    %v317 = vsel %vm37, %v315, -inf
    %v318 = vmax.f32 %v316, %v317
    %v319 = vrot.slane %v318, 4
    %v320 = vmax.f32 %v318, %v319
    %v321 = vrot.slane %v320, 2
    %v322 = vmax.f32 %v320, %v321
    %v323 = vrot.slane %v322, 1
    %v324 = vmax.f32 %v322, %v323
    %v325 = vsub.f32 %v314, %v324
    %v326 = vsub.f32 %v315, %v324
    %v327 = vmul.f32 %v325, 1.442695
    %v328 = vpow.pop %v327
    %v329 = vmul.f32 %v326, 1.442695
    %v330 = vpow.pop %v329
    %v331 = vlaneseq
    %v332 = vshrl.u32 %v331, 7
    %v333 = vsub.s32 0, %v332
    %v334 = vrot.slane %v328, %v333
    %v335 = vmul.f32 %v151, %v334
    %v336 = vmul.f32 %v156, %v334
    %v337 = vlaneseq
    %v338 = vshrl.u32 %v337, 7
    %v339 = vsub.s32 1, %v338
    %v340 = vrot.slane %v328, %v339
    %v341 = vmul.f32 %v166, %v340
    %v342 = vmul.f32 %v170, %v340
    %v343 = vadd.f32 %v335, %v341
    %v344 = vadd.f32 %v336, %v342
    %v345 = vlaneseq
    %v346 = vshrl.u32 %v345, 7
    %v347 = vsub.s32 2, %v346
    %v348 = vrot.slane %v328, %v347
    %v349 = vmul.f32 %v182, %v348
    %v350 = vmul.f32 %v186, %v348
    %v351 = vadd.f32 %v343, %v349
    %v352 = vadd.f32 %v344, %v350
    %v353 = vlaneseq
    %v354 = vshrl.u32 %v353, 7
    %v355 = vsub.s32 3, %v354
    %v356 = vrot.slane %v328, %v355
    %v357 = vmul.f32 %v198, %v356
    %v358 = vmul.f32 %v202, %v356
    %v359 = vadd.f32 %v351, %v357
    %v360 = vadd.f32 %v352, %v358
    %v361 = vlaneseq
    %v362 = vshrl.u32 %v361, 7
    %v363 = vsub.s32 4, %v362
    %v364 = vrot.slane %v328, %v363
    %v365 = vmul.f32 %v214, %v364
    %v366 = vmul.f32 %v218, %v364
    %v367 = vadd.f32 %v359, %v365
    %v368 = vadd.f32 %v360, %v366
    %v369 = vlaneseq
    %v370 = vshrl.u32 %v369, 7
    %v371 = vsub.s32 5, %v370
    %v372 = vrot.slane %v328, %v371
    %v373 = vmul.f32 %v230, %v372
    %v374 = vmul.f32 %v234, %v372
    %v375 = vadd.f32 %v367, %v373
    %v376 = vadd.f32 %v368, %v374
    %v377 = vlaneseq
    %v378 = vshrl.u32 %v377, 7
    %v379 = vsub.s32 6, %v378
    %v380 = vrot.slane %v328, %v379
    %v381 = vmul.f32 %v246, %v380
    %v382 = vmul.f32 %v250, %v380
    %v383 = vadd.f32 %v375, %v381
    %v384 = vadd.f32 %v376, %v382
    %v385 = vlaneseq
    %v386 = vshrl.u32 %v385, 7
    %v387 = vsub.s32 7, %v386
    %v388 = vrot.slane %v328, %v387
    %v389 = vmul.f32 %v262, %v388
    %v390 = vmul.f32 %v266, %v388
    %v391 = vadd.f32 %v383, %v389
    %v392 = vadd.f32 %v384, %v390
    %v393 = vlaneseq
    %v394 = vshrl.u32 %v393, 7
    %v395 = vsub.s32 0, %v394
    %v396 = vrot.slane %v330, %v395
    %v397 = vmul.f32 %v278, %v396
    %v398 = vmul.f32 %v282, %v396
    %v399 = vadd.f32 %v391, %v397
    %v400 = vadd.f32 %v392, %v398
    %v401 = vlaneseq
    %v402 = vshrl.u32 %v401, 7
    %v403 = vsub.s32 1, %v402
    %v404 = vrot.slane %v330, %v403
    %v405 = vmul.f32 %v294, %v404
    %v406 = vmul.f32 %v298, %v404
    %v407 = vadd.f32 %v399, %v405
    %v408 = vadd.f32 %v400, %v406
    %v409 = vlog2.pop %v407
    %v410 = vmul.f32 %v409, 0.6931472
    %v411 = vlog2.pop %v408
    %v412 = vmul.f32 %v411, 0.6931472
    %v413 = vadd.f32 %v324, %v410
    %v414 = vadd.f32 %v324, %v412
    %v415 = vsub.f32 %v112, %v413
    %v416 = vsub.f32 %v114, %v414
    %v417 = vsub.f32 %v117, %v314
    %v418 = vsub.f32 %v118, %v315
    %v419 = vand.u32 2147483647, %v417
    %v420 = vand.u32 2147483647, %v418
    %v421 = vsel %vm34, 1, 0
    %vm422 = vcmp.eq.s32.totalorder %v421, 1
    %v423 = vsel %vm422, %v419, 0.0
    %v424 = vsel %vm422, %v420, 0.0
    %v425 = vsel %vm35, %v423, -inf
    %v426 = vsel %vm37, %v424, -inf
    %v427 = vmax.f32 %v425, %v426
    %428 = vmax.xlane.f32.xlu0 %v427
    %v429 = vpop.xlane.xlu0 %428
    %v430 = vrot.slane %v429, 4
    %v431 = vmax.f32 %v429, %v430
    %v432 = vrot.slane %v431, 2
    %v433 = vmax.f32 %v431, %v432
    %v434 = vrot.slane %v433, 1
    %v435 = vmax.f32 %v433, %v434
    %s436 = vtos %v435
    %v437 = vsub.f32 %v119, %v415
    %v438 = vsub.f32 %v120, %v416
    %v439 = vand.u32 2147483647, %v437
    %v440 = vand.u32 2147483647, %v438
    %v441 = vsel %vm422, %v439, 0.0
    %v442 = vsel %vm422, %v440, 0.0
    %v443 = vsel %vm35, %v441, -inf
    %v444 = vsel %vm37, %v442, -inf
    %v445 = vmax.f32 %v443, %v444
    %446 = vmax.xlane.f32.xlu0 %v445
    %v447 = vpop.xlane.xlu0 %446
    %v448 = vrot.slane %v447, 4
    %v449 = vmax.f32 %v447, %v448
    %v450 = vrot.slane %v449, 2
    %v451 = vmax.f32 %v449, %v450
    %v452 = vrot.slane %v451, 1
    %v453 = vmax.f32 %v451, %v452
    %s454 = vtos %v453
    %p455 = scmp.lt.f32.partialorder %s436, 0.0001
    %p456 = scmp.lt.f32.partialorder %s454, 0.0001
    %p457 = pnand %p455, %p456
    %p458 = pneg %p457
    %p459 = pnand %p458, %p132
    %p460 = pneg %p459
    %p461 = scmp.eq.s32.totalorder %s125, 0
    %p462 = pnand %p461, %p460
    %p463 = pneg %p462
    %s464 = scalar_select %p463, 1, 0
    %v465 = vstv %s464
    %vm466 = vcmp.eq.s32.totalorder %v465, 1
    %v467 = vsel %vm466, %v117, %v121
    %v468 = vsel %vm466, %v118, %v122
    %v469 = vsel %vm466, %v119, %v123
    %v470 = vsel %vm466, %v120, %v124
    %s471 = scalar_select %p460, 1, 0
    %p472 = scmp.gt.s32.totalorder %s125, %s471
    %s473 = scalar_select %p472, %s125, %s471
    %s474 = scalar_select %p132, 1, 0
    %v475 = vstv %s474
    %vm476 = vcmp.eq.s32.totalorder %v475, 1
    %v477 = vsel %vm476, %v314, %v117
    %v478 = vsel %vm476, %v315, %v118
    %v479 = vsel %vm476, %v415, %v119
    %v480 = vsel %vm476, %v416, %v120
    %s481 = sadd.s32 %s116, %s474
    %p482 = scmp.lt.s32.totalorder %s481, 100
    %v483 = vsel %vm35, %v479, -inf
    %v484 = vsel %vm37, %v480, -inf
    %v485 = vmax.f32 %v483, %v484
    %v486 = vrot.slane %v485, 4
    %v487 = vmax.f32 %v485, %v486
    %v488 = vrot.slane %v487, 2
    %v489 = vmax.f32 %v487, %v488
    %v490 = vrot.slane %v489, 1
    %v491 = vmax.f32 %v489, %v490
    %v492 = vsub.f32 %v479, %v491
    %v493 = vsub.f32 %v480, %v491
    %v494 = vmul.f32 %v492, 1.442695
    %v495 = vpow.pop %v494
    %v496 = vmul.f32 %v493, 1.442695
    %v497 = vpow.pop %v496
    %v498 = vlaneseq
    %v499 = vshrl.u32 %v498, 7
    %v500 = vsub.s32 0, %v499
    %v501 = vrot.slane %v495, %v500
    %v502 = vmul.f32 %v151, %v501
    %v503 = vmul.f32 %v156, %v501
    %v504 = vlaneseq
    %v505 = vshrl.u32 %v504, 7
    %v506 = vsub.s32 1, %v505
    %v507 = vrot.slane %v495, %v506
    %v508 = vmul.f32 %v166, %v507
    %v509 = vmul.f32 %v170, %v507
    %v510 = vadd.f32 %v502, %v508
    %v511 = vadd.f32 %v503, %v509
    %v512 = vlaneseq
    %v513 = vshrl.u32 %v512, 7
    %v514 = vsub.s32 2, %v513
    %v515 = vrot.slane %v495, %v514
    %v516 = vmul.f32 %v182, %v515
    %v517 = vmul.f32 %v186, %v515
    %v518 = vadd.f32 %v510, %v516
    %v519 = vadd.f32 %v511, %v517
    %v520 = vlaneseq
    %v521 = vshrl.u32 %v520, 7
    %v522 = vsub.s32 3, %v521
    %v523 = vrot.slane %v495, %v522
    %v524 = vmul.f32 %v198, %v523
    %v525 = vmul.f32 %v202, %v523
    %v526 = vadd.f32 %v518, %v524
    %v527 = vadd.f32 %v519, %v525
    %v528 = vlaneseq
    %v529 = vshrl.u32 %v528, 7
    %v530 = vsub.s32 4, %v529
    %v531 = vrot.slane %v495, %v530
    %v532 = vmul.f32 %v214, %v531
    %v533 = vmul.f32 %v218, %v531
    %v534 = vadd.f32 %v526, %v532
    %v535 = vadd.f32 %v527, %v533
    %v536 = vlaneseq
    %v537 = vshrl.u32 %v536, 7
    %v538 = vsub.s32 5, %v537
    %v539 = vrot.slane %v495, %v538
    %v540 = vmul.f32 %v230, %v539
    %v541 = vmul.f32 %v234, %v539
    %v542 = vadd.f32 %v534, %v540
    %v543 = vadd.f32 %v535, %v541
    %v544 = vlaneseq
    %v545 = vshrl.u32 %v544, 7
    %v546 = vsub.s32 6, %v545
    %v547 = vrot.slane %v495, %v546
    %v548 = vmul.f32 %v246, %v547
    %v549 = vmul.f32 %v250, %v547
    %v550 = vadd.f32 %v542, %v548
    %v551 = vadd.f32 %v543, %v549
    %v552 = vlaneseq
    %v553 = vshrl.u32 %v552, 7
    %v554 = vsub.s32 7, %v553
    %v555 = vrot.slane %v495, %v554
    %v556 = vmul.f32 %v262, %v555
    %v557 = vmul.f32 %v266, %v555
    %v558 = vadd.f32 %v550, %v556
    %v559 = vadd.f32 %v551, %v557
    %v560 = vlaneseq
    %v561 = vshrl.u32 %v560, 7
    %v562 = vsub.s32 0, %v561
    %v563 = vrot.slane %v497, %v562
    %v564 = vmul.f32 %v278, %v563
    %v565 = vmul.f32 %v282, %v563
    %v566 = vadd.f32 %v558, %v564
    %v567 = vadd.f32 %v559, %v565
    %v568 = vlaneseq
    %v569 = vshrl.u32 %v568, 7
    %v570 = vsub.s32 1, %v569
    %v571 = vrot.slane %v497, %v570
    %v572 = vmul.f32 %v294, %v571
    %v573 = vmul.f32 %v298, %v571
    %v574 = vadd.f32 %v566, %v572
    %v575 = vadd.f32 %v567, %v573
    %v576 = vlog2.pop %v574
    %v577 = vmul.f32 %v576, 0.6931472
    %v578 = vlog2.pop %v575
    %v579 = vmul.f32 %v578, 0.6931472
    %v580 = vadd.f32 %v491, %v577
    %v581 = vadd.f32 %v491, %v579
    %v582 = vsub.f32 %v106, %v580
    %v583 = vsub.f32 %v108, %v581
    %v584 = vsel %vm35, %v582, -inf
    %v585 = vsel %vm37, %v583, -inf
    %v586 = vmax.f32 %v584, %v585
    %v587 = vrot.slane %v586, 4
    %v588 = vmax.f32 %v586, %v587
    %v589 = vrot.slane %v588, 2
    %v590 = vmax.f32 %v588, %v589
    %v591 = vrot.slane %v590, 1
    %v592 = vmax.f32 %v590, %v591
    %v593 = vsub.f32 %v582, %v592
    %v594 = vsub.f32 %v583, %v592
    %v595 = vmul.f32 %v593, 1.442695
    %v596 = vpow.pop %v595
    %v597 = vmul.f32 %v594, 1.442695
    %v598 = vpow.pop %v597
    %v599 = vlaneseq
    %v600 = vshrl.u32 %v599, 7
    %v601 = vsub.s32 0, %v600
    %v602 = vrot.slane %v596, %v601
    %v603 = vmul.f32 %v151, %v602
    %v604 = vmul.f32 %v156, %v602
    %v605 = vlaneseq
    %v606 = vshrl.u32 %v605, 7
    %v607 = vsub.s32 1, %v606
    %v608 = vrot.slane %v596, %v607
    %v609 = vmul.f32 %v166, %v608
    %v610 = vmul.f32 %v170, %v608
    %v611 = vadd.f32 %v603, %v609
    %v612 = vadd.f32 %v604, %v610
    %v613 = vlaneseq
    %v614 = vshrl.u32 %v613, 7
    %v615 = vsub.s32 2, %v614
    %v616 = vrot.slane %v596, %v615
    %v617 = vmul.f32 %v182, %v616
    %v618 = vmul.f32 %v186, %v616
    %v619 = vadd.f32 %v611, %v617
    %v620 = vadd.f32 %v612, %v618
    %v621 = vlaneseq
    %v622 = vshrl.u32 %v621, 7
    %v623 = vsub.s32 3, %v622
    %v624 = vrot.slane %v596, %v623
    %v625 = vmul.f32 %v198, %v624
    %v626 = vmul.f32 %v202, %v624
    %v627 = vadd.f32 %v619, %v625
    %v628 = vadd.f32 %v620, %v626
    %v629 = vlaneseq
    %v630 = vshrl.u32 %v629, 7
    %v631 = vsub.s32 4, %v630
    %v632 = vrot.slane %v596, %v631
    %v633 = vmul.f32 %v214, %v632
    %v634 = vmul.f32 %v218, %v632
    %v635 = vadd.f32 %v627, %v633
    %v636 = vadd.f32 %v628, %v634
    %v637 = vlaneseq
    %v638 = vshrl.u32 %v637, 7
    %v639 = vsub.s32 5, %v638
    %v640 = vrot.slane %v596, %v639
    %v641 = vmul.f32 %v230, %v640
    %v642 = vmul.f32 %v234, %v640
    %v643 = vadd.f32 %v635, %v641
    %v644 = vadd.f32 %v636, %v642
    %v645 = vlaneseq
    %v646 = vshrl.u32 %v645, 7
    %v647 = vsub.s32 6, %v646
    %v648 = vrot.slane %v596, %v647
    %v649 = vmul.f32 %v246, %v648
    %v650 = vmul.f32 %v250, %v648
    %v651 = vadd.f32 %v643, %v649
    %v652 = vadd.f32 %v644, %v650
    %v653 = vlaneseq
    %v654 = vshrl.u32 %v653, 7
    %v655 = vsub.s32 7, %v654
    %v656 = vrot.slane %v596, %v655
    %v657 = vmul.f32 %v262, %v656
    %v658 = vmul.f32 %v266, %v656
    %v659 = vadd.f32 %v651, %v657
    %v660 = vadd.f32 %v652, %v658
    %v661 = vlaneseq
    %v662 = vshrl.u32 %v661, 7
    %v663 = vsub.s32 0, %v662
    %v664 = vrot.slane %v598, %v663
    %v665 = vmul.f32 %v278, %v664
    %v666 = vmul.f32 %v282, %v664
    %v667 = vadd.f32 %v659, %v665
    %v668 = vadd.f32 %v660, %v666
    %v669 = vlaneseq
    %v670 = vshrl.u32 %v669, 7
    %v671 = vsub.s32 1, %v670
    %v672 = vrot.slane %v598, %v671
    %v673 = vmul.f32 %v294, %v672
    %v674 = vmul.f32 %v298, %v672
    %v675 = vadd.f32 %v667, %v673
    %v676 = vadd.f32 %v668, %v674
    %v677 = vlog2.pop %v675
    %v678 = vmul.f32 %v677, 0.6931472
    %v679 = vlog2.pop %v676
    %v680 = vmul.f32 %v679, 0.6931472
    %v681 = vadd.f32 %v592, %v678
    %v682 = vadd.f32 %v592, %v680
    %v683 = vsub.f32 %v112, %v681
    %v684 = vsub.f32 %v114, %v682
    %v685 = vsub.f32 %v477, %v582
    %v686 = vsub.f32 %v478, %v583
    %v687 = vand.u32 2147483647, %v685
    %v688 = vand.u32 2147483647, %v686
    %v689 = vsel %vm422, %v687, 0.0
    %v690 = vsel %vm422, %v688, 0.0
    %v691 = vsel %vm35, %v689, -inf
    %v692 = vsel %vm37, %v690, -inf
    %v693 = vmax.f32 %v691, %v692
    %694 = vmax.xlane.f32.xlu0 %v693
    %v695 = vpop.xlane.xlu0 %694
    %v696 = vrot.slane %v695, 4
    %v697 = vmax.f32 %v695, %v696
    %v698 = vrot.slane %v697, 2
    %v699 = vmax.f32 %v697, %v698
    %v700 = vrot.slane %v699, 1
    %v701 = vmax.f32 %v699, %v700
    %s702 = vtos %v701
    %v703 = vsub.f32 %v479, %v683
    %v704 = vsub.f32 %v480, %v684
    %v705 = vand.u32 2147483647, %v703
    %v706 = vand.u32 2147483647, %v704
    %v707 = vsel %vm422, %v705, 0.0
    %v708 = vsel %vm422, %v706, 0.0
    %v709 = vsel %vm35, %v707, -inf
    %v710 = vsel %vm37, %v708, -inf
    %v711 = vmax.f32 %v709, %v710
    %712 = vmax.xlane.f32.xlu0 %v711
    %v713 = vpop.xlane.xlu0 %712
    %v714 = vrot.slane %v713, 4
    %v715 = vmax.f32 %v713, %v714
    %v716 = vrot.slane %v715, 2
    %v717 = vmax.f32 %v715, %v716
    %v718 = vrot.slane %v717, 1
    %v719 = vmax.f32 %v717, %v718
    %s720 = vtos %v719
    %p721 = scmp.lt.f32.partialorder %s702, 0.0001
    %p722 = scmp.lt.f32.partialorder %s720, 0.0001
    %p723 = pnand %p721, %p722
    %p724 = pneg %p723
    %p725 = pnand %p724, %p482
    %p726 = pneg %p725
    %p727 = scmp.eq.s32.totalorder %s473, 0
    %p728 = pnand %p727, %p726
    %p729 = pneg %p728
    %s730 = scalar_select %p729, 1, 0
    %v731 = vstv %s730
    %vm732 = vcmp.eq.s32.totalorder %v731, 1
    %v733 = vsel %vm732, %v477, %v467
    %v734 = vsel %vm732, %v478, %v468
    %v735 = vsel %vm732, %v479, %v469
    %v736 = vsel %vm732, %v480, %v470
    %s737 = scalar_select %p726, 1, 0
    %p738 = scmp.gt.s32.totalorder %s473, %s737
    %s739 = scalar_select %p738, %s473, %s737
    %s740 = scalar_select %p482, 1, 0
    %v741 = vstv %s740
    %vm742 = vcmp.eq.s32.totalorder %v741, 1
    %v743 = vsel %vm742, %v582, %v477
    %v744 = vsel %vm742, %v583, %v478
    %v745 = vsel %vm742, %v683, %v479
    %v746 = vsel %vm742, %v684, %v480
    %s747 = sadd.s32 %s481, %s740
    %p748 = scmp.lt.s32.totalorder %s747, 100
    %v749 = vsel %vm35, %v745, -inf
    %v750 = vsel %vm37, %v746, -inf
    %v751 = vmax.f32 %v749, %v750
    %v752 = vrot.slane %v751, 4
    %v753 = vmax.f32 %v751, %v752
    %v754 = vrot.slane %v753, 2
    %v755 = vmax.f32 %v753, %v754
    %v756 = vrot.slane %v755, 1
    %v757 = vmax.f32 %v755, %v756
    %v758 = vsub.f32 %v745, %v757
    %v759 = vsub.f32 %v746, %v757
    %v760 = vmul.f32 %v758, 1.442695
    %v761 = vpow.pop %v760
    %v762 = vmul.f32 %v759, 1.442695
    %v763 = vpow.pop %v762
    %v764 = vlaneseq
    %v765 = vshrl.u32 %v764, 7
    %v766 = vsub.s32 0, %v765
    %v767 = vrot.slane %v761, %v766
    %v768 = vmul.f32 %v151, %v767
    %v769 = vmul.f32 %v156, %v767
    %v770 = vlaneseq
    %v771 = vshrl.u32 %v770, 7
    %v772 = vsub.s32 1, %v771
    %v773 = vrot.slane %v761, %v772
    %v774 = vmul.f32 %v166, %v773
    %v775 = vmul.f32 %v170, %v773
    %v776 = vadd.f32 %v768, %v774
    %v777 = vadd.f32 %v769, %v775
    %v778 = vlaneseq
    %v779 = vshrl.u32 %v778, 7
    %v780 = vsub.s32 2, %v779
    %v781 = vrot.slane %v761, %v780
    %v782 = vmul.f32 %v182, %v781
    %v783 = vmul.f32 %v186, %v781
    %v784 = vadd.f32 %v776, %v782
    %v785 = vadd.f32 %v777, %v783
    %v786 = vlaneseq
    %v787 = vshrl.u32 %v786, 7
    %v788 = vsub.s32 3, %v787
    %v789 = vrot.slane %v761, %v788
    %v790 = vmul.f32 %v198, %v789
    %v791 = vmul.f32 %v202, %v789
    %v792 = vadd.f32 %v784, %v790
    %v793 = vadd.f32 %v785, %v791
    %v794 = vlaneseq
    %v795 = vshrl.u32 %v794, 7
    %v796 = vsub.s32 4, %v795
    %v797 = vrot.slane %v761, %v796
    %v798 = vmul.f32 %v214, %v797
    %v799 = vmul.f32 %v218, %v797
    %v800 = vadd.f32 %v792, %v798
    %v801 = vadd.f32 %v793, %v799
    %v802 = vlaneseq
    %v803 = vshrl.u32 %v802, 7
    %v804 = vsub.s32 5, %v803
    %v805 = vrot.slane %v761, %v804
    %v806 = vmul.f32 %v230, %v805
    %v807 = vmul.f32 %v234, %v805
    %v808 = vadd.f32 %v800, %v806
    %v809 = vadd.f32 %v801, %v807
    %v810 = vlaneseq
    %v811 = vshrl.u32 %v810, 7
    %v812 = vsub.s32 6, %v811
    %v813 = vrot.slane %v761, %v812
    %v814 = vmul.f32 %v246, %v813
    %v815 = vmul.f32 %v250, %v813
    %v816 = vadd.f32 %v808, %v814
    %v817 = vadd.f32 %v809, %v815
    %v818 = vlaneseq
    %v819 = vshrl.u32 %v818, 7
    %v820 = vsub.s32 7, %v819
    %v821 = vrot.slane %v761, %v820
    %v822 = vmul.f32 %v262, %v821
    %v823 = vmul.f32 %v266, %v821
    %v824 = vadd.f32 %v816, %v822
    %v825 = vadd.f32 %v817, %v823
    %v826 = vlaneseq
    %v827 = vshrl.u32 %v826, 7
    %v828 = vsub.s32 0, %v827
    %v829 = vrot.slane %v763, %v828
    %v830 = vmul.f32 %v278, %v829
    %v831 = vmul.f32 %v282, %v829
    %v832 = vadd.f32 %v824, %v830
    %v833 = vadd.f32 %v825, %v831
    %v834 = vlaneseq
    %v835 = vshrl.u32 %v834, 7
    %v836 = vsub.s32 1, %v835
    %v837 = vrot.slane %v763, %v836
    %v838 = vmul.f32 %v294, %v837
    %v839 = vmul.f32 %v298, %v837
    %v840 = vadd.f32 %v832, %v838
    %v841 = vadd.f32 %v833, %v839
    %v842 = vlog2.pop %v840
    %v843 = vmul.f32 %v842, 0.6931472
    %v844 = vlog2.pop %v841
    %v845 = vmul.f32 %v844, 0.6931472
    %v846 = vadd.f32 %v757, %v843
    %v847 = vadd.f32 %v757, %v845
    %v848 = vsub.f32 %v106, %v846
    %v849 = vsub.f32 %v108, %v847
    %v850 = vsel %vm35, %v848, -inf
    %v851 = vsel %vm37, %v849, -inf
    %v852 = vmax.f32 %v850, %v851
    %v853 = vrot.slane %v852, 4
    %v854 = vmax.f32 %v852, %v853
    %v855 = vrot.slane %v854, 2
    %v856 = vmax.f32 %v854, %v855
    %v857 = vrot.slane %v856, 1
    %v858 = vmax.f32 %v856, %v857
    %v859 = vsub.f32 %v848, %v858
    %v860 = vsub.f32 %v849, %v858
    %v861 = vmul.f32 %v859, 1.442695
    %v862 = vpow.pop %v861
    %v863 = vmul.f32 %v860, 1.442695
    %v864 = vpow.pop %v863
    %v865 = vlaneseq
    %v866 = vshrl.u32 %v865, 7
    %v867 = vsub.s32 0, %v866
    %v868 = vrot.slane %v862, %v867
    %v869 = vmul.f32 %v151, %v868
    %v870 = vmul.f32 %v156, %v868
    %v871 = vlaneseq
    %v872 = vshrl.u32 %v871, 7
    %v873 = vsub.s32 1, %v872
    %v874 = vrot.slane %v862, %v873
    %v875 = vmul.f32 %v166, %v874
    %v876 = vmul.f32 %v170, %v874
    %v877 = vadd.f32 %v869, %v875
    %v878 = vadd.f32 %v870, %v876
    %v879 = vlaneseq
    %v880 = vshrl.u32 %v879, 7
    %v881 = vsub.s32 2, %v880
    %v882 = vrot.slane %v862, %v881
    %v883 = vmul.f32 %v182, %v882
    %v884 = vmul.f32 %v186, %v882
    %v885 = vadd.f32 %v877, %v883
    %v886 = vadd.f32 %v878, %v884
    %v887 = vlaneseq
    %v888 = vshrl.u32 %v887, 7
    %v889 = vsub.s32 3, %v888
    %v890 = vrot.slane %v862, %v889
    %v891 = vmul.f32 %v198, %v890
    %v892 = vmul.f32 %v202, %v890
    %v893 = vadd.f32 %v885, %v891
    %v894 = vadd.f32 %v886, %v892
    %v895 = vlaneseq
    %v896 = vshrl.u32 %v895, 7
    %v897 = vsub.s32 4, %v896
    %v898 = vrot.slane %v862, %v897
    %v899 = vmul.f32 %v214, %v898
    %v900 = vmul.f32 %v218, %v898
    %v901 = vadd.f32 %v893, %v899
    %v902 = vadd.f32 %v894, %v900
    %v903 = vlaneseq
    %v904 = vshrl.u32 %v903, 7
    %v905 = vsub.s32 5, %v904
    %v906 = vrot.slane %v862, %v905
    %v907 = vmul.f32 %v230, %v906
    %v908 = vmul.f32 %v234, %v906
    %v909 = vadd.f32 %v901, %v907
    %v910 = vadd.f32 %v902, %v908
    %v911 = vlaneseq
    %v912 = vshrl.u32 %v911, 7
    %v913 = vsub.s32 6, %v912
    %v914 = vrot.slane %v862, %v913
    %v915 = vmul.f32 %v246, %v914
    %v916 = vmul.f32 %v250, %v914
    %v917 = vadd.f32 %v909, %v915
    %v918 = vadd.f32 %v910, %v916
    %v919 = vlaneseq
    %v920 = vshrl.u32 %v919, 7
    %v921 = vsub.s32 7, %v920
    %v922 = vrot.slane %v862, %v921
    %v923 = vmul.f32 %v262, %v922
    %v924 = vmul.f32 %v266, %v922
    %v925 = vadd.f32 %v917, %v923
    %v926 = vadd.f32 %v918, %v924
    %v927 = vlaneseq
    %v928 = vshrl.u32 %v927, 7
    %v929 = vsub.s32 0, %v928
    %v930 = vrot.slane %v864, %v929
    %v931 = vmul.f32 %v278, %v930
    %v932 = vmul.f32 %v282, %v930
    %v933 = vadd.f32 %v925, %v931
    %v934 = vadd.f32 %v926, %v932
    %v935 = vlaneseq
    %v936 = vshrl.u32 %v935, 7
    %v937 = vsub.s32 1, %v936
    %v938 = vrot.slane %v864, %v937
    %v939 = vmul.f32 %v294, %v938
    %v940 = vmul.f32 %v298, %v938
    %v941 = vadd.f32 %v933, %v939
    %v942 = vadd.f32 %v934, %v940
    %v943 = vlog2.pop %v941
    %v944 = vmul.f32 %v943, 0.6931472
    %v945 = vlog2.pop %v942
    %v946 = vmul.f32 %v945, 0.6931472
    %v947 = vadd.f32 %v858, %v944
    %v948 = vadd.f32 %v858, %v946
    %v949 = vsub.f32 %v112, %v947
    %v950 = vsub.f32 %v114, %v948
    %v951 = vsub.f32 %v743, %v848
    %v952 = vsub.f32 %v744, %v849
    %v953 = vand.u32 2147483647, %v951
    %v954 = vand.u32 2147483647, %v952
    %v955 = vsel %vm422, %v953, 0.0
    %v956 = vsel %vm422, %v954, 0.0
    %v957 = vsel %vm35, %v955, -inf
    %v958 = vsel %vm37, %v956, -inf
    %v959 = vmax.f32 %v957, %v958
    %960 = vmax.xlane.f32.xlu0 %v959
    %v961 = vpop.xlane.xlu0 %960
    %v962 = vrot.slane %v961, 4
    %v963 = vmax.f32 %v961, %v962
    %v964 = vrot.slane %v963, 2
    %v965 = vmax.f32 %v963, %v964
    %v966 = vrot.slane %v965, 1
    %v967 = vmax.f32 %v965, %v966
    %s968 = vtos %v967
    %v969 = vsub.f32 %v745, %v949
    %v970 = vsub.f32 %v746, %v950
    %v971 = vand.u32 2147483647, %v969
    %v972 = vand.u32 2147483647, %v970
    %v973 = vsel %vm422, %v971, 0.0
    %v974 = vsel %vm422, %v972, 0.0
    %v975 = vsel %vm35, %v973, -inf
    %v976 = vsel %vm37, %v974, -inf
    %v977 = vmax.f32 %v975, %v976
    %978 = vmax.xlane.f32.xlu0 %v977
    %v979 = vpop.xlane.xlu0 %978
    %v980 = vrot.slane %v979, 4
    %v981 = vmax.f32 %v979, %v980
    %v982 = vrot.slane %v981, 2
    %v983 = vmax.f32 %v981, %v982
    %v984 = vrot.slane %v983, 1
    %v985 = vmax.f32 %v983, %v984
    %s986 = vtos %v985
    %p987 = scmp.lt.f32.partialorder %s968, 0.0001
    %p988 = scmp.lt.f32.partialorder %s986, 0.0001
    %p989 = pnand %p987, %p988
    %p990 = pneg %p989
    %p991 = pnand %p990, %p748
    %p992 = pneg %p991
    %p993 = scmp.eq.s32.totalorder %s739, 0
    %p994 = pnand %p993, %p992
    %p995 = pneg %p994
    %s996 = scalar_select %p995, 1, 0
    %v997 = vstv %s996
    %vm998 = vcmp.eq.s32.totalorder %v997, 1
    %v999 = vsel %vm998, %v743, %v733
    %v1000 = vsel %vm998, %v744, %v734
    %v1001 = vsel %vm998, %v745, %v735
    %v1002 = vsel %vm998, %v746, %v736
    %s1003 = scalar_select %p992, 1, 0
    %p1004 = scmp.gt.s32.totalorder %s739, %s1003
    %s1005 = scalar_select %p1004, %s739, %s1003
    %s1006 = scalar_select %p748, 1, 0
    %v1007 = vstv %s1006
    %vm1008 = vcmp.eq.s32.totalorder %v1007, 1
    %v1009 = vsel %vm1008, %v848, %v743
    %v1010 = vsel %vm1008, %v849, %v744
    %v1011 = vsel %vm1008, %v949, %v745
    %v1012 = vsel %vm1008, %v950, %v746
    %s1013 = sadd.s32 %s747, %s1006
    %p1014 = scmp.lt.s32.totalorder %s1013, 100
    %v1015 = vsel %vm35, %v1011, -inf
    %v1016 = vsel %vm37, %v1012, -inf
    %v1017 = vmax.f32 %v1015, %v1016
    %v1018 = vrot.slane %v1017, 4
    %v1019 = vmax.f32 %v1017, %v1018
    %v1020 = vrot.slane %v1019, 2
    %v1021 = vmax.f32 %v1019, %v1020
    %v1022 = vrot.slane %v1021, 1
    %v1023 = vmax.f32 %v1021, %v1022
    %v1024 = vsub.f32 %v1011, %v1023
    %v1025 = vsub.f32 %v1012, %v1023
    %v1026 = vmul.f32 %v1024, 1.442695
    %v1027 = vpow.pop %v1026
    %v1028 = vmul.f32 %v1025, 1.442695
    %v1029 = vpow.pop %v1028
    %v1030 = vlaneseq
    %v1031 = vshrl.u32 %v1030, 7
    %v1032 = vsub.s32 0, %v1031
    %v1033 = vrot.slane %v1027, %v1032
    %v1034 = vmul.f32 %v151, %v1033
    %v1035 = vmul.f32 %v156, %v1033
    %v1036 = vlaneseq
    %v1037 = vshrl.u32 %v1036, 7
    %v1038 = vsub.s32 1, %v1037
    %v1039 = vrot.slane %v1027, %v1038
    %v1040 = vmul.f32 %v166, %v1039
    %v1041 = vmul.f32 %v170, %v1039
    %v1042 = vadd.f32 %v1034, %v1040
    %v1043 = vadd.f32 %v1035, %v1041
    %v1044 = vlaneseq
    %v1045 = vshrl.u32 %v1044, 7
    %v1046 = vsub.s32 2, %v1045
    %v1047 = vrot.slane %v1027, %v1046
    %v1048 = vmul.f32 %v182, %v1047
    %v1049 = vmul.f32 %v186, %v1047
    %v1050 = vadd.f32 %v1042, %v1048
    %v1051 = vadd.f32 %v1043, %v1049
    %v1052 = vlaneseq
    %v1053 = vshrl.u32 %v1052, 7
    %v1054 = vsub.s32 3, %v1053
    %v1055 = vrot.slane %v1027, %v1054
    %v1056 = vmul.f32 %v198, %v1055
    %v1057 = vmul.f32 %v202, %v1055
    %v1058 = vadd.f32 %v1050, %v1056
    %v1059 = vadd.f32 %v1051, %v1057
    %v1060 = vlaneseq
    %v1061 = vshrl.u32 %v1060, 7
    %v1062 = vsub.s32 4, %v1061
    %v1063 = vrot.slane %v1027, %v1062
    %v1064 = vmul.f32 %v214, %v1063
    %v1065 = vmul.f32 %v218, %v1063
    %v1066 = vadd.f32 %v1058, %v1064
    %v1067 = vadd.f32 %v1059, %v1065
    %v1068 = vlaneseq
    %v1069 = vshrl.u32 %v1068, 7
    %v1070 = vsub.s32 5, %v1069
    %v1071 = vrot.slane %v1027, %v1070
    %v1072 = vmul.f32 %v230, %v1071
    %v1073 = vmul.f32 %v234, %v1071
    %v1074 = vadd.f32 %v1066, %v1072
    %v1075 = vadd.f32 %v1067, %v1073
    %v1076 = vlaneseq
    %v1077 = vshrl.u32 %v1076, 7
    %v1078 = vsub.s32 6, %v1077
    %v1079 = vrot.slane %v1027, %v1078
    %v1080 = vmul.f32 %v246, %v1079
    %v1081 = vmul.f32 %v250, %v1079
    %v1082 = vadd.f32 %v1074, %v1080
    %v1083 = vadd.f32 %v1075, %v1081
    %v1084 = vlaneseq
    %v1085 = vshrl.u32 %v1084, 7
    %v1086 = vsub.s32 7, %v1085
    %v1087 = vrot.slane %v1027, %v1086
    %v1088 = vmul.f32 %v262, %v1087
    %v1089 = vmul.f32 %v266, %v1087
    %v1090 = vadd.f32 %v1082, %v1088
    %v1091 = vadd.f32 %v1083, %v1089
    %v1092 = vlaneseq
    %v1093 = vshrl.u32 %v1092, 7
    %v1094 = vsub.s32 0, %v1093
    %v1095 = vrot.slane %v1029, %v1094
    %v1096 = vmul.f32 %v278, %v1095
    %v1097 = vmul.f32 %v282, %v1095
    %v1098 = vadd.f32 %v1090, %v1096
    %v1099 = vadd.f32 %v1091, %v1097
    %v1100 = vlaneseq
    %v1101 = vshrl.u32 %v1100, 7
    %v1102 = vsub.s32 1, %v1101
    %v1103 = vrot.slane %v1029, %v1102
    %v1104 = vmul.f32 %v294, %v1103
    %v1105 = vmul.f32 %v298, %v1103
    %v1106 = vadd.f32 %v1098, %v1104
    %v1107 = vadd.f32 %v1099, %v1105
    %v1108 = vlog2.pop %v1106
    %v1109 = vmul.f32 %v1108, 0.6931472
    %v1110 = vlog2.pop %v1107
    %v1111 = vmul.f32 %v1110, 0.6931472
    %v1112 = vadd.f32 %v1023, %v1109
    %v1113 = vadd.f32 %v1023, %v1111
    %v1114 = vsub.f32 %v106, %v1112
    %v1115 = vsub.f32 %v108, %v1113
    %v1116 = vsel %vm35, %v1114, -inf
    %v1117 = vsel %vm37, %v1115, -inf
    %v1118 = vmax.f32 %v1116, %v1117
    %v1119 = vrot.slane %v1118, 4
    %v1120 = vmax.f32 %v1118, %v1119
    %v1121 = vrot.slane %v1120, 2
    %v1122 = vmax.f32 %v1120, %v1121
    %v1123 = vrot.slane %v1122, 1
    %v1124 = vmax.f32 %v1122, %v1123
    %v1125 = vsub.f32 %v1114, %v1124
    %v1126 = vsub.f32 %v1115, %v1124
    %v1127 = vmul.f32 %v1125, 1.442695
    %v1128 = vpow.pop %v1127
    %v1129 = vmul.f32 %v1126, 1.442695
    %v1130 = vpow.pop %v1129
    %v1131 = vlaneseq
    %v1132 = vshrl.u32 %v1131, 7
    %v1133 = vsub.s32 0, %v1132
    %v1134 = vrot.slane %v1128, %v1133
    %v1135 = vmul.f32 %v151, %v1134
    %v1136 = vmul.f32 %v156, %v1134
    %v1137 = vlaneseq
    %v1138 = vshrl.u32 %v1137, 7
    %v1139 = vsub.s32 1, %v1138
    %v1140 = vrot.slane %v1128, %v1139
    %v1141 = vmul.f32 %v166, %v1140
    %v1142 = vmul.f32 %v170, %v1140
    %v1143 = vadd.f32 %v1135, %v1141
    %v1144 = vadd.f32 %v1136, %v1142
    %v1145 = vlaneseq
    %v1146 = vshrl.u32 %v1145, 7
    %v1147 = vsub.s32 2, %v1146
    %v1148 = vrot.slane %v1128, %v1147
    %v1149 = vmul.f32 %v182, %v1148
    %v1150 = vmul.f32 %v186, %v1148
    %v1151 = vadd.f32 %v1143, %v1149
    %v1152 = vadd.f32 %v1144, %v1150
    %v1153 = vlaneseq
    %v1154 = vshrl.u32 %v1153, 7
    %v1155 = vsub.s32 3, %v1154
    %v1156 = vrot.slane %v1128, %v1155
    %v1157 = vmul.f32 %v198, %v1156
    %v1158 = vmul.f32 %v202, %v1156
    %v1159 = vadd.f32 %v1151, %v1157
    %v1160 = vadd.f32 %v1152, %v1158
    %v1161 = vlaneseq
    %v1162 = vshrl.u32 %v1161, 7
    %v1163 = vsub.s32 4, %v1162
    %v1164 = vrot.slane %v1128, %v1163
    %v1165 = vmul.f32 %v214, %v1164
    %v1166 = vmul.f32 %v218, %v1164
    %v1167 = vadd.f32 %v1159, %v1165
    %v1168 = vadd.f32 %v1160, %v1166
    %v1169 = vlaneseq
    %v1170 = vshrl.u32 %v1169, 7
    %v1171 = vsub.s32 5, %v1170
    %v1172 = vrot.slane %v1128, %v1171
    %v1173 = vmul.f32 %v230, %v1172
    %v1174 = vmul.f32 %v234, %v1172
    %v1175 = vadd.f32 %v1167, %v1173
    %v1176 = vadd.f32 %v1168, %v1174
    %v1177 = vlaneseq
    %v1178 = vshrl.u32 %v1177, 7
    %v1179 = vsub.s32 6, %v1178
    %v1180 = vrot.slane %v1128, %v1179
    %v1181 = vmul.f32 %v246, %v1180
    %v1182 = vmul.f32 %v250, %v1180
    %v1183 = vadd.f32 %v1175, %v1181
    %v1184 = vadd.f32 %v1176, %v1182
    %v1185 = vlaneseq
    %v1186 = vshrl.u32 %v1185, 7
    %v1187 = vsub.s32 7, %v1186
    %v1188 = vrot.slane %v1128, %v1187
    %v1189 = vmul.f32 %v262, %v1188
    %v1190 = vmul.f32 %v266, %v1188
    %v1191 = vadd.f32 %v1183, %v1189
    %v1192 = vadd.f32 %v1184, %v1190
    %v1193 = vlaneseq
    %v1194 = vshrl.u32 %v1193, 7
    %v1195 = vsub.s32 0, %v1194
    %v1196 = vrot.slane %v1130, %v1195
    %v1197 = vmul.f32 %v278, %v1196
    %v1198 = vmul.f32 %v282, %v1196
    %v1199 = vadd.f32 %v1191, %v1197
    %v1200 = vadd.f32 %v1192, %v1198
    %v1201 = vlaneseq
    %v1202 = vshrl.u32 %v1201, 7
    %v1203 = vsub.s32 1, %v1202
    %v1204 = vrot.slane %v1130, %v1203
    %v1205 = vmul.f32 %v294, %v1204
    %v1206 = vmul.f32 %v298, %v1204
    %v1207 = vadd.f32 %v1199, %v1205
    %v1208 = vadd.f32 %v1200, %v1206
    %v1209 = vlog2.pop %v1207
    %v1210 = vmul.f32 %v1209, 0.6931472
    %v1211 = vlog2.pop %v1208
    %v1212 = vmul.f32 %v1211, 0.6931472
    %v1213 = vadd.f32 %v1124, %v1210
    %v1214 = vadd.f32 %v1124, %v1212
    %v1215 = vsub.f32 %v112, %v1213
    %v1216 = vsub.f32 %v114, %v1214
    %v1217 = vsub.f32 %v1009, %v1114
    %v1218 = vsub.f32 %v1010, %v1115
    %v1219 = vand.u32 2147483647, %v1217
    %v1220 = vand.u32 2147483647, %v1218
    %v1221 = vsel %vm422, %v1219, 0.0
    %v1222 = vsel %vm422, %v1220, 0.0
    %v1223 = vsel %vm35, %v1221, -inf
    %v1224 = vsel %vm37, %v1222, -inf
    %v1225 = vmax.f32 %v1223, %v1224
    %1226 = vmax.xlane.f32.xlu0 %v1225
    %v1227 = vpop.xlane.xlu0 %1226
    %v1228 = vrot.slane %v1227, 4
    %v1229 = vmax.f32 %v1227, %v1228
    %v1230 = vrot.slane %v1229, 2
    %v1231 = vmax.f32 %v1229, %v1230
    %v1232 = vrot.slane %v1231, 1
    %v1233 = vmax.f32 %v1231, %v1232
    %s1234 = vtos %v1233
    %v1235 = vsub.f32 %v1011, %v1215
    %v1236 = vsub.f32 %v1012, %v1216
    %v1237 = vand.u32 2147483647, %v1235
    %v1238 = vand.u32 2147483647, %v1236
    %v1239 = vsel %vm422, %v1237, 0.0
    %v1240 = vsel %vm422, %v1238, 0.0
    %v1241 = vsel %vm35, %v1239, -inf
    %v1242 = vsel %vm37, %v1240, -inf
    %v1243 = vmax.f32 %v1241, %v1242
    %1244 = vmax.xlane.f32.xlu0 %v1243
    %v1245 = vpop.xlane.xlu0 %1244
    %v1246 = vrot.slane %v1245, 4
    %v1247 = vmax.f32 %v1245, %v1246
    %v1248 = vrot.slane %v1247, 2
    %v1249 = vmax.f32 %v1247, %v1248
    %v1250 = vrot.slane %v1249, 1
    %v1251 = vmax.f32 %v1249, %v1250
    %s1252 = vtos %v1251
    %p1253 = scmp.lt.f32.partialorder %s1234, 0.0001
    %p1254 = scmp.lt.f32.partialorder %s1252, 0.0001
    %p1255 = pnand %p1253, %p1254
    %p1256 = pneg %p1255
    %p1257 = pnand %p1256, %p1014
    %p1258 = pneg %p1257
    %p1259 = scmp.eq.s32.totalorder %s1005, 0
    %p1260 = pnand %p1259, %p1258
    %p1261 = pneg %p1260
    %s1262 = scalar_select %p1261, 1, 0
    %v1263 = vstv %s1262
    %vm1264 = vcmp.eq.s32.totalorder %v1263, 1
    %v1265 = vsel %vm1264, %v1009, %v999
    %v1266 = vsel %vm1264, %v1010, %v1000
    %v1267 = vsel %vm1264, %v1011, %v1001
    %v1268 = vsel %vm1264, %v1012, %v1002
    %s1269 = scalar_select %p1258, 1, 0
    %p1270 = scmp.gt.s32.totalorder %s1005, %s1269
    %s1271 = scalar_select %p1270, %s1005, %s1269
    %s1272 = scalar_select %p1014, 1, 0
    %v1273 = vstv %s1272
    %vm1274 = vcmp.eq.s32.totalorder %v1273, 1
    %v1275 = vsel %vm1274, %v1114, %v1009
    %v1276 = vsel %vm1274, %v1115, %v1010
    %v1277 = vsel %vm1274, %v1215, %v1011
    %v1278 = vsel %vm1274, %v1216, %v1012
    %s1279 = sadd.s32 %s1013, %s1272
    %p1280 = scmp.lt.s32.totalorder %s1279, 100
    %v1281 = vsel %vm35, %v1277, -inf
    %v1282 = vsel %vm37, %v1278, -inf
    %v1283 = vmax.f32 %v1281, %v1282
    %v1284 = vrot.slane %v1283, 4
    %v1285 = vmax.f32 %v1283, %v1284
    %v1286 = vrot.slane %v1285, 2
    %v1287 = vmax.f32 %v1285, %v1286
    %v1288 = vrot.slane %v1287, 1
    %v1289 = vmax.f32 %v1287, %v1288
    %v1290 = vsub.f32 %v1277, %v1289
    %v1291 = vsub.f32 %v1278, %v1289
    %v1292 = vmul.f32 %v1290, 1.442695
    %v1293 = vpow.pop %v1292
    %v1294 = vmul.f32 %v1291, 1.442695
    %v1295 = vpow.pop %v1294
    %v1296 = vlaneseq
    %v1297 = vshrl.u32 %v1296, 7
    %v1298 = vsub.s32 0, %v1297
    %v1299 = vrot.slane %v1293, %v1298
    %v1300 = vmul.f32 %v151, %v1299
    %v1301 = vmul.f32 %v156, %v1299
    %v1302 = vlaneseq
    %v1303 = vshrl.u32 %v1302, 7
    %v1304 = vsub.s32 1, %v1303
    %v1305 = vrot.slane %v1293, %v1304
    %v1306 = vmul.f32 %v166, %v1305
    %v1307 = vmul.f32 %v170, %v1305
    %v1308 = vadd.f32 %v1300, %v1306
    %v1309 = vadd.f32 %v1301, %v1307
    %v1310 = vlaneseq
    %v1311 = vshrl.u32 %v1310, 7
    %v1312 = vsub.s32 2, %v1311
    %v1313 = vrot.slane %v1293, %v1312
    %v1314 = vmul.f32 %v182, %v1313
    %v1315 = vmul.f32 %v186, %v1313
    %v1316 = vadd.f32 %v1308, %v1314
    %v1317 = vadd.f32 %v1309, %v1315
    %v1318 = vlaneseq
    %v1319 = vshrl.u32 %v1318, 7
    %v1320 = vsub.s32 3, %v1319
    %v1321 = vrot.slane %v1293, %v1320
    %v1322 = vmul.f32 %v198, %v1321
    %v1323 = vmul.f32 %v202, %v1321
    %v1324 = vadd.f32 %v1316, %v1322
    %v1325 = vadd.f32 %v1317, %v1323
    %v1326 = vlaneseq
    %v1327 = vshrl.u32 %v1326, 7
    %v1328 = vsub.s32 4, %v1327
    %v1329 = vrot.slane %v1293, %v1328
    %v1330 = vmul.f32 %v214, %v1329
    %v1331 = vmul.f32 %v218, %v1329
    %v1332 = vadd.f32 %v1324, %v1330
    %v1333 = vadd.f32 %v1325, %v1331
    %v1334 = vlaneseq
    %v1335 = vshrl.u32 %v1334, 7
    %v1336 = vsub.s32 5, %v1335
    %v1337 = vrot.slane %v1293, %v1336
    %v1338 = vmul.f32 %v230, %v1337
    %v1339 = vmul.f32 %v234, %v1337
    %v1340 = vadd.f32 %v1332, %v1338
    %v1341 = vadd.f32 %v1333, %v1339
    %v1342 = vlaneseq
    %v1343 = vshrl.u32 %v1342, 7
    %v1344 = vsub.s32 6, %v1343
    %v1345 = vrot.slane %v1293, %v1344
    %v1346 = vmul.f32 %v246, %v1345
    %v1347 = vmul.f32 %v250, %v1345
    %v1348 = vadd.f32 %v1340, %v1346
    %v1349 = vadd.f32 %v1341, %v1347
    %v1350 = vlaneseq
    %v1351 = vshrl.u32 %v1350, 7
    %v1352 = vsub.s32 7, %v1351
    %v1353 = vrot.slane %v1293, %v1352
    %v1354 = vmul.f32 %v262, %v1353
    %v1355 = vmul.f32 %v266, %v1353
    %v1356 = vadd.f32 %v1348, %v1354
    %v1357 = vadd.f32 %v1349, %v1355
    %v1358 = vlaneseq
    %v1359 = vshrl.u32 %v1358, 7
    %v1360 = vsub.s32 0, %v1359
    %v1361 = vrot.slane %v1295, %v1360
    %v1362 = vmul.f32 %v278, %v1361
    %v1363 = vmul.f32 %v282, %v1361
    %v1364 = vadd.f32 %v1356, %v1362
    %v1365 = vadd.f32 %v1357, %v1363
    %v1366 = vlaneseq
    %v1367 = vshrl.u32 %v1366, 7
    %v1368 = vsub.s32 1, %v1367
    %v1369 = vrot.slane %v1295, %v1368
    %v1370 = vmul.f32 %v294, %v1369
    %v1371 = vmul.f32 %v298, %v1369
    %v1372 = vadd.f32 %v1364, %v1370
    %v1373 = vadd.f32 %v1365, %v1371
    %v1374 = vlog2.pop %v1372
    %v1375 = vmul.f32 %v1374, 0.6931472
    %v1376 = vlog2.pop %v1373
    %v1377 = vmul.f32 %v1376, 0.6931472
    %v1378 = vadd.f32 %v1289, %v1375
    %v1379 = vadd.f32 %v1289, %v1377
    %v1380 = vsub.f32 %v106, %v1378
    %v1381 = vsub.f32 %v108, %v1379
    %v1382 = vsel %vm35, %v1380, -inf
    %v1383 = vsel %vm37, %v1381, -inf
    %v1384 = vmax.f32 %v1382, %v1383
    %v1385 = vrot.slane %v1384, 4
    %v1386 = vmax.f32 %v1384, %v1385
    %v1387 = vrot.slane %v1386, 2
    %v1388 = vmax.f32 %v1386, %v1387
    %v1389 = vrot.slane %v1388, 1
    %v1390 = vmax.f32 %v1388, %v1389
    %v1391 = vsub.f32 %v1380, %v1390
    %v1392 = vsub.f32 %v1381, %v1390
    %v1393 = vmul.f32 %v1391, 1.442695
    %v1394 = vpow.pop %v1393
    %v1395 = vmul.f32 %v1392, 1.442695
    %v1396 = vpow.pop %v1395
    %v1397 = vlaneseq
    %v1398 = vshrl.u32 %v1397, 7
    %v1399 = vsub.s32 0, %v1398
    %v1400 = vrot.slane %v1394, %v1399
    %v1401 = vmul.f32 %v151, %v1400
    %v1402 = vmul.f32 %v156, %v1400
    %v1403 = vlaneseq
    %v1404 = vshrl.u32 %v1403, 7
    %v1405 = vsub.s32 1, %v1404
    %v1406 = vrot.slane %v1394, %v1405
    %v1407 = vmul.f32 %v166, %v1406
    %v1408 = vmul.f32 %v170, %v1406
    %v1409 = vadd.f32 %v1401, %v1407
    %v1410 = vadd.f32 %v1402, %v1408
    %v1411 = vlaneseq
    %v1412 = vshrl.u32 %v1411, 7
    %v1413 = vsub.s32 2, %v1412
    %v1414 = vrot.slane %v1394, %v1413
    %v1415 = vmul.f32 %v182, %v1414
    %v1416 = vmul.f32 %v186, %v1414
    %v1417 = vadd.f32 %v1409, %v1415
    %v1418 = vadd.f32 %v1410, %v1416
    %v1419 = vlaneseq
    %v1420 = vshrl.u32 %v1419, 7
    %v1421 = vsub.s32 3, %v1420
    %v1422 = vrot.slane %v1394, %v1421
    %v1423 = vmul.f32 %v198, %v1422
    %v1424 = vmul.f32 %v202, %v1422
    %v1425 = vadd.f32 %v1417, %v1423
    %v1426 = vadd.f32 %v1418, %v1424
    %v1427 = vlaneseq
    %v1428 = vshrl.u32 %v1427, 7
    %v1429 = vsub.s32 4, %v1428
    %v1430 = vrot.slane %v1394, %v1429
    %v1431 = vmul.f32 %v214, %v1430
    %v1432 = vmul.f32 %v218, %v1430
    %v1433 = vadd.f32 %v1425, %v1431
    %v1434 = vadd.f32 %v1426, %v1432
    %v1435 = vlaneseq
    %v1436 = vshrl.u32 %v1435, 7
    %v1437 = vsub.s32 5, %v1436
    %v1438 = vrot.slane %v1394, %v1437
    %v1439 = vmul.f32 %v230, %v1438
    %v1440 = vmul.f32 %v234, %v1438
    %v1441 = vadd.f32 %v1433, %v1439
    %v1442 = vadd.f32 %v1434, %v1440
    %v1443 = vlaneseq
    %v1444 = vshrl.u32 %v1443, 7
    %v1445 = vsub.s32 6, %v1444
    %v1446 = vrot.slane %v1394, %v1445
    %v1447 = vmul.f32 %v246, %v1446
    %v1448 = vmul.f32 %v250, %v1446
    %v1449 = vadd.f32 %v1441, %v1447
    %v1450 = vadd.f32 %v1442, %v1448
    %v1451 = vlaneseq
    %v1452 = vshrl.u32 %v1451, 7
    %v1453 = vsub.s32 7, %v1452
    %v1454 = vrot.slane %v1394, %v1453
    %v1455 = vmul.f32 %v262, %v1454
    %v1456 = vmul.f32 %v266, %v1454
    %v1457 = vadd.f32 %v1449, %v1455
    %v1458 = vadd.f32 %v1450, %v1456
    %v1459 = vlaneseq
    %v1460 = vshrl.u32 %v1459, 7
    %v1461 = vsub.s32 0, %v1460
    %v1462 = vrot.slane %v1396, %v1461
    %v1463 = vmul.f32 %v278, %v1462
    %v1464 = vmul.f32 %v282, %v1462
    %v1465 = vadd.f32 %v1457, %v1463
    %v1466 = vadd.f32 %v1458, %v1464
    %v1467 = vlaneseq
    %v1468 = vshrl.u32 %v1467, 7
    %v1469 = vsub.s32 1, %v1468
    %v1470 = vrot.slane %v1396, %v1469
    %v1471 = vmul.f32 %v294, %v1470
    %v1472 = vmul.f32 %v298, %v1470
    %v1473 = vadd.f32 %v1465, %v1471
    %v1474 = vadd.f32 %v1466, %v1472
    %v1475 = vlog2.pop %v1473
    %v1476 = vmul.f32 %v1475, 0.6931472
    %v1477 = vlog2.pop %v1474
    %v1478 = vmul.f32 %v1477, 0.6931472
    %v1479 = vadd.f32 %v1390, %v1476
    %v1480 = vadd.f32 %v1390, %v1478
    %v1481 = vsub.f32 %v112, %v1479
    %v1482 = vsub.f32 %v114, %v1480
    %v1483 = vsub.f32 %v1275, %v1380
    %v1484 = vsub.f32 %v1276, %v1381
    %v1485 = vand.u32 2147483647, %v1483
    %v1486 = vand.u32 2147483647, %v1484
    %v1487 = vsel %vm422, %v1485, 0.0
    %v1488 = vsel %vm422, %v1486, 0.0
    %v1489 = vsel %vm35, %v1487, -inf
    %v1490 = vsel %vm37, %v1488, -inf
    %v1491 = vmax.f32 %v1489, %v1490
    %1492 = vmax.xlane.f32.xlu0 %v1491
    %v1493 = vpop.xlane.xlu0 %1492
    %v1494 = vrot.slane %v1493, 4
    %v1495 = vmax.f32 %v1493, %v1494
    %v1496 = vrot.slane %v1495, 2
    %v1497 = vmax.f32 %v1495, %v1496
    %v1498 = vrot.slane %v1497, 1
    %v1499 = vmax.f32 %v1497, %v1498
    %s1500 = vtos %v1499
    %v1501 = vsub.f32 %v1277, %v1481
    %v1502 = vsub.f32 %v1278, %v1482
    %v1503 = vand.u32 2147483647, %v1501
    %v1504 = vand.u32 2147483647, %v1502
    %v1505 = vsel %vm422, %v1503, 0.0
    %v1506 = vsel %vm422, %v1504, 0.0
    %v1507 = vsel %vm35, %v1505, -inf
    %v1508 = vsel %vm37, %v1506, -inf
    %v1509 = vmax.f32 %v1507, %v1508
    %1510 = vmax.xlane.f32.xlu0 %v1509
    %v1511 = vpop.xlane.xlu0 %1510
    %v1512 = vrot.slane %v1511, 4
    %v1513 = vmax.f32 %v1511, %v1512
    %v1514 = vrot.slane %v1513, 2
    %v1515 = vmax.f32 %v1513, %v1514
    %v1516 = vrot.slane %v1515, 1
    %v1517 = vmax.f32 %v1515, %v1516
    %s1518 = vtos %v1517
    %p1519 = scmp.lt.f32.partialorder %s1500, 0.0001
    %p1520 = scmp.lt.f32.partialorder %s1518, 0.0001
    %p1521 = pnand %p1519, %p1520
    %p1522 = pneg %p1521
    %p1523 = pnand %p1522, %p1280
    %p1524 = pneg %p1523
    %p1525 = scmp.eq.s32.totalorder %s1271, 0
    %p1526 = pnand %p1525, %p1524
    %p1527 = pneg %p1526
    %s1528 = scalar_select %p1527, 1, 0
    %v1529 = vstv %s1528
    %vm1530 = vcmp.eq.s32.totalorder %v1529, 1
    %v1531 = vsel %vm1530, %v1275, %v1265
    %v1532 = vsel %vm1530, %v1276, %v1266
    %v1533 = vsel %vm1530, %v1277, %v1267
    %v1534 = vsel %vm1530, %v1278, %v1268
    %s1535 = scalar_select %p1524, 1, 0
    %p1536 = scmp.gt.s32.totalorder %s1271, %s1535
    %s1537 = scalar_select %p1536, %s1271, %s1535
    %s1538 = scalar_select %p1280, 1, 0
    %v1539 = vstv %s1538
    %vm1540 = vcmp.eq.s32.totalorder %v1539, 1
    %v1541 = vsel %vm1540, %v1380, %v1275
    %v1542 = vsel %vm1540, %v1381, %v1276
    %v1543 = vsel %vm1540, %v1481, %v1277
    %v1544 = vsel %vm1540, %v1482, %v1278
    %s1545 = sadd.s32 %s1279, %s1538
  $region26: #{sinkhorn_distance.1} parent=0 // loop_footer
    _
  $region27: #{sinkhorn_distance.1} parent=0 // loop_footer_branch
    %115 = sbr.rel target = $region23
  $region28: #{sinkhorn_distance.1} parent=0 // loop_exit
    _
  %p1546 = scmp.gt.s32.totalorder %s125, 0
  %s1547 = scalar_select %p1546, 1, 0
  %v1548 = vstv %s1547
  %vm1549 = vcmp.eq.s32.totalorder %v1548, 1
  %v1550 = vsel %vm1549, %v121, %v117
  %v1551 = vsel %vm1549, %v122, %v118
  %v1552 = vsel %vm1549, %v123, %v119
  %v1553 = vsel %vm1549, %v124, %v120
  %v1556 = vcombine.high %v1550, %v1550
  %v1558 = vunpack.c.l.s4 1966171168
  %v1559 = vunpack.c.0.s8 %v1558
  %v1560 = vlaneseq
  %v1561 = vshrl.u32 %v1560, 7
  %v1562 = vsub.s32 %v1559, %v1561
  %v1563 = vrot.slane %v1550, %v1562
  %v1565 = vunpack.c.l.s4 1966171168
  %v1566 = vunpack.c.0.s8 %v1565
  %v1567 = vlaneseq
  %v1568 = vshrl.u32 %v1567, 7
  %v1569 = vsub.s32 %v1566, %v1568
  %v1570 = vrot.slane %v1556, %v1569
  %v1571 = vcombine.high %v1563, %v1563
  %v1572 = vcombine.high %v1570, %v1570
  %v1574 = vunpack.c.l.s4 1966171168
  %v1575 = vunpack.c.0.s8 %v1574
  %v1576 = vlaneseq
  %v1577 = vshrl.u32 %v1576, 7
  %v1578 = vsub.s32 %v1575, %v1577
  %v1579 = vrot.slane %v1563, %v1578
  %v1581 = vunpack.c.l.s4 1966171168
  %v1582 = vunpack.c.0.s8 %v1581
  %v1583 = vlaneseq
  %v1584 = vshrl.u32 %v1583, 7
  %v1585 = vsub.s32 %v1582, %v1584
  %v1586 = vrot.slane %v1570, %v1585
  %v1588 = vunpack.c.l.s4 1966171168
  %v1589 = vunpack.c.0.s8 %v1588
  %v1590 = vlaneseq
  %v1591 = vshrl.u32 %v1590, 7
  %v1592 = vsub.s32 %v1589, %v1591
  %v1593 = vrot.slane %v1571, %v1592
  %v1595 = vunpack.c.l.s4 1966171168
  %v1596 = vunpack.c.0.s8 %v1595
  %v1597 = vlaneseq
  %v1598 = vshrl.u32 %v1597, 7
  %v1599 = vsub.s32 %v1596, %v1598
  %v1600 = vrot.slane %v1572, %v1599
  %v1601 = vcombine.high %v1579, %v1579
  %v1602 = vcombine.high %v1586, %v1586
  %v1603 = vcombine.high %v1593, %v1593
  %v1604 = vcombine.high %v1600, %v1600
  %v1606 = vunpack.c.l.s4 1966171168
  %v1607 = vunpack.c.0.s8 %v1606
  %v1608 = vlaneseq
  %v1609 = vshrl.u32 %v1608, 7
  %v1610 = vsub.s32 %v1607, %v1609
  %v1611 = vrot.slane %v1551, %v1610
  %v1612 = vcombine.high %v1611, %v1611
  %v1614 = vunpack.c.l.s4 1966171168
  %v1615 = vunpack.c.0.s8 %v1614
  %v1616 = vlaneseq
  %v1617 = vshrl.u32 %v1616, 7
  %v1618 = vsub.s32 %v1615, %v1617
  %v1619 = vrot.slane %v1611, %v1618
  %v1621 = vunpack.c.l.s4 1966171168
  %v1622 = vunpack.c.0.s8 %v1621
  %v1623 = vlaneseq
  %v1624 = vshrl.u32 %v1623, 7
  %v1625 = vsub.s32 %v1622, %v1624
  %v1626 = vrot.slane %v1612, %v1625
  %v1627 = vlaneseq
  %v1628 = vshrl.u32 %v1627, 7
  %v1629 = vsub.s32 0, %v1628
  %v1630 = vrot.slane %v24, %v1629
  %1632 = vbcast.lane.b32.xlu0 %v1630, 256
  %v1633 = vpop.permute.xlu0 %1632
  %s1635 = sor.u32 256, 8
  %1636 = vbcast.lane.b32.xlu0 %v1630, %s1635
  %v1637 = vpop.permute.xlu0 %1636
  %v1638 = vlaneseq
  %v1639 = vshrl.u32 %v1638, 7
  %v1640 = vsub.s32 1, %v1639
  %v1641 = vrot.slane %v24, %v1640
  %1643 = vbcast.lane.b32.xlu0 %v1641, 256
  %v1644 = vpop.permute.xlu0 %1643
  %s1646 = sor.u32 256, 8
  %1647 = vbcast.lane.b32.xlu0 %v1641, %s1646
  %v1648 = vpop.permute.xlu0 %1647
  %v1649 = vlaneseq
  %v1650 = vshrl.u32 %v1649, 7
  %v1651 = vsub.s32 2, %v1650
  %v1652 = vrot.slane %v24, %v1651
  %1654 = vbcast.lane.b32.xlu0 %v1652, 256
  %v1655 = vpop.permute.xlu0 %1654
  %s1657 = sor.u32 256, 8
  %1658 = vbcast.lane.b32.xlu0 %v1652, %s1657
  %v1659 = vpop.permute.xlu0 %1658
  %v1660 = vlaneseq
  %v1661 = vshrl.u32 %v1660, 7
  %v1662 = vsub.s32 3, %v1661
  %v1663 = vrot.slane %v24, %v1662
  %1665 = vbcast.lane.b32.xlu0 %v1663, 256
  %v1666 = vpop.permute.xlu0 %1665
  %s1668 = sor.u32 256, 8
  %1669 = vbcast.lane.b32.xlu0 %v1663, %s1668
  %v1670 = vpop.permute.xlu0 %1669
  %v1671 = vlaneseq
  %v1672 = vshrl.u32 %v1671, 7
  %v1673 = vsub.s32 4, %v1672
  %v1674 = vrot.slane %v24, %v1673
  %1676 = vbcast.lane.b32.xlu0 %v1674, 256
  %v1677 = vpop.permute.xlu0 %1676
  %s1679 = sor.u32 256, 8
  %1680 = vbcast.lane.b32.xlu0 %v1674, %s1679
  %v1681 = vpop.permute.xlu0 %1680
  %v1682 = vlaneseq
  %v1683 = vshrl.u32 %v1682, 7
  %v1684 = vsub.s32 5, %v1683
  %v1685 = vrot.slane %v24, %v1684
  %1687 = vbcast.lane.b32.xlu0 %v1685, 256
  %v1688 = vpop.permute.xlu0 %1687
  %s1690 = sor.u32 256, 8
  %1691 = vbcast.lane.b32.xlu0 %v1685, %s1690
  %v1692 = vpop.permute.xlu0 %1691
  %v1693 = vlaneseq
  %v1694 = vshrl.u32 %v1693, 7
  %v1695 = vsub.s32 6, %v1694
  %v1696 = vrot.slane %v24, %v1695
  %1698 = vbcast.lane.b32.xlu0 %v1696, 256
  %v1699 = vpop.permute.xlu0 %1698
  %s1701 = sor.u32 256, 8
  %1702 = vbcast.lane.b32.xlu0 %v1696, %s1701
  %v1703 = vpop.permute.xlu0 %1702
  %v1704 = vlaneseq
  %v1705 = vshrl.u32 %v1704, 7
  %v1706 = vsub.s32 7, %v1705
  %v1707 = vrot.slane %v24, %v1706
  %1709 = vbcast.lane.b32.xlu0 %v1707, 256
  %v1710 = vpop.permute.xlu0 %1709
  %s1712 = sor.u32 256, 8
  %1713 = vbcast.lane.b32.xlu0 %v1707, %s1712
  %v1714 = vpop.permute.xlu0 %1713
  %v1715 = vlaneseq
  %v1716 = vshrl.u32 %v1715, 7
  %v1717 = vsub.s32 0, %v1716
  %v1718 = vrot.slane %v25, %v1717
  %1720 = vbcast.lane.b32.xlu0 %v1718, 256
  %v1721 = vpop.permute.xlu0 %1720
  %s1723 = sor.u32 256, 8
  %1724 = vbcast.lane.b32.xlu0 %v1718, %s1723
  %v1725 = vpop.permute.xlu0 %1724
  %v1726 = vlaneseq
  %v1727 = vshrl.u32 %v1726, 7
  %v1728 = vsub.s32 1, %v1727
  %v1729 = vrot.slane %v25, %v1728
  %1731 = vbcast.lane.b32.xlu0 %v1729, 256
  %v1732 = vpop.permute.xlu0 %1731
  %s1734 = sor.u32 256, 8
  %1735 = vbcast.lane.b32.xlu0 %v1729, %s1734
  %v1736 = vpop.permute.xlu0 %1735
  %v1737 = vlaneseq
  %v1738 = vshrl.u32 %v1737, 7
  %v1739 = vsub.s32 0, %v1738
  %v1740 = vrot.slane %v1579, %v1739
  %v1741 = vlaneseq
  %v1742 = vshrl.u32 %v1741, 7
  %v1743 = vsub.s32 0, %v1742
  %v1744 = vrot.slane %v1593, %v1743
  %v1745 = vlaneseq
  %v1746 = vshrl.u32 %v1745, 7
  %v1747 = vsub.s32 0, %v1746
  %v1748 = vrot.slane %v1601, %v1747
  %v1749 = vlaneseq
  %v1750 = vshrl.u32 %v1749, 7
  %v1751 = vsub.s32 0, %v1750
  %v1752 = vrot.slane %v1603, %v1751
  %v1753 = vlaneseq
  %v1754 = vshrl.u32 %v1753, 7
  %v1755 = vsub.s32 0, %v1754
  %v1756 = vrot.slane %v1586, %v1755
  %v1757 = vlaneseq
  %v1758 = vshrl.u32 %v1757, 7
  %v1759 = vsub.s32 0, %v1758
  %v1760 = vrot.slane %v1600, %v1759
  %v1761 = vlaneseq
  %v1762 = vshrl.u32 %v1761, 7
  %v1763 = vsub.s32 0, %v1762
  %v1764 = vrot.slane %v1602, %v1763
  %v1765 = vlaneseq
  %v1766 = vshrl.u32 %v1765, 7
  %v1767 = vsub.s32 0, %v1766
  %v1768 = vrot.slane %v1604, %v1767
  %v1769 = vlaneseq
  %v1770 = vshrl.u32 %v1769, 7
  %v1771 = vsub.s32 0, %v1770
  %v1772 = vrot.slane %v1619, %v1771
  %v1773 = vlaneseq
  %v1774 = vshrl.u32 %v1773, 7
  %v1775 = vsub.s32 0, %v1774
  %v1776 = vrot.slane %v1626, %v1775
  %v1787 = vadd.f32 %v1740, %v1633
  %v1788 = vadd.f32 %v1740, %v1637
  %v1789 = vadd.f32 %v1744, %v1644
  %v1790 = vadd.f32 %v1744, %v1648
  %v1791 = vadd.f32 %v1748, %v1655
  %v1792 = vadd.f32 %v1748, %v1659
  %v1793 = vadd.f32 %v1752, %v1666
  %v1794 = vadd.f32 %v1752, %v1670
  %v1795 = vadd.f32 %v1756, %v1677
  %v1796 = vadd.f32 %v1756, %v1681
  %v1797 = vadd.f32 %v1760, %v1688
  %v1798 = vadd.f32 %v1760, %v1692
  %v1799 = vadd.f32 %v1764, %v1699
  %v1800 = vadd.f32 %v1764, %v1703
  %v1801 = vadd.f32 %v1768, %v1710
  %v1802 = vadd.f32 %v1768, %v1714
  %v1803 = vadd.f32 %v1772, %v1721
  %v1804 = vadd.f32 %v1772, %v1725
  %v1805 = vadd.f32 %v1776, %v1732
  %v1806 = vadd.f32 %v1776, %v1736
  %v1807 = vadd.f32 %v1787, %v1552
  %v1808 = vadd.f32 %v1788, %v1553
  %v1809 = vadd.f32 %v1789, %v1552
  %v1810 = vadd.f32 %v1790, %v1553
  %v1811 = vadd.f32 %v1791, %v1552
  %v1812 = vadd.f32 %v1792, %v1553
  %v1813 = vadd.f32 %v1793, %v1552
  %v1814 = vadd.f32 %v1794, %v1553
  %v1815 = vadd.f32 %v1795, %v1552
  %v1816 = vadd.f32 %v1796, %v1553
  %v1817 = vadd.f32 %v1797, %v1552
  %v1818 = vadd.f32 %v1798, %v1553
  %v1819 = vadd.f32 %v1799, %v1552
  %v1820 = vadd.f32 %v1800, %v1553
  %v1821 = vadd.f32 %v1801, %v1552
  %v1822 = vadd.f32 %v1802, %v1553
  %v1823 = vadd.f32 %v1803, %v1552
  %v1824 = vadd.f32 %v1804, %v1553
  %v1825 = vadd.f32 %v1805, %v1552
  %v1826 = vadd.f32 %v1806, %v1553
  %v1827 = vmul.f32 %v1807, 1.442695
  %v1828 = vpow.pop %v1827
  %v1829 = vmul.f32 %v1808, 1.442695
  %v1830 = vpow.pop %v1829
  %v1831 = vmul.f32 %v1809, 1.442695
  %v1832 = vpow.pop %v1831
  %v1833 = vmul.f32 %v1810, 1.442695
  %v1834 = vpow.pop %v1833
  %v1835 = vmul.f32 %v1811, 1.442695
  %v1836 = vpow.pop %v1835
  %v1837 = vmul.f32 %v1812, 1.442695
  %v1838 = vpow.pop %v1837
  %v1839 = vmul.f32 %v1813, 1.442695
  %v1840 = vpow.pop %v1839
  %v1841 = vmul.f32 %v1814, 1.442695
  %v1842 = vpow.pop %v1841
  %v1843 = vmul.f32 %v1815, 1.442695
  %v1844 = vpow.pop %v1843
  %v1845 = vmul.f32 %v1816, 1.442695
  %v1846 = vpow.pop %v1845
  %v1847 = vmul.f32 %v1817, 1.442695
  %v1848 = vpow.pop %v1847
  %v1849 = vmul.f32 %v1818, 1.442695
  %v1850 = vpow.pop %v1849
  %v1851 = vmul.f32 %v1819, 1.442695
  %v1852 = vpow.pop %v1851
  %v1853 = vmul.f32 %v1820, 1.442695
  %v1854 = vpow.pop %v1853
  %v1855 = vmul.f32 %v1821, 1.442695
  %v1856 = vpow.pop %v1855
  %v1857 = vmul.f32 %v1822, 1.442695
  %v1858 = vpow.pop %v1857
  %v1859 = vmul.f32 %v1823, 1.442695
  %v1860 = vpow.pop %v1859
  %v1861 = vmul.f32 %v1824, 1.442695
  %v1862 = vpow.pop %v1861
  %v1863 = vmul.f32 %v1825, 1.442695
  %v1864 = vpow.pop %v1863
  %v1865 = vmul.f32 %v1826, 1.442695
  %v1866 = vpow.pop %v1865
  %v1867 = vadd.f32 %v1828, 1e-06
  %v1868 = vadd.f32 %v1830, 1e-06
  %v1869 = vadd.f32 %v1832, 1e-06
  %v1870 = vadd.f32 %v1834, 1e-06
  %v1871 = vadd.f32 %v1836, 1e-06
  %v1872 = vadd.f32 %v1838, 1e-06
  %v1873 = vadd.f32 %v1840, 1e-06
  %v1874 = vadd.f32 %v1842, 1e-06
  %v1875 = vadd.f32 %v1844, 1e-06
  %v1876 = vadd.f32 %v1846, 1e-06
  %v1877 = vadd.f32 %v1848, 1e-06
  %v1878 = vadd.f32 %v1850, 1e-06
  %v1879 = vadd.f32 %v1852, 1e-06
  %v1880 = vadd.f32 %v1854, 1e-06
  %v1881 = vadd.f32 %v1856, 1e-06
  %v1882 = vadd.f32 %v1858, 1e-06
  %v1883 = vadd.f32 %v1860, 1e-06
  %v1884 = vadd.f32 %v1862, 1e-06
  %v1885 = vadd.f32 %v1864, 1e-06
  %v1886 = vadd.f32 %v1866, 1e-06
  %v1887 = vsel %vm35, %v1867, 0.0
  %v1888 = vsel %vm37, %v1868, 0.0
  %v1889 = vadd.f32 %v1887, %v1888
  %v1890 = vrot.slane %v1889, 4
  %v1891 = vadd.f32 %v1889, %v1890
  %v1892 = vrot.slane %v1891, 2
  %v1893 = vadd.f32 %v1891, %v1892
  %v1894 = vrot.slane %v1893, 1
  %v1895 = vadd.f32 %v1893, %v1894
  %v1896 = vsel %vm35, %v1869, 0.0
  %v1897 = vsel %vm37, %v1870, 0.0
  %v1898 = vadd.f32 %v1896, %v1897
  %v1899 = vrot.slane %v1898, 4
  %v1900 = vadd.f32 %v1898, %v1899
  %v1901 = vrot.slane %v1900, 2
  %v1902 = vadd.f32 %v1900, %v1901
  %v1903 = vrot.slane %v1902, 1
  %v1904 = vadd.f32 %v1902, %v1903
  %v1905 = vsel %vm35, %v1871, 0.0
  %v1906 = vsel %vm37, %v1872, 0.0
  %v1907 = vadd.f32 %v1905, %v1906
  %v1908 = vrot.slane %v1907, 4
  %v1909 = vadd.f32 %v1907, %v1908
  %v1910 = vrot.slane %v1909, 2
  %v1911 = vadd.f32 %v1909, %v1910
  %v1912 = vrot.slane %v1911, 1
  %v1913 = vadd.f32 %v1911, %v1912
  %v1914 = vsel %vm35, %v1873, 0.0
  %v1915 = vsel %vm37, %v1874, 0.0
  %v1916 = vadd.f32 %v1914, %v1915
  %v1917 = vrot.slane %v1916, 4
  %v1918 = vadd.f32 %v1916, %v1917
  %v1919 = vrot.slane %v1918, 2
  %v1920 = vadd.f32 %v1918, %v1919
  %v1921 = vrot.slane %v1920, 1
  %v1922 = vadd.f32 %v1920, %v1921
  %v1923 = vsel %vm35, %v1875, 0.0
  %v1924 = vsel %vm37, %v1876, 0.0
  %v1925 = vadd.f32 %v1923, %v1924
  %v1926 = vrot.slane %v1925, 4
  %v1927 = vadd.f32 %v1925, %v1926
  %v1928 = vrot.slane %v1927, 2
  %v1929 = vadd.f32 %v1927, %v1928
  %v1930 = vrot.slane %v1929, 1
  %v1931 = vadd.f32 %v1929, %v1930
  %v1932 = vsel %vm35, %v1877, 0.0
  %v1933 = vsel %vm37, %v1878, 0.0
  %v1934 = vadd.f32 %v1932, %v1933
  %v1935 = vrot.slane %v1934, 4
  %v1936 = vadd.f32 %v1934, %v1935
  %v1937 = vrot.slane %v1936, 2
  %v1938 = vadd.f32 %v1936, %v1937
  %v1939 = vrot.slane %v1938, 1
  %v1940 = vadd.f32 %v1938, %v1939
  %v1941 = vsel %vm35, %v1879, 0.0
  %v1942 = vsel %vm37, %v1880, 0.0
  %v1943 = vadd.f32 %v1941, %v1942
  %v1944 = vrot.slane %v1943, 4
  %v1945 = vadd.f32 %v1943, %v1944
  %v1946 = vrot.slane %v1945, 2
  %v1947 = vadd.f32 %v1945, %v1946
  %v1948 = vrot.slane %v1947, 1
  %v1949 = vadd.f32 %v1947, %v1948
  %v1950 = vsel %vm35, %v1881, 0.0
  %v1951 = vsel %vm37, %v1882, 0.0
  %v1952 = vadd.f32 %v1950, %v1951
  %v1953 = vrot.slane %v1952, 4
  %v1954 = vadd.f32 %v1952, %v1953
  %v1955 = vrot.slane %v1954, 2
  %v1956 = vadd.f32 %v1954, %v1955
  %v1957 = vrot.slane %v1956, 1
  %v1958 = vadd.f32 %v1956, %v1957
  %v1959 = vsel %vm35, %v1883, 0.0
  %v1960 = vsel %vm37, %v1884, 0.0
  %v1961 = vadd.f32 %v1959, %v1960
  %v1962 = vrot.slane %v1961, 4
  %v1963 = vadd.f32 %v1961, %v1962
  %v1964 = vrot.slane %v1963, 2
  %v1965 = vadd.f32 %v1963, %v1964
  %v1966 = vrot.slane %v1965, 1
  %v1967 = vadd.f32 %v1965, %v1966
  %v1968 = vsel %vm35, %v1885, 0.0
  %v1969 = vsel %vm37, %v1886, 0.0
  %v1970 = vadd.f32 %v1968, %v1969
  %v1971 = vrot.slane %v1970, 4
  %v1972 = vadd.f32 %v1970, %v1971
  %v1973 = vrot.slane %v1972, 2
  %v1974 = vadd.f32 %v1972, %v1973
  %v1975 = vrot.slane %v1974, 1
  %v1976 = vadd.f32 %v1974, %v1975
  %vm1987 = vcmask 1041409
  %v1988 = vsel %vm1987, %v1904, %v1895
  %vm1989 = vcmask 1042434
  %v1990 = vsel %vm1989, %v1913, %v1988
  %vm1991 = vcmask 1043459
  %v1992 = vsel %vm1991, %v1922, %v1990
  %vm1993 = vcmask 1044484
  %v1994 = vsel %vm1993, %v1931, %v1992
  %vm1995 = vcmask 1045509
  %v1996 = vsel %vm1995, %v1940, %v1994
  %vm1997 = vcmask 1046534
  %v1998 = vsel %vm1997, %v1949, %v1996
  %vm1999 = vcmask 1047559
  %v2000 = vsel %vm1999, %v1958, %v1998
  %v2001 = vsel %vm1987, %v1976, %v1967
  %v2004 = vrcp.pop %v2000
  %v2005 = vmul.f32 %v76, %v2004
  %v2006 = vrcp.pop %v2001
  %v2007 = vmul.f32 %v77, %v2006
  %v2010 = vcombine.high %v2005, %v2005
  %v2012 = vunpack.c.l.s4 1966171168
  %v2013 = vunpack.c.0.s8 %v2012
  %v2014 = vlaneseq
  %v2015 = vshrl.u32 %v2014, 7
  %v2016 = vsub.s32 %v2013, %v2015
  %v2017 = vrot.slane %v2005, %v2016
  %v2019 = vunpack.c.l.s4 1966171168
  %v2020 = vunpack.c.0.s8 %v2019
  %v2021 = vlaneseq
  %v2022 = vshrl.u32 %v2021, 7
  %v2023 = vsub.s32 %v2020, %v2022
  %v2024 = vrot.slane %v2010, %v2023
  %v2025 = vcombine.high %v2017, %v2017
  %v2026 = vcombine.high %v2024, %v2024
  %v2028 = vunpack.c.l.s4 1966171168
  %v2029 = vunpack.c.0.s8 %v2028
  %v2030 = vlaneseq
  %v2031 = vshrl.u32 %v2030, 7
  %v2032 = vsub.s32 %v2029, %v2031
  %v2033 = vrot.slane %v2017, %v2032
  %v2035 = vunpack.c.l.s4 1966171168
  %v2036 = vunpack.c.0.s8 %v2035
  %v2037 = vlaneseq
  %v2038 = vshrl.u32 %v2037, 7
  %v2039 = vsub.s32 %v2036, %v2038
  %v2040 = vrot.slane %v2024, %v2039
  %v2042 = vunpack.c.l.s4 1966171168
  %v2043 = vunpack.c.0.s8 %v2042
  %v2044 = vlaneseq
  %v2045 = vshrl.u32 %v2044, 7
  %v2046 = vsub.s32 %v2043, %v2045
  %v2047 = vrot.slane %v2025, %v2046
  %v2049 = vunpack.c.l.s4 1966171168
  %v2050 = vunpack.c.0.s8 %v2049
  %v2051 = vlaneseq
  %v2052 = vshrl.u32 %v2051, 7
  %v2053 = vsub.s32 %v2050, %v2052
  %v2054 = vrot.slane %v2026, %v2053
  %v2055 = vcombine.high %v2033, %v2033
  %v2056 = vcombine.high %v2040, %v2040
  %v2057 = vcombine.high %v2047, %v2047
  %v2058 = vcombine.high %v2054, %v2054
  %v2060 = vunpack.c.l.s4 1966171168
  %v2061 = vunpack.c.0.s8 %v2060
  %v2062 = vlaneseq
  %v2063 = vshrl.u32 %v2062, 7
  %v2064 = vsub.s32 %v2061, %v2063
  %v2065 = vrot.slane %v2007, %v2064
  %v2066 = vcombine.high %v2065, %v2065
  %v2068 = vunpack.c.l.s4 1966171168
  %v2069 = vunpack.c.0.s8 %v2068
  %v2070 = vlaneseq
  %v2071 = vshrl.u32 %v2070, 7
  %v2072 = vsub.s32 %v2069, %v2071
  %v2073 = vrot.slane %v2065, %v2072
  %v2075 = vunpack.c.l.s4 1966171168
  %v2076 = vunpack.c.0.s8 %v2075
  %v2077 = vlaneseq
  %v2078 = vshrl.u32 %v2077, 7
  %v2079 = vsub.s32 %v2076, %v2078
  %v2080 = vrot.slane %v2066, %v2079
  %v2081 = vlaneseq
  %v2082 = vshrl.u32 %v2081, 7
  %v2083 = vsub.s32 0, %v2082
  %v2084 = vrot.slane %v2033, %v2083
  %v2085 = vlaneseq
  %v2086 = vshrl.u32 %v2085, 7
  %v2087 = vsub.s32 0, %v2086
  %v2088 = vrot.slane %v2047, %v2087
  %v2089 = vlaneseq
  %v2090 = vshrl.u32 %v2089, 7
  %v2091 = vsub.s32 0, %v2090
  %v2092 = vrot.slane %v2055, %v2091
  %v2093 = vlaneseq
  %v2094 = vshrl.u32 %v2093, 7
  %v2095 = vsub.s32 0, %v2094
  %v2096 = vrot.slane %v2057, %v2095
  %v2097 = vlaneseq
  %v2098 = vshrl.u32 %v2097, 7
  %v2099 = vsub.s32 0, %v2098
  %v2100 = vrot.slane %v2040, %v2099
  %v2101 = vlaneseq
  %v2102 = vshrl.u32 %v2101, 7
  %v2103 = vsub.s32 0, %v2102
  %v2104 = vrot.slane %v2054, %v2103
  %v2105 = vlaneseq
  %v2106 = vshrl.u32 %v2105, 7
  %v2107 = vsub.s32 0, %v2106
  %v2108 = vrot.slane %v2056, %v2107
  %v2109 = vlaneseq
  %v2110 = vshrl.u32 %v2109, 7
  %v2111 = vsub.s32 0, %v2110
  %v2112 = vrot.slane %v2058, %v2111
  %v2113 = vlaneseq
  %v2114 = vshrl.u32 %v2113, 7
  %v2115 = vsub.s32 0, %v2114
  %v2116 = vrot.slane %v2073, %v2115
  %v2117 = vlaneseq
  %v2118 = vshrl.u32 %v2117, 7
  %v2119 = vsub.s32 0, %v2118
  %v2120 = vrot.slane %v2080, %v2119
  %v2131 = vmul.f32 %v1867, %v2084
  %v2132 = vmul.f32 %v1868, %v2084
  %v2133 = vmul.f32 %v1869, %v2088
  %v2134 = vmul.f32 %v1870, %v2088
  %v2135 = vmul.f32 %v1871, %v2092
  %v2136 = vmul.f32 %v1872, %v2092
  %v2137 = vmul.f32 %v1873, %v2096
  %v2138 = vmul.f32 %v1874, %v2096
  %v2139 = vmul.f32 %v1875, %v2100
  %v2140 = vmul.f32 %v1876, %v2100
  %v2141 = vmul.f32 %v1877, %v2104
  %v2142 = vmul.f32 %v1878, %v2104
  %v2143 = vmul.f32 %v1879, %v2108
  %v2144 = vmul.f32 %v1880, %v2108
  %v2145 = vmul.f32 %v1881, %v2112
  %v2146 = vmul.f32 %v1882, %v2112
  %v2147 = vmul.f32 %v1883, %v2116
  %v2148 = vmul.f32 %v1884, %v2116
  %v2149 = vmul.f32 %v1885, %v2120
  %v2150 = vmul.f32 %v1886, %v2120
  %v2151 = vsel %vm35, %v2131, 0.0
  %v2152 = vsel %vm35, %v2133, 0.0
  %v2153 = vadd.f32 %v2151, %v2152
  %v2154 = vsel %vm35, %v2135, 0.0
  %v2155 = vadd.f32 %v2153, %v2154
  %v2156 = vsel %vm35, %v2137, 0.0
  %v2157 = vadd.f32 %v2155, %v2156
  %v2158 = vsel %vm35, %v2139, 0.0
  %v2159 = vadd.f32 %v2157, %v2158
  %v2160 = vsel %vm35, %v2141, 0.0
  %v2161 = vadd.f32 %v2159, %v2160
  %v2162 = vsel %vm35, %v2143, 0.0
  %v2163 = vadd.f32 %v2161, %v2162
  %v2164 = vsel %vm35, %v2145, 0.0
  %v2165 = vadd.f32 %v2163, %v2164
  %v2166 = vsel %vm35, %v2147, 0.0
  %v2167 = vadd.f32 %v2165, %v2166
  %v2168 = vsel %vm35, %v2149, 0.0
  %v2169 = vadd.f32 %v2167, %v2168
  %v2170 = vsel %vm37, %v2132, 0.0
  %v2171 = vsel %vm37, %v2134, 0.0
  %v2172 = vadd.f32 %v2170, %v2171
  %v2173 = vsel %vm37, %v2136, 0.0
  %v2174 = vadd.f32 %v2172, %v2173
  %v2175 = vsel %vm37, %v2138, 0.0
  %v2176 = vadd.f32 %v2174, %v2175
  %v2177 = vsel %vm37, %v2140, 0.0
  %v2178 = vadd.f32 %v2176, %v2177
  %v2179 = vsel %vm37, %v2142, 0.0
  %v2180 = vadd.f32 %v2178, %v2179
  %v2181 = vsel %vm37, %v2144, 0.0
  %v2182 = vadd.f32 %v2180, %v2181
  %v2183 = vsel %vm37, %v2146, 0.0
  %v2184 = vadd.f32 %v2182, %v2183
  %v2185 = vsel %vm37, %v2148, 0.0
  %v2186 = vadd.f32 %v2184, %v2185
  %v2187 = vsel %vm37, %v2150, 0.0
  %v2188 = vadd.f32 %v2186, %v2187
  %v2189 = vrcp.pop %v2169
  %v2190 = vmul.f32 %v101, %v2189
  %v2191 = vrcp.pop %v2188
  %v2192 = vmul.f32 %v102, %v2191
  %v2193 = vlaneseq
  %v2194 = vshrl.u32 %v2193, 7
  %v2195 = vsub.s32 0, %v2194
  %v2196 = vrot.slane %v20, %v2195
  %2198 = vbcast.lane.b32.xlu0 %v2196, 256
  %v2199 = vpop.permute.xlu0 %2198
  %s2201 = sor.u32 256, 8
  %2202 = vbcast.lane.b32.xlu0 %v2196, %s2201
  %v2203 = vpop.permute.xlu0 %2202
  %v2204 = vlaneseq
  %v2205 = vshrl.u32 %v2204, 7
  %v2206 = vsub.s32 1, %v2205
  %v2207 = vrot.slane %v20, %v2206
  %2209 = vbcast.lane.b32.xlu0 %v2207, 256
  %v2210 = vpop.permute.xlu0 %2209
  %s2212 = sor.u32 256, 8
  %2213 = vbcast.lane.b32.xlu0 %v2207, %s2212
  %v2214 = vpop.permute.xlu0 %2213
  %v2215 = vlaneseq
  %v2216 = vshrl.u32 %v2215, 7
  %v2217 = vsub.s32 2, %v2216
  %v2218 = vrot.slane %v20, %v2217
  %2220 = vbcast.lane.b32.xlu0 %v2218, 256
  %v2221 = vpop.permute.xlu0 %2220
  %s2223 = sor.u32 256, 8
  %2224 = vbcast.lane.b32.xlu0 %v2218, %s2223
  %v2225 = vpop.permute.xlu0 %2224
  %v2226 = vlaneseq
  %v2227 = vshrl.u32 %v2226, 7
  %v2228 = vsub.s32 3, %v2227
  %v2229 = vrot.slane %v20, %v2228
  %2231 = vbcast.lane.b32.xlu0 %v2229, 256
  %v2232 = vpop.permute.xlu0 %2231
  %s2234 = sor.u32 256, 8
  %2235 = vbcast.lane.b32.xlu0 %v2229, %s2234
  %v2236 = vpop.permute.xlu0 %2235
  %v2237 = vlaneseq
  %v2238 = vshrl.u32 %v2237, 7
  %v2239 = vsub.s32 4, %v2238
  %v2240 = vrot.slane %v20, %v2239
  %2242 = vbcast.lane.b32.xlu0 %v2240, 256
  %v2243 = vpop.permute.xlu0 %2242
  %s2245 = sor.u32 256, 8
  %2246 = vbcast.lane.b32.xlu0 %v2240, %s2245
  %v2247 = vpop.permute.xlu0 %2246
  %v2248 = vlaneseq
  %v2249 = vshrl.u32 %v2248, 7
  %v2250 = vsub.s32 5, %v2249
  %v2251 = vrot.slane %v20, %v2250
  %2253 = vbcast.lane.b32.xlu0 %v2251, 256
  %v2254 = vpop.permute.xlu0 %2253
  %s2256 = sor.u32 256, 8
  %2257 = vbcast.lane.b32.xlu0 %v2251, %s2256
  %v2258 = vpop.permute.xlu0 %2257
  %v2259 = vlaneseq
  %v2260 = vshrl.u32 %v2259, 7
  %v2261 = vsub.s32 6, %v2260
  %v2262 = vrot.slane %v20, %v2261
  %2264 = vbcast.lane.b32.xlu0 %v2262, 256
  %v2265 = vpop.permute.xlu0 %2264
  %s2267 = sor.u32 256, 8
  %2268 = vbcast.lane.b32.xlu0 %v2262, %s2267
  %v2269 = vpop.permute.xlu0 %2268
  %v2270 = vlaneseq
  %v2271 = vshrl.u32 %v2270, 7
  %v2272 = vsub.s32 7, %v2271
  %v2273 = vrot.slane %v20, %v2272
  %2275 = vbcast.lane.b32.xlu0 %v2273, 256
  %v2276 = vpop.permute.xlu0 %2275
  %s2278 = sor.u32 256, 8
  %2279 = vbcast.lane.b32.xlu0 %v2273, %s2278
  %v2280 = vpop.permute.xlu0 %2279
  %v2281 = vlaneseq
  %v2282 = vshrl.u32 %v2281, 7
  %v2283 = vsub.s32 0, %v2282
  %v2284 = vrot.slane %v21, %v2283
  %2286 = vbcast.lane.b32.xlu0 %v2284, 256
  %v2287 = vpop.permute.xlu0 %2286
  %s2289 = sor.u32 256, 8
  %2290 = vbcast.lane.b32.xlu0 %v2284, %s2289
  %v2291 = vpop.permute.xlu0 %2290
  %v2292 = vlaneseq
  %v2293 = vshrl.u32 %v2292, 7
  %v2294 = vsub.s32 1, %v2293
  %v2295 = vrot.slane %v21, %v2294
  %2297 = vbcast.lane.b32.xlu0 %v2295, 256
  %v2298 = vpop.permute.xlu0 %2297
  %s2300 = sor.u32 256, 8
  %2301 = vbcast.lane.b32.xlu0 %v2295, %s2300
  %v2302 = vpop.permute.xlu0 %2301
  %v2303 = vmul.f32 %v2131, %v2199
  %v2304 = vmul.f32 %v2132, %v2203
  %v2305 = vmul.f32 %v2133, %v2210
  %v2306 = vmul.f32 %v2134, %v2214
  %v2307 = vmul.f32 %v2135, %v2221
  %v2308 = vmul.f32 %v2136, %v2225
  %v2309 = vmul.f32 %v2137, %v2232
  %v2310 = vmul.f32 %v2138, %v2236
  %v2311 = vmul.f32 %v2139, %v2243
  %v2312 = vmul.f32 %v2140, %v2247
  %v2313 = vmul.f32 %v2141, %v2254
  %v2314 = vmul.f32 %v2142, %v2258
  %v2315 = vmul.f32 %v2143, %v2265
  %v2316 = vmul.f32 %v2144, %v2269
  %v2317 = vmul.f32 %v2145, %v2276
  %v2318 = vmul.f32 %v2146, %v2280
  %v2319 = vmul.f32 %v2147, %v2287
  %v2320 = vmul.f32 %v2148, %v2291
  %v2321 = vmul.f32 %v2149, %v2298
  %v2322 = vmul.f32 %v2150, %v2302
  %v2323 = vsel %vm35, %v2303, 0.0
  %v2324 = vsel %vm35, %v2305, 0.0
  %v2325 = vadd.f32 %v2323, %v2324
  %v2326 = vsel %vm35, %v2307, 0.0
  %v2327 = vadd.f32 %v2325, %v2326
  %v2328 = vsel %vm35, %v2309, 0.0
  %v2329 = vadd.f32 %v2327, %v2328
  %v2330 = vsel %vm35, %v2311, 0.0
  %v2331 = vadd.f32 %v2329, %v2330
  %v2332 = vsel %vm35, %v2313, 0.0
  %v2333 = vadd.f32 %v2331, %v2332
  %v2334 = vsel %vm35, %v2315, 0.0
  %v2335 = vadd.f32 %v2333, %v2334
  %v2336 = vsel %vm35, %v2317, 0.0
  %v2337 = vadd.f32 %v2335, %v2336
  %v2338 = vsel %vm35, %v2319, 0.0
  %v2339 = vadd.f32 %v2337, %v2338
  %v2340 = vsel %vm35, %v2321, 0.0
  %v2341 = vadd.f32 %v2339, %v2340
  %v2342 = vsel %vm37, %v2304, 0.0
  %v2343 = vsel %vm37, %v2306, 0.0
  %v2344 = vadd.f32 %v2342, %v2343
  %v2345 = vsel %vm37, %v2308, 0.0
  %v2346 = vadd.f32 %v2344, %v2345
  %v2347 = vsel %vm37, %v2310, 0.0
  %v2348 = vadd.f32 %v2346, %v2347
  %v2349 = vsel %vm37, %v2312, 0.0
  %v2350 = vadd.f32 %v2348, %v2349
  %v2351 = vsel %vm37, %v2314, 0.0
  %v2352 = vadd.f32 %v2350, %v2351
  %v2353 = vsel %vm37, %v2316, 0.0
  %v2354 = vadd.f32 %v2352, %v2353
  %v2355 = vsel %vm37, %v2318, 0.0
  %v2356 = vadd.f32 %v2354, %v2355
  %v2357 = vsel %vm37, %v2320, 0.0
  %v2358 = vadd.f32 %v2356, %v2357
  %v2359 = vsel %vm37, %v2322, 0.0
  %v2360 = vadd.f32 %v2358, %v2359
  %v2361 = vmul.f32 %v2190, %v2341
  %v2362 = vmul.f32 %v2192, %v2360
  %v2363 = vsel %vm35, %v2361, 0.0
  %v2364 = vsel %vm37, %v2362, 0.0
  %v2365 = vadd.f32 %v2363, %v2364
  %v2366 = vrot.slane %v2365, 4
  %v2367 = vadd.f32 %v2365, %v2366
  %v2368 = vrot.slane %v2367, 2
  %v2369 = vadd.f32 %v2367, %v2368
  %v2370 = vrot.slane %v2369, 1
  %v2371 = vadd.f32 %v2369, %v2370
  %v2372 = vsel %vm35, %v76, -inf
  %v2373 = vsel %vm37, %v77, -inf
  %v2374 = vmax.f32 %v2372, %v2373
  %v2375 = vrot.slane %v2374, 4
  %v2376 = vmax.f32 %v2374, %v2375
  %v2377 = vrot.slane %v2376, 2
  %v2378 = vmax.f32 %v2376, %v2377
  %v2379 = vrot.slane %v2378, 1
  %v2380 = vmax.f32 %v2378, %v2379
  %v2381 = vsel %vm35, %v101, -inf
  %v2382 = vsel %vm37, %v102, -inf
  %v2383 = vmax.f32 %v2381, %v2382
  %v2384 = vrot.slane %v2383, 4
  %v2385 = vmax.f32 %v2383, %v2384
  %v2386 = vrot.slane %v2385, 2
  %v2387 = vmax.f32 %v2385, %v2386
  %v2388 = vrot.slane %v2387, 1
  %v2389 = vmax.f32 %v2387, %v2388
  %vm2390 = vcmp.eq.f32.partialorder %v76, %v2380
  %vm2391 = vcmp.eq.f32.partialorder %v77, %v2380
  %v2392 = vsel %vm2390, %v79, 10
  %v2393 = vsel %vm2391, %v80, 10
  %v2394 = vsel %vm35, %v2392, 2147483647
  %v2395 = vsel %vm37, %v2393, 2147483647
  %vm2396 = vcmp.lt.s32.totalorder %v2394, %v2395
  %v2397 = vsel %vm2396, %v2394, %v2395
  %v2398 = vrot.slane %v2397, 4
  %vm2399 = vcmp.lt.s32.totalorder %v2397, %v2398
  %v2400 = vsel %vm2399, %v2397, %v2398
  %v2401 = vrot.slane %v2400, 2
  %vm2402 = vcmp.lt.s32.totalorder %v2400, %v2401
  %v2403 = vsel %vm2402, %v2400, %v2401
  %v2404 = vrot.slane %v2403, 1
  %vm2405 = vcmp.lt.s32.totalorder %v2403, %v2404
  %v2406 = vsel %vm2405, %v2403, %v2404
  %vm2407 = vcmp.eq.f32.partialorder %v101, %v2389
  %vm2408 = vcmp.eq.f32.partialorder %v102, %v2389
  %v2409 = vsel %vm2407, %v79, 10
  %v2410 = vsel %vm2408, %v80, 10
  %v2411 = vsel %vm35, %v2409, 2147483647
  %v2412 = vsel %vm37, %v2410, 2147483647
  %vm2413 = vcmp.lt.s32.totalorder %v2411, %v2412
  %v2414 = vsel %vm2413, %v2411, %v2412
  %v2415 = vrot.slane %v2414, 4
  %vm2416 = vcmp.lt.s32.totalorder %v2414, %v2415
  %v2417 = vsel %vm2416, %v2414, %v2415
  %v2418 = vrot.slane %v2417, 2
  %vm2419 = vcmp.lt.s32.totalorder %v2417, %v2418
  %v2420 = vsel %vm2419, %v2417, %v2418
  %v2421 = vrot.slane %v2420, 1
  %vm2422 = vcmp.lt.s32.totalorder %v2420, %v2421
  %v2423 = vsel %vm2422, %v2420, %v2421
  %v2424 = vsub.s32 %v2406, %v2423
  %v2425 = vcvt.s32.f32 %v2424
  %v2426 = vmul.f32 %v2425, %v2425
  %v2427 = vmul.f32 %v2426, 0.012345679
  %vm2428 = vcmp.ne.f32.partialorder %v2371, %v2371
  %vm2429 = vmand %vm2428, %vm34
  %v2430 = vsel %vm2429, 1.0, 0.0
  %v2431 = vsel %vm35, %v2430, -inf
  %2432 = vmax.xlane.f32.xlu0 %v2431
  %v2433 = vpop.xlane.xlu0 %2432
  %s2434 = vtos %v2433
  %p2435 = scmp.gt.f32.partialorder %s2434, 0.0
  %s2436 = scalar_select %p2435, 1, 0
  %v2437 = vstv %s2436
  %vm2438 = vcmp.eq.s32.totalorder %v2437, 1
  %v2439 = vsel %vm2438, %v2427, %v2371
  %vm2440 = vcmask 57344
  %2441 = vst.msk [vmem:[%s5] sm:$0x1] %vm2440, %v2439
  // Predicated region
  $region29: #{sinkhorn_distance.1} parent=0 // pred_check
    _
  $region30: #{sinkhorn_distance.1} parent=0 // pred_check_branch
    %2443 = sbr.rel (0) target = $region32
  $region31: #{sinkhorn_distance.1} parent=0 // pred_region
    _
  $region32: #{sinkhorn_distance.1} parent=0 // pred_fallthru
    _
  // Predicated region
  $region33: #{sinkhorn_distance.1} parent=0 // pred_check
    _
  $region34: #{sinkhorn_distance.1} parent=0 // pred_check_branch
    %2445 = sbr.rel (0) target = $region36
  $region35: #{sinkhorn_distance.1} parent=0 // pred_region
    _
  $region36: #{sinkhorn_distance.1} parent=0 // pred_fallthru
    _

</llo_original>
